<compile_context>
chip_gen: v5e
topology: v5e:2x2
jax: 0.10.0
libtpu: 0.0.40
codegen_flags: <defaults>
</compile_context>

<pallas_src>
import functools

import jax
import jax.numpy as jnp
from jax import lax
from jax.experimental import pallas as pl
from jax.experimental.pallas import tpu as pltpu

F32 = jnp.float32
BF16 = jnp.bfloat16


# ----------------------------- Pallas kernels -----------------------------

def _attn_fuse_kernel(rgb_ref, tsdf_ref, mr_ref, mt_ref, wr_ref, br_ref,
                      wt_ref, bt_ref, *rest, nb, seg, has_extra):
    """channel_attention(rgb)*rgb + channel_attention(tsdf)*tsdf [+ extra].

    Layout: (C, N*S) with the batch*spatial axis lane-dense.  Per-sample
    pooled means (C, N) are precomputed wrapper-side; the 1x1 conv + sigmoid
    + broadcast multiply-add are fused here.
    """
    if has_extra:
        extra_ref, o_ref = rest
    else:
        (o_ref,) = rest
    c = wr_ref.shape[0]
    # attention gains per (channel, sample): sigmoid(W @ mean + b)  (f32 dots)
    ar = jax.nn.sigmoid(jnp.dot(wr_ref[...], mr_ref[...]) + br_ref[...])
    at = jax.nn.sigmoid(jnp.dot(wt_ref[...], mt_ref[...]) + bt_ref[...])
    # broadcast each sample's gain over its lane segment (static N, full-width
    # stores -> no masked writes).
    ar_f = jnp.concatenate(
        [jnp.broadcast_to(ar[:, n:n + 1], (c, seg)) for n in range(nb)], axis=1)
    at_f = jnp.concatenate(
        [jnp.broadcast_to(at[:, n:n + 1], (c, seg)) for n in range(nb)], axis=1)
    out = rgb_ref[...].astype(F32) * ar_f + tsdf_ref[...].astype(F32) * at_f
    if has_extra:
        out = out + extra_ref[...].astype(F32)
    o_ref[...] = out.astype(o_ref.dtype)


def _conv_gemm_kernel(w_ref, x_ref, shift_ref, *rest, relu, has_res, has_proj):
    """y = [relu](W @ x + shift) [+ res]; optionally W2 @ y + b2 (classifier).

    BN scale is pre-folded into W wrapper-side.  x / res are stored bf16 and
    up-cast in VMEM; dots are f32 x f32 (f32 accumulate).
    """
    rest = list(rest)
    res_ref = rest.pop(0) if has_res else None
    w2_ref = b2_ref = None
    if has_proj:
        w2_ref = rest.pop(0)
        b2_ref = rest.pop(0)
    (o_ref,) = rest

    y = jnp.dot(w_ref[...], x_ref[...].astype(F32)) + shift_ref[...]
    if relu:
        y = jnp.maximum(y, 0.0)
    if has_res:
        y = y + res_ref[...].astype(F32)
    if has_proj:
        y = jnp.dot(w2_ref[...], y) + b2_ref[...]
    o_ref[...] = y.astype(o_ref.dtype)


# ----------------------------- kernel wrappers -----------------------------

def _pick_block(s):
    """Largest lane-aligned block that still gives >=2 grid steps (v7x)."""
    assert s % 128 == 0, "flattened spatial axis must be a multiple of 128"
    for b in (2048, 1024, 512, 256, 128):
        if s % b == 0 and s // b >= 2:
            return b
    return s  # s == 128: a single lane-dense block is unavoidable


def conv_gemm(w, xcol, shift, *, relu, residual=None, proj=None, out_dtype=F32):
    """Gridded fused conv-as-GEMM over lane-dense spatial blocks.

    w: (M, K) f32, BN-scale already folded in; xcol: (K, S) (stored bf16);
    shift: (M,) fused BN shift (+ bias fold); residual: optional (M, S) bf16
    added after the activation; proj: optional (W2 (M2, M), b2 (M2,))
    classifier projection (rows padded to a multiple of 8 sublanes).
    """
    M, K = w.shape
    Kx, S = xcol.shape
    assert Kx == K
    blk = _pick_block(S)

    args = [w.astype(F32), xcol.astype(BF16), shift.reshape(M, 1).astype(F32)]
    in_specs = [pl.BlockSpec((M, K), lambda i: (0, 0)),
                pl.BlockSpec((K, blk), lambda i: (0, i)),
                pl.BlockSpec((M, 1), lambda i: (0, 0))]
    vmem = w.size * 4 + 2 * K * blk * 2 + M * 4

    if residual is not None:
        args.append(residual.astype(BF16))
        in_specs.append(pl.BlockSpec((M, blk), lambda i: (0, i)))
        vmem += 2 * M * blk * 2

    Mout = M
    if proj is not None:
        w2, b2 = proj
        Mout = -(-w2.shape[0] // 8) * 8            # pad rows to 8-sublane multiple
        w2 = jnp.pad(w2.astype(F32), ((0, Mout - w2.shape[0]), (0, 0)))
        b2 = jnp.pad(b2.astype(F32), (0, Mout - b2.shape[0])).reshape(Mout, 1)
        args += [w2, b2]
        in_specs += [pl.BlockSpec((Mout, M), lambda i: (0, 0)),
                     pl.BlockSpec((Mout, 1), lambda i: (0, 0))]
        vmem += w2.size * 4 + Mout * 4

    vmem += 2 * Mout * blk * jnp.dtype(out_dtype).itemsize
    vmem_limit = int(min(64 * 2**20, max(32 * 2**20, 2 * vmem)))

    kern = functools.partial(_conv_gemm_kernel, relu=relu,
                             has_res=residual is not None,
                             has_proj=proj is not None)
    return pl.pallas_call(
        kern,
        grid=(S // blk,),
        out_shape=jax.ShapeDtypeStruct((Mout, S), out_dtype),
        in_specs=in_specs,
        out_specs=pl.BlockSpec((Mout, blk), lambda i: (0, i)),
        compiler_params=pltpu.CompilerParams(
            dimension_semantics=("parallel",),
            vmem_limit_bytes=vmem_limit),
    )(*args)


def attn_fuse(rgb, tsdf, m_rgb, m_tsdf, wr, br, wt, bt, extra=None,
              out_dtype=F32):
    """rgb/tsdf[/extra]: (C, N*S) channel-major; m_*: (C, N) pooled means;
    wr/wt: (Cout, Cin); br/bt: (C,).  Returns (C, N*S) in out_dtype."""
    C, NS = rgb.shape
    nb = m_rgb.shape[1]
    assert NS % nb == 0
    seg = NS // nb

    full = pl.BlockSpec((C, NS), lambda i: (0, 0))
    mspec = pl.BlockSpec((C, nb), lambda i: (0, 0))
    wspec = pl.BlockSpec((C, C), lambda i: (0, 0))
    vspec = pl.BlockSpec((C, 1), lambda i: (0, 0))

    args = [rgb, tsdf, m_rgb.astype(F32), m_tsdf.astype(F32),
            wr.astype(F32), br.reshape(C, 1).astype(F32),
            wt.astype(F32), bt.reshape(C, 1).astype(F32)]
    in_specs = [full, full, mspec, mspec, wspec, vspec, wspec, vspec]
    if extra is not None:
        args.append(extra)
        in_specs.append(full)

    kern = functools.partial(_attn_fuse_kernel, nb=nb, seg=seg,
                             has_extra=extra is not None)
    return pl.pallas_call(
        kern,
        grid=(1,),
        out_shape=jax.ShapeDtypeStruct((C, NS), out_dtype),
        in_specs=in_specs,
        out_specs=pl.BlockSpec((C, NS), lambda i: (0, 0)),
        compiler_params=pltpu.CompilerParams(
            dimension_semantics=("arbitrary",)),
    )(*args)


# ----------------------------- glue helpers -----------------------------

def bn_affine(g, b, m, v, eps=1e-5):
    scale = g / jnp.sqrt(v + eps)
    return scale, b - m * scale


def im2col_3x3(x):
    """(C, N, D, H, W) -> (27*C, N*D*H*W); rows tap-major / channel-minor.
    Channel-major layout: pure pad+slice+concat, no transpose pass."""
    C, N, D, H, W = x.shape
    xp = jnp.pad(x, ((0, 0), (0, 0), (1, 1), (1, 1), (1, 1)))
    slabs = [xp[:, :, kd:kd + D, kh:kh + H, kw:kw + W].reshape(C, N * D * H * W)
             for kd in range(3) for kh in range(3) for kw in range(3)]
    return jnp.concatenate(slabs, axis=0)


def im2col_offsets(x):
    """(C, N, D, H, W) -> (8*C, N*D*H*W): 2x2x2 neighbourhood (right pad 1)
    for the sub-pixel deconvolution GEMM."""
    C, N, D, H, W = x.shape
    xp = jnp.pad(x, ((0, 0), (0, 0), (0, 1), (0, 1), (0, 1)))
    slabs = [xp[:, :, od:od + D, oh:oh + H, ow:ow + W].reshape(C, N * D * H * W)
             for od in range(2) for oh in range(2) for ow in range(2)]
    return jnp.concatenate(slabs, axis=0)


def avgpool3_s2(x):
    """AvgPool3d(kernel 3, stride 2, pad 1, count_include_pad=True) on the
    last three axes of a (C, N, D, H, W) array."""
    return lax.reduce_window(
        x, 0.0, lax.add,
        (1, 1, 3, 3, 3), (1, 1, 2, 2, 2),
        ((0, 0), (0, 0), (1, 1), (1, 1), (1, 1))) / 27.0


# (output parity, input offset) -> kernel tap of the equivalent conv;
# parity 0 with offset 1 contributes nothing (zero).
_KMAP = {(0, 0): 1, (1, 0): 0, (1, 1): 2}


def build_subpixel_weight(wc):
    """Equivalent-conv weight (3,3,3,Cin,Cout) -> sub-pixel GEMM weight
    (8*Cout, 8*Cin): rows = (phase, cout), cols = (offset, cin)."""
    Cin, Cout = wc.shape[3], wc.shape[4]
    W = jnp.zeros((8 * Cout, 8 * Cin), F32)
    for pd in range(2):
        for ph in range(2):
            for pw in range(2):
                P = pd * 4 + ph * 2 + pw
                for od in range(2):
                    for oh in range(2):
                        for ow in range(2):
                            kd = _KMAP.get((pd, od))
                            kh = _KMAP.get((ph, oh))
                            kw = _KMAP.get((pw, ow))
                            if kd is None or kh is None or kw is None:
                                continue
                            O = od * 4 + oh * 2 + ow
                            W = W.at[P * Cout:(P + 1) * Cout,
                                     O * Cin:(O + 1) * Cin].set(wc[kd, kh, kw].T)
    return W


def unphase(y, cout, n, d, h, w):
    """(8*Cout, N*d*h*w) phase-major GEMM output -> (Cout, N, 2d, 2h, 2w)."""
    y = y.reshape(2, 2, 2, cout, n, d, h, w)
    y = y.transpose(3, 4, 5, 0, 6, 1, 7, 2)       # (C, N, d, pd, h, ph, w, pw)
    return y.reshape(cout, n, 2 * d, 2 * h, 2 * w)


# ----------------------------- parameters -----------------------------

def init_params(key, feat, class_num):
    C, C2 = feat, 2 * feat
    keys = iter(jax.random.split(key, 64))

    def w(shape, scale=0.1):
        return (scale * jax.random.normal(next(keys), shape)).astype(F32)

    def bn(prefix, c, p):
        p[prefix + '_g'] = (1.0 + 0.1 * jax.random.normal(next(keys), (c,))).astype(F32)
        p[prefix + '_b'] = (0.05 * jax.random.normal(next(keys), (c,))).astype(F32)
        p[prefix + '_m'] = (0.02 * jax.random.normal(next(keys), (c,))).astype(F32)
        p[prefix + '_v'] = (1.0 + 0.1 * jnp.abs(jax.random.normal(next(keys), (c,)))).astype(F32)

    p = {}
    # channel attention 1x1x1 convs (stored as (Cin, Cout))
    p['acm1_rgb_w'], p['acm1_rgb_b'] = w((C, C)), w((C,), 0.05)
    p['acm1_tsdf_w'], p['acm1_tsdf_b'] = w((C, C)), w((C,), 0.05)
    p['acm2_rgb_w'], p['acm2_rgb_b'] = w((C2, C2)), w((C2,), 0.05)
    p['acm2_tsdf_w'], p['acm2_tsdf_b'] = w((C2, C2)), w((C2,), 0.05)
    # pool_middle: Conv3d(C->C2, k1) + AvgPool3d(3,s2,p1) + BN(C2)
    p['pm_w'], p['pm_b'] = w((C, C2)), w((C2,), 0.05)
    bn('pm_bn', C2, p)
    # classify_semantic[0]: ConvTranspose3d(C2->C, k3, s2) + BN(C) + ReLU
    # (weights stored in equivalent-conv layout (3,3,3,Cin,Cout)).
    # TODO(synk): importing real PyTorch ConvTranspose3d weights requires a
    # spatial flip + (Cin,Cout,kD,kH,kW)->(kD,kH,kW,Cin,Cout) transpose.
    p['ct0_w'], p['ct0_b'] = w((3, 3, 3, C2, C)), w((C,), 0.05)
    bn('ct0_bn', C, p)
    # classify_semantic[1]: ConvTranspose3d(C->C, k3, s2) + BN(C) + ReLU
    p['ct1_w'], p['ct1_b'] = w((3, 3, 3, C, C)), w((C,), 0.05)
    bn('ct1_bn', C, p)
    # conv1 / final_conv: Conv3d(C->C, k3, p1, bias=False) + BN(C) + ReLU
    p['conv1_w'] = w((3, 3, 3, C, C))
    bn('conv1_bn', C, p)
    p['final_w'] = w((3, 3, 3, C, C))
    bn('final_bn', C, p)
    # classify_semantic[2]: Dropout3d(0.1) + Conv3d(C->class_num, k1, bias=True)
    p['cls_w'], p['cls_b'] = w((C, class_num)), w((class_num,), 0.05)
    return p


# ----------------------------- forward (batched) -----------------------------

def forward(p, rgb0, tsdf0, rgb1, tsdf1):
    N, C, D, H, W = rgb0.shape
    C2 = 2 * C
    Dh, Hh, Wh = D // 2, H // 2, W // 2
    S0, S1 = D * H * W, Dh * Hh * Wh
    ncls = p['cls_w'].shape[1]

    def cm(x):  # NCDHW -> channel-major (C, N, D, H, W)
        return jnp.transpose(x, (1, 0, 2, 3, 4))

    rgb0c, tsdf0c = cm(rgb0), cm(tsdf0)
    rgb1c, tsdf1c = cm(rgb1), cm(tsdf1)

    # ---- stage-1 channel-attention fuse -> fuse_fea_1 (bf16) ----
    m_r0 = jnp.mean(rgb0c.reshape(C, N, S0), axis=2)
    m_t0 = jnp.mean(tsdf0c.reshape(C, N, S0), axis=2)
    fuse1 = attn_fuse(rgb0c.reshape(C, N * S0), tsdf0c.reshape(C, N * S0),
                      m_r0, m_t0,
                      p['acm1_rgb_w'].T, p['acm1_rgb_b'],
                      p['acm1_tsdf_w'].T, p['acm1_tsdf_b'],
                      out_dtype=BF16)                                  # (C, N*S0)
    fuse1_vol = fuse1.reshape(C, N, D, H, W)

    # ---- pool_middle: AvgPool first (1x1 conv commutes with pooling), then a
    #      single (C2, C+1) GEMM.  Border-correct bias via pooled-ones channel.
    pooled = avgpool3_s2(fuse1_vol.astype(F32)).reshape(C, N * S1)
    frac = avgpool3_s2(jnp.ones((1, 1, D, H, W), F32))                 # valid/27
    frac = jnp.broadcast_to(frac, (1, N, Dh, Hh, Wh)).reshape(1, N * S1)
    s, sh = bn_affine(p['pm_bn_g'], p['pm_bn_b'], p['pm_bn_m'], p['pm_bn_v'])
    w_pm = s[:, None] * jnp.concatenate([p['pm_w'].T, p['pm_b'][:, None]], axis=1)
    middle = conv_gemm(w_pm, jnp.concatenate([pooled, frac], axis=0),
                       sh, relu=False)                                 # (C2, N*S1)

    # ---- stage-2 channel-attention fuse (+ middle_down) -> fuse_fea_2 ----
    m_r1 = jnp.mean(rgb1c.reshape(C2, N, S1), axis=2)
    m_t1 = jnp.mean(tsdf1c.reshape(C2, N, S1), axis=2)
    fuse2 = attn_fuse(rgb1c.reshape(C2, N * S1), tsdf1c.reshape(C2, N * S1),
                      m_r1, m_t1,
                      p['acm2_rgb_w'].T, p['acm2_rgb_b'],
                      p['acm2_tsdf_w'].T, p['acm2_tsdf_b'],
                      extra=middle, out_dtype=BF16)                    # (C2, N*S1)
    fuse2_vol = fuse2.reshape(C2, N, Dh, Hh, Wh)

    # ---- classify_semantic[0]: ConvTranspose3d + BN + ReLU (sub-pixel GEMM) ----
    s, sh = bn_affine(p['ct0_bn_g'], p['ct0_bn_b'], p['ct0_bn_m'], p['ct0_bn_v'])
    w0 = jnp.tile(s, 8)[:, None] * build_subpixel_weight(p['ct0_w'])
    ct0 = conv_gemm(w0, im2col_offsets(fuse2_vol),
                    jnp.tile(sh + s * p['ct0_b'], 8),
                    relu=True, out_dtype=BF16)                         # (8C, N*S1)
    ct0_flat = unphase(ct0, C, N, Dh, Hh, Wh).reshape(C, N * S0)       # bf16

    # ---- conv1(fuse_fea_1) + BN + ReLU with fused residual add of deconv-0 ----
    s, sh = bn_affine(p['conv1_bn_g'], p['conv1_bn_b'],
                      p['conv1_bn_m'], p['conv1_bn_v'])
    w1 = s[:, None] * p['conv1_w'].reshape(27 * C, C).T
    pred = conv_gemm(w1, im2col_3x3(fuse1_vol), sh, relu=True,
                     residual=ct0_flat, out_dtype=BF16)                # (C, N*S0)
    pred_vol = pred.reshape(C, N, D, H, W)

    # ---- classify_semantic[1]: ConvTranspose3d + BN + ReLU ----
    s, sh = bn_affine(p['ct1_bn_g'], p['ct1_bn_b'], p['ct1_bn_m'], p['ct1_bn_v'])
    wd1 = jnp.tile(s, 8)[:, None] * build_subpixel_weight(p['ct1_w'])
    ct1 = conv_gemm(wd1, im2col_offsets(pred_vol),
                    jnp.tile(sh + s * p['ct1_b'], 8),
                    relu=True, out_dtype=BF16)                         # (8C, N*S0)
    ct1_vol = unphase(ct1, C, N, D, H, W)                              # (C,N,2D,2H,2W)

    # ---- final_conv + BN + ReLU fused with classify_semantic[2]
    #      (Dropout3d(0.1) is eval-mode identity). ----
    # TODO(synk): training-mode Dropout3d (channel dropout with RNG) not implemented.
    s, sh = bn_affine(p['final_bn_g'], p['final_bn_b'],
                      p['final_bn_m'], p['final_bn_v'])
    wf = s[:, None] * p['final_w'].reshape(27 * C, C).T
    out = conv_gemm(wf, im2col_3x3(ct1_vol), sh, relu=True,
                    proj=(p['cls_w'].T, p['cls_b']))                   # (16, N*8*S0)
    out = out[:ncls].reshape(ncls, N, 2 * D, 2 * H, 2 * W).transpose(1, 0, 2, 3, 4)
    return out


# ----------------------------- main -----------------------------

if __name__ == "__main__":
    key = jax.random.PRNGKey(0)
    N, feat, class_num = 2, 8, 12
    D = H = W = 8

    kp, kd = jax.random.split(key)
    params = init_params(kp, feat, class_num)

    ks = jax.random.split(kd, 4)
    # PyTorch-style NCDHW inputs: rgbs/tsdfs[0] full-res (feature ch),
    # rgbs/tsdfs[1] half-res (2*feature ch).
    rgb0 = jax.random.normal(ks[0], (N, feat, D, H, W), F32)
    tsdf0 = jax.random.normal(ks[1], (N, feat, D, H, W), F32)
    rgb1 = jax.random.normal(ks[2], (N, 2 * feat, D // 2, H // 2, W // 2), F32)
    tsdf1 = jax.random.normal(ks[3], (N, 2 * feat, D // 2, H // 2, W // 2), F32)

    out = jax.jit(forward)(params, rgb0, tsdf0, rgb1, tsdf1)
    out = jax.block_until_ready(out)

    assert out.shape == (N, class_num, 2 * D, 2 * H, 2 * W), out.shape
    assert bool(jnp.all(jnp.isfinite(out)))
    print("KERNEL_OK")
</pallas_src>

<mosaic_0001>
module attributes {stable_mosaic.version = 11 : i64} {
  func.func @_attn_fuse_kernel(%arg0: i32, %arg1: memref<8x1024xf32, #tpu.memory_space<vmem>>, %arg2: memref<8x1024xf32, #tpu.memory_space<vmem>>, %arg3: memref<8x2xf32, #tpu.memory_space<vmem>>, %arg4: memref<8x2xf32, #tpu.memory_space<vmem>>, %arg5: memref<8x8xf32, #tpu.memory_space<vmem>>, %arg6: memref<8x1xf32, #tpu.memory_space<vmem>>, %arg7: memref<8x8xf32, #tpu.memory_space<vmem>>, %arg8: memref<8x1xf32, #tpu.memory_space<vmem>>, %arg9: memref<8x1024xbf16, #tpu.memory_space<vmem>>) attributes {dimension_semantics = [#tpu.dimension_semantics<arbitrary>], iteration_bounds = array<i64: 1>, scalar_prefetch = 0 : i64, scratch_operands = 0 : i64, tpu.core_type = #tpu.core_type<tc>, window_params = [{pipeline_mode = #tpu.pipeline_mode<synchronous>, transform_indices = @transform_0, window_bounds = array<i64: 8, 1024>}, {pipeline_mode = #tpu.pipeline_mode<synchronous>, transform_indices = @transform_1, window_bounds = array<i64: 8, 1024>}, {pipeline_mode = #tpu.pipeline_mode<synchronous>, transform_indices = @transform_2, window_bounds = array<i64: 8, 2>}, {pipeline_mode = #tpu.pipeline_mode<synchronous>, transform_indices = @transform_3, window_bounds = array<i64: 8, 2>}, {pipeline_mode = #tpu.pipeline_mode<synchronous>, transform_indices = @transform_4, window_bounds = array<i64: 8, 8>}, {pipeline_mode = #tpu.pipeline_mode<synchronous>, transform_indices = @transform_5, window_bounds = array<i64: 8, 1>}, {pipeline_mode = #tpu.pipeline_mode<synchronous>, transform_indices = @transform_6, window_bounds = array<i64: 8, 8>}, {pipeline_mode = #tpu.pipeline_mode<synchronous>, transform_indices = @transform_7, window_bounds = array<i64: 8, 1>}, {pipeline_mode = #tpu.pipeline_mode<synchronous>, transform_indices = @transform_8, window_bounds = array<i64: 8, 1024>}]} {
    %c0 = arith.constant 0 : index
    %c0_0 = arith.constant 0 : index
    %0 = vector.load %arg5[%c0, %c0_0] : memref<8x8xf32, #tpu.memory_space<vmem>>, vector<8x8xf32>
    %c0_1 = arith.constant 0 : index
    %c0_2 = arith.constant 0 : index
    %1 = vector.load %arg3[%c0_1, %c0_2] : memref<8x2xf32, #tpu.memory_space<vmem>>, vector<8x2xf32>
    %cst = arith.constant dense<0.000000e+00> : vector<8x2xf32>
    %2 = tpu.matmul %0, %1, %cst {dimension_numbers = #tpu.dot_dimension_numbers<[1], [0], [0], [1], [0, 0, 1, 1], [], []>} : vector<8x8xf32>, vector<8x2xf32>, vector<8x2xf32> -> vector<8x2xf32>
    %c0_3 = arith.constant 0 : index
    %c0_4 = arith.constant 0 : index
    %3 = vector.load %arg6[%c0_3, %c0_4] : memref<8x1xf32, #tpu.memory_space<vmem>>, vector<8x1xf32>
    %4 = vector.broadcast %3 : vector<8x1xf32> to vector<8x2xf32>
    %5 = arith.addf %2, %4 : vector<8x2xf32>
    %6 = arith.negf %5 : vector<8x2xf32>
    %7 = math.exp %6 : vector<8x2xf32>
    %cst_5 = arith.constant 1.000000e+00 : f32
    %8 = vector.broadcast %cst_5 : f32 to vector<8x2xf32>
    %9 = arith.addf %8, %7 : vector<8x2xf32>
    %10 = arith.divf %8, %9 : vector<8x2xf32>
    %c0_6 = arith.constant 0 : index
    %c0_7 = arith.constant 0 : index
    %11 = vector.load %arg7[%c0_6, %c0_7] : memref<8x8xf32, #tpu.memory_space<vmem>>, vector<8x8xf32>
    %c0_8 = arith.constant 0 : index
    %c0_9 = arith.constant 0 : index
    %12 = vector.load %arg4[%c0_8, %c0_9] : memref<8x2xf32, #tpu.memory_space<vmem>>, vector<8x2xf32>
    %cst_10 = arith.constant dense<0.000000e+00> : vector<8x2xf32>
    %13 = tpu.matmul %11, %12, %cst_10 {dimension_numbers = #tpu.dot_dimension_numbers<[1], [0], [0], [1], [0, 0, 1, 1], [], []>} : vector<8x8xf32>, vector<8x2xf32>, vector<8x2xf32> -> vector<8x2xf32>
    %c0_11 = arith.constant 0 : index
    %c0_12 = arith.constant 0 : index
    %14 = vector.load %arg8[%c0_11, %c0_12] : memref<8x1xf32, #tpu.memory_space<vmem>>, vector<8x1xf32>
    %15 = vector.broadcast %14 : vector<8x1xf32> to vector<8x2xf32>
    %16 = arith.addf %13, %15 : vector<8x2xf32>
    %17 = arith.negf %16 : vector<8x2xf32>
    %18 = math.exp %17 : vector<8x2xf32>
    %cst_13 = arith.constant 1.000000e+00 : f32
    %19 = vector.broadcast %cst_13 : f32 to vector<8x2xf32>
    %20 = arith.addf %19, %18 : vector<8x2xf32>
    %21 = arith.divf %19, %20 : vector<8x2xf32>
    %22 = vector.extract_strided_slice %10 {offsets = [0, 0], sizes = [8, 1], strides = [1, 1]} : vector<8x2xf32> to vector<8x1xf32>
    %23 = vector.shape_cast %22 : vector<8x1xf32> to vector<8x1xf32>
    %24 = vector.broadcast %23 : vector<8x1xf32> to vector<8x512xf32>
    %25 = vector.extract_strided_slice %10 {offsets = [0, 1], sizes = [8, 1], strides = [1, 1]} : vector<8x2xf32> to vector<8x1xf32>
    %26 = vector.shape_cast %25 : vector<8x1xf32> to vector<8x1xf32>
    %27 = vector.broadcast %26 : vector<8x1xf32> to vector<8x512xf32>
    %28 = tpu.concatenate %24, %27 in 1 : vector<8x512xf32>, vector<8x512xf32> -> vector<8x1024xf32>
    %29 = vector.extract_strided_slice %21 {offsets = [0, 0], sizes = [8, 1], strides = [1, 1]} : vector<8x2xf32> to vector<8x1xf32>
    %30 = vector.shape_cast %29 : vector<8x1xf32> to vector<8x1xf32>
    %31 = vector.broadcast %30 : vector<8x1xf32> to vector<8x512xf32>
    %32 = vector.extract_strided_slice %21 {offsets = [0, 1], sizes = [8, 1], strides = [1, 1]} : vector<8x2xf32> to vector<8x1xf32>
    %33 = vector.shape_cast %32 : vector<8x1xf32> to vector<8x1xf32>
    %34 = vector.broadcast %33 : vector<8x1xf32> to vector<8x512xf32>
    %35 = tpu.concatenate %31, %34 in 1 : vector<8x512xf32>, vector<8x512xf32> -> vector<8x1024xf32>
    %c0_14 = arith.constant 0 : index
    %c0_15 = arith.constant 0 : index
    %36 = vector.load %arg1[%c0_14, %c0_15] : memref<8x1024xf32, #tpu.memory_space<vmem>>, vector<8x1024xf32>
    %37 = arith.mulf %36, %28 : vector<8x1024xf32>
    %c0_16 = arith.constant 0 : index
    %c0_17 = arith.constant 0 : index
    %38 = vector.load %arg2[%c0_16, %c0_17] : memref<8x1024xf32, #tpu.memory_space<vmem>>, vector<8x1024xf32>
    %39 = arith.mulf %38, %35 : vector<8x1024xf32>
    %40 = arith.addf %37, %39 : vector<8x1024xf32>
    %41 = arith.truncf %40 : vector<8x1024xf32> to vector<8x1024xbf16>
    %c0_18 = arith.constant 0 : index
    %c0_19 = arith.constant 0 : index
    %42 = vector.load %arg9[%c0_18, %c0_19] : memref<8x1024xbf16, #tpu.memory_space<vmem>>, vector<8x1024xbf16>
    tpu.vector_store %arg9[%c0_18, %c0_19], %41 {strides = array<i32>} : memref<8x1024xbf16, #tpu.memory_space<vmem>>, vector<8x1024xbf16>,
    return
  }
  func.func @transform_0(%arg0: i32) -> (i32, i32) {
    %c0_i32 = arith.constant 0 : i32
    %c0_i32_0 = arith.constant 0 : i32
    %c0_i32_1 = arith.constant 0 : i32
    return %c0_i32, %c0_i32_0 : i32, i32
  }
  func.func @transform_1(%arg0: i32) -> (i32, i32) {
    %c0_i32 = arith.constant 0 : i32
    %c0_i32_0 = arith.constant 0 : i32
    %c0_i32_1 = arith.constant 0 : i32
    return %c0_i32, %c0_i32_0 : i32, i32
  }
  func.func @transform_2(%arg0: i32) -> (i32, i32) {
    %c0_i32 = arith.constant 0 : i32
    %c0_i32_0 = arith.constant 0 : i32
    %c0_i32_1 = arith.constant 0 : i32
    return %c0_i32, %c0_i32_0 : i32, i32
  }
  func.func @transform_3(%arg0: i32) -> (i32, i32) {
    %c0_i32 = arith.constant 0 : i32
    %c0_i32_0 = arith.constant 0 : i32
    %c0_i32_1 = arith.constant 0 : i32
    return %c0_i32, %c0_i32_0 : i32, i32
  }
  func.func @transform_4(%arg0: i32) -> (i32, i32) {
    %c0_i32 = arith.constant 0 : i32
    %c0_i32_0 = arith.constant 0 : i32
    %c0_i32_1 = arith.constant 0 : i32
    return %c0_i32, %c0_i32_0 : i32, i32
  }
  func.func @transform_5(%arg0: i32) -> (i32, i32) {
    %c0_i32 = arith.constant 0 : i32
    %c0_i32_0 = arith.constant 0 : i32
    %c0_i32_1 = arith.constant 0 : i32
    return %c0_i32, %c0_i32_0 : i32, i32
  }
  func.func @transform_6(%arg0: i32) -> (i32, i32) {
    %c0_i32 = arith.constant 0 : i32
    %c0_i32_0 = arith.constant 0 : i32
    %c0_i32_1 = arith.constant 0 : i32
    return %c0_i32, %c0_i32_0 : i32, i32
  }
  func.func @transform_7(%arg0: i32) -> (i32, i32) {
    %c0_i32 = arith.constant 0 : i32
    %c0_i32_0 = arith.constant 0 : i32
    %c0_i32_1 = arith.constant 0 : i32
    return %c0_i32, %c0_i32_0 : i32, i32
  }
  func.func @transform_8(%arg0: i32) -> (i32, i32) {
    %c0_i32 = arith.constant 0 : i32
    %c0_i32_0 = arith.constant 0 : i32
    %c0_i32_1 = arith.constant 0 : i32
    return %c0_i32, %c0_i32_0 : i32, i32
  }
}

module attributes {stable_mosaic.version = 11 : i64} {
  func.func @_attn_fuse_kernel(%arg0: i32, %arg1: memref<16x128xf32, #tpu.memory_space<vmem>>, %arg2: memref<16x128xf32, #tpu.memory_space<vmem>>, %arg3: memref<16x2xf32, #tpu.memory_space<vmem>>, %arg4: memref<16x2xf32, #tpu.memory_space<vmem>>, %arg5: memref<16x16xf32, #tpu.memory_space<vmem>>, %arg6: memref<16x1xf32, #tpu.memory_space<vmem>>, %arg7: memref<16x16xf32, #tpu.memory_space<vmem>>, %arg8: memref<16x1xf32, #tpu.memory_space<vmem>>, %arg9: memref<16x128xf32, #tpu.memory_space<vmem>>, %arg10: memref<16x128xbf16, #tpu.memory_space<vmem>>) attributes {dimension_semantics = [#tpu.dimension_semantics<arbitrary>], iteration_bounds = array<i64: 1>, scalar_prefetch = 0 : i64, scratch_operands = 0 : i64, tpu.core_type = #tpu.core_type<tc>, window_params = [{pipeline_mode = #tpu.pipeline_mode<synchronous>, transform_indices = @transform_0, window_bounds = array<i64: 16, 128>}, {pipeline_mode = #tpu.pipeline_mode<synchronous>, transform_indices = @transform_1, window_bounds = array<i64: 16, 128>}, {pipeline_mode = #tpu.pipeline_mode<synchronous>, transform_indices = @transform_2, window_bounds = array<i64: 16, 2>}, {pipeline_mode = #tpu.pipeline_mode<synchronous>, transform_indices = @transform_3, window_bounds = array<i64: 16, 2>}, {pipeline_mode = #tpu.pipeline_mode<synchronous>, transform_indices = @transform_4, window_bounds = array<i64: 16, 16>}, {pipeline_mode = #tpu.pipeline_mode<synchronous>, transform_indices = @transform_5, window_bounds = array<i64: 16, 1>}, {pipeline_mode = #tpu.pipeline_mode<synchronous>, transform_indices = @transform_6, window_bounds = array<i64: 16, 16>}, {pipeline_mode = #tpu.pipeline_mode<synchronous>, transform_indices = @transform_7, window_bounds = array<i64: 16, 1>}, {pipeline_mode = #tpu.pipeline_mode<synchronous>, transform_indices = @transform_8, window_bounds = array<i64: 16, 128>}, {pipeline_mode = #tpu.pipeline_mode<synchronous>, transform_indices = @transform_9, window_bounds = array<i64: 16, 128>}]} {
    %c0 = arith.constant 0 : index
    %c0_0 = arith.constant 0 : index
    %0 = vector.load %arg5[%c0, %c0_0] : memref<16x16xf32, #tpu.memory_space<vmem>>, vector<16x16xf32>
    %c0_1 = arith.constant 0 : index
    %c0_2 = arith.constant 0 : index
    %1 = vector.load %arg3[%c0_1, %c0_2] : memref<16x2xf32, #tpu.memory_space<vmem>>, vector<16x2xf32>
    %cst = arith.constant dense<0.000000e+00> : vector<16x2xf32>
    %2 = tpu.matmul %0, %1, %cst {dimension_numbers = #tpu.dot_dimension_numbers<[1], [0], [0], [1], [0, 0, 1, 1], [], []>} : vector<16x16xf32>, vector<16x2xf32>, vector<16x2xf32> -> vector<16x2xf32>
    %c0_3 = arith.constant 0 : index
    %c0_4 = arith.constant 0 : index
    %3 = vector.load %arg6[%c0_3, %c0_4] : memref<16x1xf32, #tpu.memory_space<vmem>>, vector<16x1xf32>
    %4 = vector.broadcast %3 : vector<16x1xf32> to vector<16x2xf32>
    %5 = arith.addf %2, %4 : vector<16x2xf32>
    %6 = arith.negf %5 : vector<16x2xf32>
    %7 = math.exp %6 : vector<16x2xf32>
    %cst_5 = arith.constant 1.000000e+00 : f32
    %8 = vector.broadcast %cst_5 : f32 to vector<16x2xf32>
    %9 = arith.addf %8, %7 : vector<16x2xf32>
    %10 = arith.divf %8, %9 : vector<16x2xf32>
    %c0_6 = arith.constant 0 : index
    %c0_7 = arith.constant 0 : index
    %11 = vector.load %arg7[%c0_6, %c0_7] : memref<16x16xf32, #tpu.memory_space<vmem>>, vector<16x16xf32>
    %c0_8 = arith.constant 0 : index
    %c0_9 = arith.constant 0 : index
    %12 = vector.load %arg4[%c0_8, %c0_9] : memref<16x2xf32, #tpu.memory_space<vmem>>, vector<16x2xf32>
    %cst_10 = arith.constant dense<0.000000e+00> : vector<16x2xf32>
    %13 = tpu.matmul %11, %12, %cst_10 {dimension_numbers = #tpu.dot_dimension_numbers<[1], [0], [0], [1], [0, 0, 1, 1], [], []>} : vector<16x16xf32>, vector<16x2xf32>, vector<16x2xf32> -> vector<16x2xf32>
    %c0_11 = arith.constant 0 : index
    %c0_12 = arith.constant 0 : index
    %14 = vector.load %arg8[%c0_11, %c0_12] : memref<16x1xf32, #tpu.memory_space<vmem>>, vector<16x1xf32>
    %15 = vector.broadcast %14 : vector<16x1xf32> to vector<16x2xf32>
    %16 = arith.addf %13, %15 : vector<16x2xf32>
    %17 = arith.negf %16 : vector<16x2xf32>
    %18 = math.exp %17 : vector<16x2xf32>
    %cst_13 = arith.constant 1.000000e+00 : f32
    %19 = vector.broadcast %cst_13 : f32 to vector<16x2xf32>
    %20 = arith.addf %19, %18 : vector<16x2xf32>
    %21 = arith.divf %19, %20 : vector<16x2xf32>
    %22 = vector.extract_strided_slice %10 {offsets = [0, 0], sizes = [16, 1], strides = [1, 1]} : vector<16x2xf32> to vector<16x1xf32>
    %23 = vector.shape_cast %22 : vector<16x1xf32> to vector<16x1xf32>
    %24 = vector.broadcast %23 : vector<16x1xf32> to vector<16x64xf32>
    %25 = vector.extract_strided_slice %10 {offsets = [0, 1], sizes = [16, 1], strides = [1, 1]} : vector<16x2xf32> to vector<16x1xf32>
    %26 = vector.shape_cast %25 : vector<16x1xf32> to vector<16x1xf32>
    %27 = vector.broadcast %26 : vector<16x1xf32> to vector<16x64xf32>
    %28 = tpu.concatenate %24, %27 in 1 : vector<16x64xf32>, vector<16x64xf32> -> vector<16x128xf32>
    %29 = vector.extract_strided_slice %21 {offsets = [0, 0], sizes = [16, 1], strides = [1, 1]} : vector<16x2xf32> to vector<16x1xf32>
    %30 = vector.shape_cast %29 : vector<16x1xf32> to vector<16x1xf32>
    %31 = vector.broadcast %30 : vector<16x1xf32> to vector<16x64xf32>
    %32 = vector.extract_strided_slice %21 {offsets = [0, 1], sizes = [16, 1], strides = [1, 1]} : vector<16x2xf32> to vector<16x1xf32>
    %33 = vector.shape_cast %32 : vector<16x1xf32> to vector<16x1xf32>
    %34 = vector.broadcast %33 : vector<16x1xf32> to vector<16x64xf32>
    %35 = tpu.concatenate %31, %34 in 1 : vector<16x64xf32>, vector<16x64xf32> -> vector<16x128xf32>
    %c0_14 = arith.constant 0 : index
    %c0_15 = arith.constant 0 : index
    %36 = vector.load %arg1[%c0_14, %c0_15] : memref<16x128xf32, #tpu.memory_space<vmem>>, vector<16x128xf32>
    %37 = arith.mulf %36, %28 : vector<16x128xf32>
    %c0_16 = arith.constant 0 : index
    %c0_17 = arith.constant 0 : index
    %38 = vector.load %arg2[%c0_16, %c0_17] : memref<16x128xf32, #tpu.memory_space<vmem>>, vector<16x128xf32>
    %39 = arith.mulf %38, %35 : vector<16x128xf32>
    %40 = arith.addf %37, %39 : vector<16x128xf32>
    %c0_18 = arith.constant 0 : index
    %c0_19 = arith.constant 0 : index
    %41 = vector.load %arg9[%c0_18, %c0_19] : memref<16x128xf32, #tpu.memory_space<vmem>>, vector<16x128xf32>
    %42 = arith.addf %40, %41 : vector<16x128xf32>
    %43 = arith.truncf %42 : vector<16x128xf32> to vector<16x128xbf16>
    %c0_20 = arith.constant 0 : index
    %c0_21 = arith.constant 0 : index
    %44 = vector.load %arg10[%c0_20, %c0_21] : memref<16x128xbf16, #tpu.memory_space<vmem>>, vector<16x128xbf16>
    tpu.vector_store %arg10[%c0_20, %c0_21], %43 {strides = array<i32>} : memref<16x128xbf16, #tpu.memory_space<vmem>>, vector<16x128xbf16>,
    return
  }
  func.func @transform_0(%arg0: i32) -> (i32, i32) {
    %c0_i32 = arith.constant 0 : i32
    %c0_i32_0 = arith.constant 0 : i32
    %c0_i32_1 = arith.constant 0 : i32
    return %c0_i32, %c0_i32_0 : i32, i32
  }
  func.func @transform_1(%arg0: i32) -> (i32, i32) {
    %c0_i32 = arith.constant 0 : i32
    %c0_i32_0 = arith.constant 0 : i32
    %c0_i32_1 = arith.constant 0 : i32
    return %c0_i32, %c0_i32_0 : i32, i32
  }
  func.func @transform_2(%arg0: i32) -> (i32, i32) {
    %c0_i32 = arith.constant 0 : i32
    %c0_i32_0 = arith.constant 0 : i32
    %c0_i32_1 = arith.constant 0 : i32
    return %c0_i32, %c0_i32_0 : i32, i32
  }
  func.func @transform_3(%arg0: i32) -> (i32, i32) {
    %c0_i32 = arith.constant 0 : i32
    %c0_i32_0 = arith.constant 0 : i32
    %c0_i32_1 = arith.constant 0 : i32
    return %c0_i32, %c0_i32_0 : i32, i32
  }
  func.func @transform_4(%arg0: i32) -> (i32, i32) {
    %c0_i32 = arith.constant 0 : i32
    %c0_i32_0 = arith.constant 0 : i32
    %c0_i32_1 = arith.constant 0 : i32
    return %c0_i32, %c0_i32_0 : i32, i32
  }
  func.func @transform_5(%arg0: i32) -> (i32, i32) {
    %c0_i32 = arith.constant 0 : i32
    %c0_i32_0 = arith.constant 0 : i32
    %c0_i32_1 = arith.constant 0 : i32
    return %c0_i32, %c0_i32_0 : i32, i32
  }
  func.func @transform_6(%arg0: i32) -> (i32, i32) {
    %c0_i32 = arith.constant 0 : i32
    %c0_i32_0 = arith.constant 0 : i32
    %c0_i32_1 = arith.constant 0 : i32
    return %c0_i32, %c0_i32_0 : i32, i32
  }
  func.func @transform_7(%arg0: i32) -> (i32, i32) {
    %c0_i32 = arith.constant 0 : i32
    %c0_i32_0 = arith.constant 0 : i32
    %c0_i32_1 = arith.constant 0 : i32
    return %c0_i32, %c0_i32_0 : i32, i32
  }
  func.func @transform_8(%arg0: i32) -> (i32, i32) {
    %c0_i32 = arith.constant 0 : i32
    %c0_i32_0 = arith.constant 0 : i32
    %c0_i32_1 = arith.constant 0 : i32
    return %c0_i32, %c0_i32_0 : i32, i32
  }
  func.func @transform_9(%arg0: i32) -> (i32, i32) {
    %c0_i32 = arith.constant 0 : i32
    %c0_i32_0 = arith.constant 0 : i32
    %c0_i32_1 = arith.constant 0 : i32
    return %c0_i32, %c0_i32_0 : i32, i32
  }
}

module attributes {stable_mosaic.version = 11 : i64} {
  func.func @_conv_gemm_kernel(%arg0: i32, %arg1: memref<16x9xf32, #tpu.memory_space<vmem>>, %arg2: memref<9x128xbf16, #tpu.memory_space<vmem>>, %arg3: memref<16x1xf32, #tpu.memory_space<vmem>>, %arg4: memref<16x128xf32, #tpu.memory_space<vmem>>) attributes {dimension_semantics = [#tpu.dimension_semantics<parallel>], iteration_bounds = array<i64: 1>, scalar_prefetch = 0 : i64, scratch_operands = 0 : i64, tpu.core_type = #tpu.core_type<tc>, window_params = [{pipeline_mode = #tpu.pipeline_mode<synchronous>, transform_indices = @transform_0, window_bounds = array<i64: 16, 9>}, {transform_indices = @transform_1, window_bounds = array<i64: 9, 128>}, {pipeline_mode = #tpu.pipeline_mode<synchronous>, transform_indices = @transform_2, window_bounds = array<i64: 16, 1>}, {transform_indices = @transform_3, window_bounds = array<i64: 16, 128>}]} {
    %c0 = arith.constant 0 : index
    %c0_0 = arith.constant 0 : index
    %0 = vector.load %arg1[%c0, %c0_0] : memref<16x9xf32, #tpu.memory_space<vmem>>, vector<16x9xf32>
    %c0_1 = arith.constant 0 : index
    %c0_2 = arith.constant 0 : index
    %1 = vector.load %arg2[%c0_1, %c0_2] : memref<9x128xbf16, #tpu.memory_space<vmem>>, vector<9x128xbf16>
    %2 = arith.extf %1 : vector<9x128xbf16> to vector<9x128xf32>
    %cst = arith.constant dense<0.000000e+00> : vector<16x128xf32>
    %3 = tpu.matmul %0, %2, %cst {dimension_numbers = #tpu.dot_dimension_numbers<[1], [0], [0], [1], [0, 0, 1, 1], [], []>} : vector<16x9xf32>, vector<9x128xf32>, vector<16x128xf32> -> vector<16x128xf32>
    %c0_3 = arith.constant 0 : index
    %c0_4 = arith.constant 0 : index
    %4 = vector.load %arg3[%c0_3, %c0_4] : memref<16x1xf32, #tpu.memory_space<vmem>>, vector<16x1xf32>
    %5 = vector.broadcast %4 : vector<16x1xf32> to vector<16x128xf32>
    %6 = arith.addf %3, %5 : vector<16x128xf32>
    %c0_5 = arith.constant 0 : index
    %c0_6 = arith.constant 0 : index
    %7 = vector.load %arg4[%c0_5, %c0_6] : memref<16x128xf32, #tpu.memory_space<vmem>>, vector<16x128xf32>
    tpu.vector_store %arg4[%c0_5, %c0_6], %6 {strides = array<i32>} : memref<16x128xf32, #tpu.memory_space<vmem>>, vector<16x128xf32>,
    return
  }
  func.func @transform_0(%arg0: i32) -> (i32, i32) {
    %c0_i32 = arith.constant 0 : i32
    %c0_i32_0 = arith.constant 0 : i32
    %c0_i32_1 = arith.constant 0 : i32
    return %c0_i32, %c0_i32_0 : i32, i32
  }
  func.func @transform_1(%arg0: i32) -> (i32, i32) {
    %c0_i32 = arith.constant 0 : i32
    %c0_i32_0 = arith.constant 0 : i32
    return %c0_i32, %arg0 : i32, i32
  }
  func.func @transform_2(%arg0: i32) -> (i32, i32) {
    %c0_i32 = arith.constant 0 : i32
    %c0_i32_0 = arith.constant 0 : i32
    %c0_i32_1 = arith.constant 0 : i32
    return %c0_i32, %c0_i32_0 : i32, i32
  }
  func.func @transform_3(%arg0: i32) -> (i32, i32) {
    %c0_i32 = arith.constant 0 : i32
    %c0_i32_0 = arith.constant 0 : i32
    return %c0_i32, %arg0 : i32, i32
  }
}

module attributes {stable_mosaic.version = 11 : i64} {
  func.func @_conv_gemm_kernel(%arg0: i32, %arg1: memref<64x128xf32, #tpu.memory_space<vmem>>, %arg2: memref<128x128xbf16, #tpu.memory_space<vmem>>, %arg3: memref<64x1xf32, #tpu.memory_space<vmem>>, %arg4: memref<64x128xbf16, #tpu.memory_space<vmem>>) attributes {dimension_semantics = [#tpu.dimension_semantics<parallel>], iteration_bounds = array<i64: 1>, scalar_prefetch = 0 : i64, scratch_operands = 0 : i64, tpu.core_type = #tpu.core_type<tc>, window_params = [{pipeline_mode = #tpu.pipeline_mode<synchronous>, transform_indices = @transform_0, window_bounds = array<i64: 64, 128>}, {transform_indices = @transform_1, window_bounds = array<i64: 128, 128>}, {pipeline_mode = #tpu.pipeline_mode<synchronous>, transform_indices = @transform_2, window_bounds = array<i64: 64, 1>}, {transform_indices = @transform_3, window_bounds = array<i64: 64, 128>}]} {
    %c0 = arith.constant 0 : index
    %c0_0 = arith.constant 0 : index
    %0 = vector.load %arg1[%c0, %c0_0] : memref<64x128xf32, #tpu.memory_space<vmem>>, vector<64x128xf32>
    %c0_1 = arith.constant 0 : index
    %c0_2 = arith.constant 0 : index
    %1 = vector.load %arg2[%c0_1, %c0_2] : memref<128x128xbf16, #tpu.memory_space<vmem>>, vector<128x128xbf16>
    %2 = arith.extf %1 : vector<128x128xbf16> to vector<128x128xf32>
    %cst = arith.constant dense<0.000000e+00> : vector<64x128xf32>
    %3 = tpu.matmul %0, %2, %cst {dimension_numbers = #tpu.dot_dimension_numbers<[1], [0], [0], [1], [0, 0, 1, 1], [], []>} : vector<64x128xf32>, vector<128x128xf32>, vector<64x128xf32> -> vector<64x128xf32>
    %c0_3 = arith.constant 0 : index
    %c0_4 = arith.constant 0 : index
    %4 = vector.load %arg3[%c0_3, %c0_4] : memref<64x1xf32, #tpu.memory_space<vmem>>, vector<64x1xf32>
    %5 = vector.broadcast %4 : vector<64x1xf32> to vector<64x128xf32>
    %6 = arith.addf %3, %5 : vector<64x128xf32>
    %cst_5 = arith.constant 0.000000e+00 : f32
    %7 = vector.broadcast %cst_5 : f32 to vector<64x128xf32>
    %8 = arith.maximumf %6, %7 : vector<64x128xf32>
    %9 = arith.truncf %8 : vector<64x128xf32> to vector<64x128xbf16>
    %c0_6 = arith.constant 0 : index
    %c0_7 = arith.constant 0 : index
    %10 = vector.load %arg4[%c0_6, %c0_7] : memref<64x128xbf16, #tpu.memory_space<vmem>>, vector<64x128xbf16>
    tpu.vector_store %arg4[%c0_6, %c0_7], %9 {strides = array<i32>} : memref<64x128xbf16, #tpu.memory_space<vmem>>, vector<64x128xbf16>,
    return
  }
  func.func @transform_0(%arg0: i32) -> (i32, i32) {
    %c0_i32 = arith.constant 0 : i32
    %c0_i32_0 = arith.constant 0 : i32
    %c0_i32_1 = arith.constant 0 : i32
    return %c0_i32, %c0_i32_0 : i32, i32
  }
  func.func @transform_1(%arg0: i32) -> (i32, i32) {
    %c0_i32 = arith.constant 0 : i32
    %c0_i32_0 = arith.constant 0 : i32
    return %c0_i32, %arg0 : i32, i32
  }
  func.func @transform_2(%arg0: i32) -> (i32, i32) {
    %c0_i32 = arith.constant 0 : i32
    %c0_i32_0 = arith.constant 0 : i32
    %c0_i32_1 = arith.constant 0 : i32
    return %c0_i32, %c0_i32_0 : i32, i32
  }
  func.func @transform_3(%arg0: i32) -> (i32, i32) {
    %c0_i32 = arith.constant 0 : i32
    %c0_i32_0 = arith.constant 0 : i32
    return %c0_i32, %arg0 : i32, i32
  }
}

module attributes {stable_mosaic.version = 11 : i64} {
  func.func @_conv_gemm_kernel(%arg0: i32, %arg1: memref<8x216xf32, #tpu.memory_space<vmem>>, %arg2: memref<216x512xbf16, #tpu.memory_space<vmem>>, %arg3: memref<8x1xf32, #tpu.memory_space<vmem>>, %arg4: memref<8x512xbf16, #tpu.memory_space<vmem>>, %arg5: memref<8x512xbf16, #tpu.memory_space<vmem>>) attributes {dimension_semantics = [#tpu.dimension_semantics<parallel>], iteration_bounds = array<i64: 2>, scalar_prefetch = 0 : i64, scratch_operands = 0 : i64, tpu.core_type = #tpu.core_type<tc>, window_params = [{pipeline_mode = #tpu.pipeline_mode<synchronous>, transform_indices = @transform_0, window_bounds = array<i64: 8, 216>}, {transform_indices = @transform_1, window_bounds = array<i64: 216, 512>}, {pipeline_mode = #tpu.pipeline_mode<synchronous>, transform_indices = @transform_2, window_bounds = array<i64: 8, 1>}, {transform_indices = @transform_3, window_bounds = array<i64: 8, 512>}, {transform_indices = @transform_4, window_bounds = array<i64: 8, 512>}]} {
    %c0 = arith.constant 0 : index
    %c0_0 = arith.constant 0 : index
    %0 = vector.load %arg1[%c0, %c0_0] : memref<8x216xf32, #tpu.memory_space<vmem>>, vector<8x216xf32>
    %c0_1 = arith.constant 0 : index
    %c0_2 = arith.constant 0 : index
    %1 = vector.load %arg2[%c0_1, %c0_2] : memref<216x512xbf16, #tpu.memory_space<vmem>>, vector<216x512xbf16>
    %2 = arith.extf %1 : vector<216x512xbf16> to vector<216x512xf32>
    %cst = arith.constant dense<0.000000e+00> : vector<8x512xf32>
    %3 = tpu.matmul %0, %2, %cst {dimension_numbers = #tpu.dot_dimension_numbers<[1], [0], [0], [1], [0, 0, 1, 1], [], []>} : vector<8x216xf32>, vector<216x512xf32>, vector<8x512xf32> -> vector<8x512xf32>
    %c0_3 = arith.constant 0 : index
    %c0_4 = arith.constant 0 : index
    %4 = vector.load %arg3[%c0_3, %c0_4] : memref<8x1xf32, #tpu.memory_space<vmem>>, vector<8x1xf32>
    %5 = vector.broadcast %4 : vector<8x1xf32> to vector<8x512xf32>
    %6 = arith.addf %3, %5 : vector<8x512xf32>
    %cst_5 = arith.constant 0.000000e+00 : f32
    %7 = vector.broadcast %cst_5 : f32 to vector<8x512xf32>
    %8 = arith.maximumf %6, %7 : vector<8x512xf32>
    %c0_6 = arith.constant 0 : index
    %c0_7 = arith.constant 0 : index
    %9 = vector.load %arg4[%c0_6, %c0_7] : memref<8x512xbf16, #tpu.memory_space<vmem>>, vector<8x512xbf16>
    %10 = arith.extf %9 : vector<8x512xbf16> to vector<8x512xf32>
    %11 = arith.addf %8, %10 : vector<8x512xf32>
    %12 = arith.truncf %11 : vector<8x512xf32> to vector<8x512xbf16>
    %c0_8 = arith.constant 0 : index
    %c0_9 = arith.constant 0 : index
    %13 = vector.load %arg5[%c0_8, %c0_9] : memref<8x512xbf16, #tpu.memory_space<vmem>>, vector<8x512xbf16>
    tpu.vector_store %arg5[%c0_8, %c0_9], %12 {strides = array<i32>} : memref<8x512xbf16, #tpu.memory_space<vmem>>, vector<8x512xbf16>,
    return
  }
  func.func @transform_0(%arg0: i32) -> (i32, i32) {
    %c0_i32 = arith.constant 0 : i32
    %c0_i32_0 = arith.constant 0 : i32
    %c0_i32_1 = arith.constant 0 : i32
    return %c0_i32, %c0_i32_0 : i32, i32
  }
  func.func @transform_1(%arg0: i32) -> (i32, i32) {
    %c0_i32 = arith.constant 0 : i32
    %c0_i32_0 = arith.constant 0 : i32
    return %c0_i32, %arg0 : i32, i32
  }
  func.func @transform_2(%arg0: i32) -> (i32, i32) {
    %c0_i32 = arith.constant 0 : i32
    %c0_i32_0 = arith.constant 0 : i32
    %c0_i32_1 = arith.constant 0 : i32
    return %c0_i32, %c0_i32_0 : i32, i32
  }
  func.func @transform_3(%arg0: i32) -> (i32, i32) {
    %c0_i32 = arith.constant 0 : i32
    %c0_i32_0 = arith.constant 0 : i32
    return %c0_i32, %arg0 : i32, i32
  }
  func.func @transform_4(%arg0: i32) -> (i32, i32) {
    %c0_i32 = arith.constant 0 : i32
    %c0_i32_0 = arith.constant 0 : i32
    return %c0_i32, %arg0 : i32, i32
  }
}

module attributes {stable_mosaic.version = 11 : i64} {
  func.func @_conv_gemm_kernel(%arg0: i32, %arg1: memref<64x64xf32, #tpu.memory_space<vmem>>, %arg2: memref<64x512xbf16, #tpu.memory_space<vmem>>, %arg3: memref<64x1xf32, #tpu.memory_space<vmem>>, %arg4: memref<64x512xbf16, #tpu.memory_space<vmem>>) attributes {dimension_semantics = [#tpu.dimension_semantics<parallel>], iteration_bounds = array<i64: 2>, scalar_prefetch = 0 : i64, scratch_operands = 0 : i64, tpu.core_type = #tpu.core_type<tc>, window_params = [{pipeline_mode = #tpu.pipeline_mode<synchronous>, transform_indices = @transform_0, window_bounds = array<i64: 64, 64>}, {transform_indices = @transform_1, window_bounds = array<i64: 64, 512>}, {pipeline_mode = #tpu.pipeline_mode<synchronous>, transform_indices = @transform_2, window_bounds = array<i64: 64, 1>}, {transform_indices = @transform_3, window_bounds = array<i64: 64, 512>}]} {
    %c0 = arith.constant 0 : index
    %c0_0 = arith.constant 0 : index
    %0 = vector.load %arg1[%c0, %c0_0] : memref<64x64xf32, #tpu.memory_space<vmem>>, vector<64x64xf32>
    %c0_1 = arith.constant 0 : index
    %c0_2 = arith.constant 0 : index
    %1 = vector.load %arg2[%c0_1, %c0_2] : memref<64x512xbf16, #tpu.memory_space<vmem>>, vector<64x512xbf16>
    %2 = arith.extf %1 : vector<64x512xbf16> to vector<64x512xf32>
    %cst = arith.constant dense<0.000000e+00> : vector<64x512xf32>
    %3 = tpu.matmul %0, %2, %cst {dimension_numbers = #tpu.dot_dimension_numbers<[1], [0], [0], [1], [0, 0, 1, 1], [], []>} : vector<64x64xf32>, vector<64x512xf32>, vector<64x512xf32> -> vector<64x512xf32>
    %c0_3 = arith.constant 0 : index
    %c0_4 = arith.constant 0 : index
    %4 = vector.load %arg3[%c0_3, %c0_4] : memref<64x1xf32, #tpu.memory_space<vmem>>, vector<64x1xf32>
    %5 = vector.broadcast %4 : vector<64x1xf32> to vector<64x512xf32>
    %6 = arith.addf %3, %5 : vector<64x512xf32>
    %cst_5 = arith.constant 0.000000e+00 : f32
    %7 = vector.broadcast %cst_5 : f32 to vector<64x512xf32>
    %8 = arith.maximumf %6, %7 : vector<64x512xf32>
    %9 = arith.truncf %8 : vector<64x512xf32> to vector<64x512xbf16>
    %c0_6 = arith.constant 0 : index
    %c0_7 = arith.constant 0 : index
    %10 = vector.load %arg4[%c0_6, %c0_7] : memref<64x512xbf16, #tpu.memory_space<vmem>>, vector<64x512xbf16>
    tpu.vector_store %arg4[%c0_6, %c0_7], %9 {strides = array<i32>} : memref<64x512xbf16, #tpu.memory_space<vmem>>, vector<64x512xbf16>,
    return
  }
  func.func @transform_0(%arg0: i32) -> (i32, i32) {
    %c0_i32 = arith.constant 0 : i32
    %c0_i32_0 = arith.constant 0 : i32
    %c0_i32_1 = arith.constant 0 : i32
    return %c0_i32, %c0_i32_0 : i32, i32
  }
  func.func @transform_1(%arg0: i32) -> (i32, i32) {
    %c0_i32 = arith.constant 0 : i32
    %c0_i32_0 = arith.constant 0 : i32
    return %c0_i32, %arg0 : i32, i32
  }
  func.func @transform_2(%arg0: i32) -> (i32, i32) {
    %c0_i32 = arith.constant 0 : i32
    %c0_i32_0 = arith.constant 0 : i32
    %c0_i32_1 = arith.constant 0 : i32
    return %c0_i32, %c0_i32_0 : i32, i32
  }
  func.func @transform_3(%arg0: i32) -> (i32, i32) {
    %c0_i32 = arith.constant 0 : i32
    %c0_i32_0 = arith.constant 0 : i32
    return %c0_i32, %arg0 : i32, i32
  }
}

module attributes {stable_mosaic.version = 11 : i64} {
  func.func @_conv_gemm_kernel(%arg0: i32, %arg1: memref<8x216xf32, #tpu.memory_space<vmem>>, %arg2: memref<216x2048xbf16, #tpu.memory_space<vmem>>, %arg3: memref<8x1xf32, #tpu.memory_space<vmem>>, %arg4: memref<16x8xf32, #tpu.memory_space<vmem>>, %arg5: memref<16x1xf32, #tpu.memory_space<vmem>>, %arg6: memref<16x2048xf32, #tpu.memory_space<vmem>>) attributes {dimension_semantics = [#tpu.dimension_semantics<parallel>], iteration_bounds = array<i64: 4>, scalar_prefetch = 0 : i64, scratch_operands = 0 : i64, tpu.core_type = #tpu.core_type<tc>, window_params = [{pipeline_mode = #tpu.pipeline_mode<synchronous>, transform_indices = @transform_0, window_bounds = array<i64: 8, 216>}, {transform_indices = @transform_1, window_bounds = array<i64: 216, 2048>}, {pipeline_mode = #tpu.pipeline_mode<synchronous>, transform_indices = @transform_2, window_bounds = array<i64: 8, 1>}, {pipeline_mode = #tpu.pipeline_mode<synchronous>, transform_indices = @transform_3, window_bounds = array<i64: 16, 8>}, {pipeline_mode = #tpu.pipeline_mode<synchronous>, transform_indices = @transform_4, window_bounds = array<i64: 16, 1>}, {transform_indices = @transform_5, window_bounds = array<i64: 16, 2048>}]} {
    %c0 = arith.constant 0 : index
    %c0_0 = arith.constant 0 : index
    %0 = vector.load %arg1[%c0, %c0_0] : memref<8x216xf32, #tpu.memory_space<vmem>>, vector<8x216xf32>
    %c0_1 = arith.constant 0 : index
    %c0_2 = arith.constant 0 : index
    %1 = vector.load %arg2[%c0_1, %c0_2] : memref<216x2048xbf16, #tpu.memory_space<vmem>>, vector<216x2048xbf16>
    %2 = arith.extf %1 : vector<216x2048xbf16> to vector<216x2048xf32>
    %cst = arith.constant dense<0.000000e+00> : vector<8x2048xf32>
    %3 = tpu.matmul %0, %2, %cst {dimension_numbers = #tpu.dot_dimension_numbers<[1], [0], [0], [1], [0, 0, 1, 1], [], []>} : vector<8x216xf32>, vector<216x2048xf32>, vector<8x2048xf32> -> vector<8x2048xf32>
    %c0_3 = arith.constant 0 : index
    %c0_4 = arith.constant 0 : index
    %4 = vector.load %arg3[%c0_3, %c0_4] : memref<8x1xf32, #tpu.memory_space<vmem>>, vector<8x1xf32>
    %5 = vector.broadcast %4 : vector<8x1xf32> to vector<8x2048xf32>
    %6 = arith.addf %3, %5 : vector<8x2048xf32>
    %cst_5 = arith.constant 0.000000e+00 : f32
    %7 = vector.broadcast %cst_5 : f32 to vector<8x2048xf32>
    %8 = arith.maximumf %6, %7 : vector<8x2048xf32>
    %c0_6 = arith.constant 0 : index
    %c0_7 = arith.constant 0 : index
    %9 = vector.load %arg4[%c0_6, %c0_7] : memref<16x8xf32, #tpu.memory_space<vmem>>, vector<16x8xf32>
    %cst_8 = arith.constant dense<0.000000e+00> : vector<16x2048xf32>
    %10 = tpu.matmul %9, %8, %cst_8 {dimension_numbers = #tpu.dot_dimension_numbers<[1], [0], [0], [1], [0, 0, 1, 1], [], []>} : vector<16x8xf32>, vector<8x2048xf32>, vector<16x2048xf32> -> vector<16x2048xf32>
    %c0_9 = arith.constant 0 : index
    %c0_10 = arith.constant 0 : index
    %11 = vector.load %arg5[%c0_9, %c0_10] : memref<16x1xf32, #tpu.memory_space<vmem>>, vector<16x1xf32>
    %12 = vector.broadcast %11 : vector<16x1xf32> to vector<16x2048xf32>
    %13 = arith.addf %10, %12 : vector<16x2048xf32>
    %c0_11 = arith.constant 0 : index
    %c0_12 = arith.constant 0 : index
    %14 = vector.load %arg6[%c0_11, %c0_12] : memref<16x2048xf32, #tpu.memory_space<vmem>>, vector<16x2048xf32>
    tpu.vector_store %arg6[%c0_11, %c0_12], %13 {strides = array<i32>} : memref<16x2048xf32, #tpu.memory_space<vmem>>, vector<16x2048xf32>,
    return
  }
  func.func @transform_0(%arg0: i32) -> (i32, i32) {
    %c0_i32 = arith.constant 0 : i32
    %c0_i32_0 = arith.constant 0 : i32
    %c0_i32_1 = arith.constant 0 : i32
    return %c0_i32, %c0_i32_0 : i32, i32
  }
  func.func @transform_1(%arg0: i32) -> (i32, i32) {
    %c0_i32 = arith.constant 0 : i32
    %c0_i32_0 = arith.constant 0 : i32
    return %c0_i32, %arg0 : i32, i32
  }
  func.func @transform_2(%arg0: i32) -> (i32, i32) {
    %c0_i32 = arith.constant 0 : i32
    %c0_i32_0 = arith.constant 0 : i32
    %c0_i32_1 = arith.constant 0 : i32
    return %c0_i32, %c0_i32_0 : i32, i32
  }
  func.func @transform_3(%arg0: i32) -> (i32, i32) {
    %c0_i32 = arith.constant 0 : i32
    %c0_i32_0 = arith.constant 0 : i32
    %c0_i32_1 = arith.constant 0 : i32
    return %c0_i32, %c0_i32_0 : i32, i32
  }
  func.func @transform_4(%arg0: i32) -> (i32, i32) {
    %c0_i32 = arith.constant 0 : i32
    %c0_i32_0 = arith.constant 0 : i32
    %c0_i32_1 = arith.constant 0 : i32
    return %c0_i32, %c0_i32_0 : i32, i32
  }
  func.func @transform_5(%arg0: i32) -> (i32, i32) {
    %c0_i32 = arith.constant 0 : i32
    %c0_i32_0 = arith.constant 0 : i32
    return %c0_i32, %arg0 : i32, i32
  }
}

</mosaic_0001>

<llo_original>
// kernel: tile.38
$region0: #{tile.38}
  #allocation0 [shape = 's32[1]{0}', space=sflag, size = 0x4, scoped, tag = 'scoped memory for tile.38']
  %s0 = inlined_call_operand.vmem [shape: f32[8], index: 0, kind: input, shape index: {}]
  %s1 = inlined_call_operand.vmem [shape: f32[8,8], index: 1, kind: output, shape index: {}]
  // Predicated region
  $region2: #{tile.38} parent=0 // pred_check
    _
  $region3: #{tile.38} parent=0 // pred_check_branch
    %3 = sbr.rel (0) target = $region5
  $region4: #{tile.38} parent=0 // pred_region
    _
  $region5: #{tile.38} parent=0 // pred_fallthru
    _
  %v4 = vld [vmem:[%s0] ss:$0 sm:$0xff]
  %5 = vst [vmem:[%s1] sm:$0xff] %v4

// kernel: mul.45
$region0: #{mul.45}
  %s0 = inlined_call_operand.vmem [shape: f32[8,8], index: 0, kind: input, shape index: {}]
  %s1 = inlined_call_operand.vmem [shape: f32[64], index: 1, kind: output, shape index: {}]
  $region1: #{mul.45} parent=0
    #allocation0 [shape = 'u8[4096]{0}', space=vmem, size = 0x1000, scoped, tag = 'scoped mem for output reshape']
    %v2 = vld [vmem:[%s0] sm:$0x1]
    %vm3 = vcmask 64512
    %4 = vst.msk [vmem:[#allocation0] sm:$0x1] %vm3, %v2
    %s5 = scalar_lea.vmem %s0, 7
    %v6 = vld [vmem:[%s5] sm:$0x1]
    %7 = vrot.lane.b32.xlu0 %v6, 56
    %v8 = vpop.permute.xlu0 %7
    %vm9 = vcmask 523712
    %10 = vst.msk [vmem:[#allocation0] sm:$0x1] %vm9, %v8
    %s11 = scalar_lea.vmem %s0, 6
    %v12 = vld [vmem:[%s11] sm:$0x1]
    %13 = vrot.lane.b32.xlu0 %v12, 48
    %v14 = vpop.permute.xlu0 %13
    %vm15 = vcmask 458112
    %16 = vst.msk [vmem:[#allocation0] sm:$0x1] %vm15, %v14
    %s17 = scalar_lea.vmem %s0, 5
    %v18 = vld [vmem:[%s17] sm:$0x1]
    %19 = vrot.lane.b32.xlu0 %v18, 40
    %v20 = vpop.permute.xlu0 %19
    %vm21 = vcmask 392512
    %22 = vst.msk [vmem:[#allocation0] sm:$0x1] %vm21, %v20
    %s23 = scalar_lea.vmem %s0, 4
    %v24 = vld [vmem:[%s23] sm:$0x1]
    %25 = vrot.lane.b32.xlu0 %v24, 32
    %v26 = vpop.permute.xlu0 %25
    %vm27 = vcmask 326912
    %28 = vst.msk [vmem:[#allocation0] sm:$0x1] %vm27, %v26
    %s29 = scalar_lea.vmem %s0, 3
    %v30 = vld [vmem:[%s29] sm:$0x1]
    %31 = vrot.lane.b32.xlu0 %v30, 24
    %v32 = vpop.permute.xlu0 %31
    %vm33 = vcmask 261312
    %34 = vst.msk [vmem:[#allocation0] sm:$0x1] %vm33, %v32
    %s35 = scalar_lea.vmem %s0, 2
    %v36 = vld [vmem:[%s35] sm:$0x1]
    %37 = vrot.lane.b32.xlu0 %v36, 16
    %v38 = vpop.permute.xlu0 %37
    %vm39 = vcmask 195712
    %40 = vst.msk [vmem:[#allocation0] sm:$0x1] %vm39, %v38
    %s41 = scalar_lea.vmem %s0, 1
    %v42 = vld [vmem:[%s41] sm:$0x1]
    %43 = vrot.lane.b32.xlu0 %v42, 8
    %v44 = vpop.permute.xlu0 %43
    %vm45 = vcmask 130112
    %46 = vst.msk [vmem:[#allocation0] sm:$0x1] %vm45, %v44
    %s48 = ssub.s32 2, 1
    %v49 = vld [vmem:[#allocation0] sm:%s48]
    %s51 = ssub.s32 2, 1
    %52 = vst [vmem:[%s1] sm:%s51] %v49

// kernel: tile.0
$region0: #{tile.0}
  %s0 = inlined_call_operand.vmem [shape: f32[8,8], index: 0, kind: input, shape index: {}]
  %s1 = inlined_call_operand.vmem [shape: f32[64,1], index: 1, kind: output, shape index: {}]
  %v2 = vld [vmem:[%s0] sm:$0xff]
  %vm3 = vcmask 7168
  %4 = vst.msk [vmem:[%s1] ss:$8 sm:$0xf] %vm3, %v2
  %5 = vst.msk [vmem:[%s1] ss:$8 sm:$0xf0] %vm3, %v2
  %v6 = vld [vmem:[%s0] sm:$0xff]
  %7 = vrot.lane.b32.xlu0 %v6, 127
  %v8 = vpop.permute.xlu0 %7
  %vm9 = vcmask 7168
  %s10 = scalar_lea.vmem %s1, 1
  %11 = vst.msk [vmem:[%s10] ss:$8 sm:$0xf] %vm9, %v8
  %s12 = scalar_lea.vmem %s1, 1
  %13 = vst.msk [vmem:[%s12] ss:$8 sm:$0xf0] %vm9, %v8
  %v14 = vld [vmem:[%s0] sm:$0xff]
  %15 = vrot.lane.b32.xlu0 %v14, 126
  %v16 = vpop.permute.xlu0 %15
  %vm17 = vcmask 7168
  %s18 = scalar_lea.vmem %s1, 2
  %19 = vst.msk [vmem:[%s18] ss:$8 sm:$0xf] %vm17, %v16
  %s20 = scalar_lea.vmem %s1, 2
  %21 = vst.msk [vmem:[%s20] ss:$8 sm:$0xf0] %vm17, %v16
  %v22 = vld [vmem:[%s0] sm:$0xff]
  %23 = vrot.lane.b32.xlu0 %v22, 125
  %v24 = vpop.permute.xlu0 %23
  %vm25 = vcmask 7168
  %s26 = scalar_lea.vmem %s1, 3
  %27 = vst.msk [vmem:[%s26] ss:$8 sm:$0xf] %vm25, %v24
  %s28 = scalar_lea.vmem %s1, 3
  %29 = vst.msk [vmem:[%s28] ss:$8 sm:$0xf0] %vm25, %v24
  %v30 = vld [vmem:[%s0] sm:$0xff]
  %31 = vrot.lane.b32.xlu0 %v30, 124
  %v32 = vpop.permute.xlu0 %31
  %vm33 = vcmask 7168
  %s34 = scalar_lea.vmem %s1, 4
  %35 = vst.msk [vmem:[%s34] ss:$8 sm:$0xf] %vm33, %v32
  %s36 = scalar_lea.vmem %s1, 4
  %37 = vst.msk [vmem:[%s36] ss:$8 sm:$0xf0] %vm33, %v32
  %v38 = vld [vmem:[%s0] sm:$0xff]
  %39 = vrot.lane.b32.xlu0 %v38, 123
  %v40 = vpop.permute.xlu0 %39
  %vm41 = vcmask 7168
  %s42 = scalar_lea.vmem %s1, 5
  %43 = vst.msk [vmem:[%s42] ss:$8 sm:$0xf] %vm41, %v40
  %s44 = scalar_lea.vmem %s1, 5
  %45 = vst.msk [vmem:[%s44] ss:$8 sm:$0xf0] %vm41, %v40
  %v46 = vld [vmem:[%s0] sm:$0xff]
  %47 = vrot.lane.b32.xlu0 %v46, 122
  %v48 = vpop.permute.xlu0 %47
  %vm49 = vcmask 7168
  %s50 = scalar_lea.vmem %s1, 6
  %51 = vst.msk [vmem:[%s50] ss:$8 sm:$0xf] %vm49, %v48
  %s52 = scalar_lea.vmem %s1, 6
  %53 = vst.msk [vmem:[%s52] ss:$8 sm:$0xf0] %vm49, %v48
  %v54 = vld [vmem:[%s0] sm:$0xff]
  %55 = vrot.lane.b32.xlu0 %v54, 121
  %v56 = vpop.permute.xlu0 %55
  %vm57 = vcmask 7168
  %s58 = scalar_lea.vmem %s1, 7
  %59 = vst.msk [vmem:[%s58] ss:$8 sm:$0xf] %vm57, %v56
  %s60 = scalar_lea.vmem %s1, 7
  %61 = vst.msk [vmem:[%s60] ss:$8 sm:$0xf0] %vm57, %v56

// kernel: forward.7
$region0: #{forward.7}
  #allocation0 [shape = 'u32[]', space=smem, size = 0x4, offset = 0x4, fixed_abs, tag = 'smem constant byte address 0x4 - core index']
  #allocation1 [shape = 'u32[72,128]{1,0:T(1,128)}', space=vmem, size = 0x9000, scoped, tag = 'internal scratch']
  %s0 = inlined_call_operand.vmem [shape: f32[8,1024], index: 0, kind: input, shape index: {}]
  %s1 = inlined_call_operand.vmem [shape: f32[8,1024], index: 1, kind: input, shape index: {}]
  %s2 = inlined_call_operand.vmem [shape: f32[8,2], index: 2, kind: input, shape index: {}]
  %s3 = inlined_call_operand.vmem [shape: f32[8,2], index: 3, kind: input, shape index: {}]
  %s4 = inlined_call_operand.vmem [shape: f32[8,8], index: 4, kind: input, shape index: {}]
  %s5 = inlined_call_operand.vmem [shape: f32[8,1], index: 5, kind: input, shape index: {}]
  %s6 = inlined_call_operand.vmem [shape: f32[8,8], index: 6, kind: input, shape index: {}]
  %s7 = inlined_call_operand.vmem [shape: f32[8,1], index: 7, kind: input, shape index: {}]
  %s8 = inlined_call_operand.vmem [shape: bf16[8,1024], index: 8, kind: output, shape index: {}]
  %s9 = sld [smem:[#allocation0]]
  $region42: #{forward.7} parent=0
    _
  %s11 = ssub.s32 1, %s9
  %s12 = scalar_select 0, %s11, %s9
  // Predicated region
  $region2: #{forward.7} parent=0 // pred_check
    _
  $region3: #{forward.7} parent=0 // pred_check_branch
    %14 = sbr.rel (0) target = $region5
  $region4: #{forward.7} parent=0 // pred_region
    _
  $region5: #{forward.7} parent=0 // pred_fallthru
    _
  // Predicated region
  $region6: #{forward.7} parent=0 // pred_check
    _
  $region7: #{forward.7} parent=0 // pred_check_branch
    %16 = sbr.rel (0) target = $region9
  $region8: #{forward.7} parent=0 // pred_region
    _
  $region9: #{forward.7} parent=0 // pred_fallthru
    _
  // Predicated region
  $region10: #{forward.7} parent=0 // pred_check
    _
  $region11: #{forward.7} parent=0 // pred_check_branch
    %18 = sbr.rel (0) target = $region13
  $region12: #{forward.7} parent=0 // pred_region
    _
  $region13: #{forward.7} parent=0 // pred_fallthru
    _
  // Predicated region
  $region14: #{forward.7} parent=0 // pred_check
    _
  $region15: #{forward.7} parent=0 // pred_check_branch
    %20 = sbr.rel (0) target = $region17
  $region16: #{forward.7} parent=0 // pred_region
    _
  $region17: #{forward.7} parent=0 // pred_fallthru
    _
  // Predicated region
  $region18: #{forward.7} parent=0 // pred_check
    _
  $region19: #{forward.7} parent=0 // pred_check_branch
    %22 = sbr.rel (0) target = $region21
  $region20: #{forward.7} parent=0 // pred_region
    _
  $region21: #{forward.7} parent=0 // pred_fallthru
    _
  // Predicated region
  $region22: #{forward.7} parent=0 // pred_check
    _
  $region23: #{forward.7} parent=0 // pred_check_branch
    %24 = sbr.rel (0) target = $region25
  $region24: #{forward.7} parent=0 // pred_region
    _
  $region25: #{forward.7} parent=0 // pred_fallthru
    _
  // Predicated region
  $region26: #{forward.7} parent=0 // pred_check
    _
  $region27: #{forward.7} parent=0 // pred_check_branch
    %26 = sbr.rel (0) target = $region29
  $region28: #{forward.7} parent=0 // pred_region
    _
  $region29: #{forward.7} parent=0 // pred_fallthru
    _
  // Predicated region
  $region30: #{forward.7} parent=0 // pred_check
    _
  $region31: #{forward.7} parent=0 // pred_check_branch
    %28 = sbr.rel (0) target = $region33
  $region32: #{forward.7} parent=0 // pred_region
    _
  $region33: #{forward.7} parent=0 // pred_fallthru
    _
  %v29 = vld [vmem:[%s4] sm:$0xff]
  %v30 = vld [vmem:[%s2] sm:$0xff]
  %v31 = vld [vmem:[%s5] sm:$0xff]
  %33 = vset.pattern.permute.xlu0 0
  %34 = vperm.xlu0 %33, %v31
  %v35 = vpop.permute.xlu0 %34
  %vm37 = vcmask 64512
  %v39 = vsel %vm37, %v29, 0
  %41 = vmatpush.msra.mxu0 0.0
  %42 = vmatpush.msra.mxu0 0.0
  %43 = vmatpush.msra.mxu0 0.0
  %44 = vmatpush.msra.mxu0 0.0
  %45 = vmatpush.msra.mxu0 0.0
  %46 = vmatpush.msra.mxu0 0.0
  %47 = vmatpush.msra.mxu0 0.0
  %48 = vmatpush.msra.mxu0 0.0
  %49 = vmatpush.msra.mxu0 0.0
  %50 = vmatpush.msra.mxu0 0.0
  %51 = vmatpush.msra.mxu0 0.0
  %52 = vmatpush.msra.mxu0 0.0
  %53 = vmatpush.msra.mxu0 0.0
  %54 = vmatpush.msra.mxu0 0.0
  %55 = vmatpush.msra.mxu0 0.0
  %56 = vmatpush.msra.mxu0 %v30
  %57 = vmatmul.f32.gmra.mxu0 %v39
  %v58 = vpop.f32.mrf.mxu0
  %v59 = vadd.f32 %v35, %v58
  %60 = vdwg.mxu0
  %v61 = vxor.u32 %v59, 2147483648
  %v62 = vmul.f32 %v61, 1.442695
  %v63 = vpow.pop %v62
  %v64 = vadd.f32 %v63, 1.0
  %v65 = vrcp.pop %v64
  %v66 = vmul.f32 %v64, %v65
  %v67 = vsub.f32 1.0, %v66
  %v68 = vmul.f32 %v65, %v67
  %v69 = vadd.f32 %v65, %v68
  %vm70 = vweird.f32 %v64
  %vm71 = vweird.f32 %v65
  %vm72 = vmor %vm70, %vm71
  %v73 = vsel %vm72, %v65, %v69
  %v74 = vand.u32 2147483647, %v64
  %vm75 = vcmp.eq.f32.partialorder %v74, 8.507059e+37
  %v76 = vand.u32 %v64, 2147483648
  %v77 = vor.u32 1.1754944e-38, %v76
  %v78 = vsel %vm75, %v77, %v73
  %v79 = vmul.f32 1.0, %v78
  %v80 = vld [vmem:[%s6] sm:$0xff]
  %v81 = vld [vmem:[%s3] sm:$0xff]
  %v82 = vld [vmem:[%s7] sm:$0xff]
  %84 = vset.pattern.permute.xlu0 0
  %85 = vperm.xlu0 %84, %v82
  %v86 = vpop.permute.xlu0 %85
  %v89 = vsel %vm37, %v80, 0
  %91 = vmatpush.msra.mxu0 0.0
  %92 = vmatpush.msra.mxu0 0.0
  %93 = vmatpush.msra.mxu0 0.0
  %94 = vmatpush.msra.mxu0 0.0
  %95 = vmatpush.msra.mxu0 0.0
  %96 = vmatpush.msra.mxu0 0.0
  %97 = vmatpush.msra.mxu0 0.0
  %98 = vmatpush.msra.mxu0 0.0
  %99 = vmatpush.msra.mxu0 0.0
  %100 = vmatpush.msra.mxu0 0.0
  %101 = vmatpush.msra.mxu0 0.0
  %102 = vmatpush.msra.mxu0 0.0
  %103 = vmatpush.msra.mxu0 0.0
  %104 = vmatpush.msra.mxu0 0.0
  %105 = vmatpush.msra.mxu0 0.0
  %106 = vmatpush.msra.mxu0 %v81
  %107 = vmatmul.f32.gmra.mxu0 %v89
  %v108 = vpop.f32.mrf.mxu0
  %v109 = vadd.f32 %v86, %v108
  %110 = vdwg.mxu0
  %v111 = vxor.u32 %v109, 2147483648
  %v112 = vmul.f32 %v111, 1.442695
  %v113 = vpow.pop %v112
  %v114 = vadd.f32 %v113, 1.0
  %v115 = vrcp.pop %v114
  %v116 = vmul.f32 %v114, %v115
  %v117 = vsub.f32 1.0, %v116
  %v118 = vmul.f32 %v115, %v117
  %v119 = vadd.f32 %v115, %v118
  %vm120 = vweird.f32 %v114
  %vm121 = vweird.f32 %v115
  %vm122 = vmor %vm120, %vm121
  %v123 = vsel %vm122, %v115, %v119
  %v124 = vand.u32 2147483647, %v114
  %vm125 = vcmp.eq.f32.partialorder %v124, 8.507059e+37
  %v126 = vand.u32 %v114, 2147483648
  %v127 = vor.u32 1.1754944e-38, %v126
  %v128 = vsel %vm125, %v127, %v123
  %v129 = vmul.f32 1.0, %v128
  %131 = vset.pattern.permute.xlu0 0
  %132 = vperm.xlu0 %131, %v79
  %v133 = vpop.permute.xlu0 %132
  %135 = vset.pattern.permute.xlu0 1
  %136 = vperm.xlu0 %135, %v79
  %v137 = vpop.permute.xlu0 %136
  %140 = vset.pattern.permute.xlu0 0
  %141 = vperm.xlu0 %140, %v129
  %v142 = vpop.permute.xlu0 %141
  %144 = vset.pattern.permute.xlu0 1
  %145 = vperm.xlu0 %144, %v129
  %v146 = vpop.permute.xlu0 %145
  %v148 = vld [vmem:[%s0] sm:$0xff]
  %v149 = vld [vmem:[%s0 + $0x8] sm:$0xff]
  %v150 = vld [vmem:[%s0 + $0x10] sm:$0xff]
  %v151 = vld [vmem:[%s0 + $0x18] sm:$0xff]
  %v152 = vld [vmem:[%s0 + $0x20] sm:$0xff]
  %v153 = vld [vmem:[%s0 + $0x28] sm:$0xff]
  %v154 = vld [vmem:[%s0 + $0x30] sm:$0xff]
  %v155 = vld [vmem:[%s0 + $0x38] sm:$0xff]
  %v156 = vmul.f32 %v148, %v133
  %v157 = vmul.f32 %v149, %v133
  %v158 = vmul.f32 %v150, %v133
  %v159 = vmul.f32 %v151, %v133
  %v160 = vmul.f32 %v152, %v137
  %v161 = vmul.f32 %v153, %v137
  %v162 = vmul.f32 %v154, %v137
  %v163 = vmul.f32 %v155, %v137
  %v164 = vld [vmem:[%s1] sm:$0xff]
  %v165 = vld [vmem:[%s1 + $0x8] sm:$0xff]
  %v166 = vld [vmem:[%s1 + $0x10] sm:$0xff]
  %v167 = vld [vmem:[%s1 + $0x18] sm:$0xff]
  %v168 = vld [vmem:[%s1 + $0x20] sm:$0xff]
  %v169 = vld [vmem:[%s1 + $0x28] sm:$0xff]
  %v170 = vld [vmem:[%s1 + $0x30] sm:$0xff]
  %v171 = vld [vmem:[%s1 + $0x38] sm:$0xff]
  %v172 = vmul.f32 %v164, %v142
  %v173 = vmul.f32 %v165, %v142
  %v174 = vmul.f32 %v166, %v142
  %v175 = vmul.f32 %v167, %v142
  %v176 = vmul.f32 %v168, %v146
  %v177 = vmul.f32 %v169, %v146
  %v178 = vmul.f32 %v170, %v146
  %v179 = vmul.f32 %v171, %v146
  %v180 = vadd.f32 %v156, %v172
  %v181 = vadd.f32 %v157, %v173
  %v182 = vadd.f32 %v158, %v174
  %v183 = vadd.f32 %v159, %v175
  %v184 = vadd.f32 %v160, %v176
  %v185 = vadd.f32 %v161, %v177
  %v186 = vadd.f32 %v162, %v178
  %v187 = vadd.f32 %v163, %v179
  %v188 = vpack.c.bf16 %v181, %v180
  %v189 = vpack.c.bf16 %v183, %v182
  %v190 = vpack.c.bf16 %v185, %v184
  %v191 = vpack.c.bf16 %v187, %v186
  %192 = vst [vmem:[%s8] sm:$0xff] %v188
  %193 = vst [vmem:[%s8 + $0x8] sm:$0xff] %v189
  %194 = vst [vmem:[%s8 + $0x10] sm:$0xff] %v190
  %195 = vst [vmem:[%s8 + $0x18] sm:$0xff] %v191
  // Predicated region
  $region34: #{forward.7} parent=0 // pred_check
    _
  $region35: #{forward.7} parent=0 // pred_check_branch
    %197 = sbr.rel (0) target = $region37
  $region36: #{forward.7} parent=0 // pred_region
    _
  $region37: #{forward.7} parent=0 // pred_fallthru
    _
  // Predicated region
  $region38: #{forward.7} parent=0 // pred_check
    _
  $region39: #{forward.7} parent=0 // pred_check_branch
    %199 = sbr.rel (0) target = $region41
  $region40: #{forward.7} parent=0 // pred_region
    _
  $region41: #{forward.7} parent=0 // pred_fallthru
    _

// kernel: forward.9
$region0: #{forward.9}
  #allocation0 [shape = 'u32[]', space=smem, size = 0x4, offset = 0x4, fixed_abs, tag = 'smem constant byte address 0x4 - core index']
  #allocation1 [shape = 'u32[72,128]{1,0:T(1,128)}', space=vmem, size = 0x9000, scoped, tag = 'internal scratch']
  %s0 = inlined_call_operand.vmem [shape: f32[16,128], index: 0, kind: input, shape index: {}]
  %s1 = inlined_call_operand.vmem [shape: f32[16,128], index: 1, kind: input, shape index: {}]
  %s2 = inlined_call_operand.vmem [shape: f32[16,2], index: 2, kind: input, shape index: {}]
  %s3 = inlined_call_operand.vmem [shape: f32[16,2], index: 3, kind: input, shape index: {}]
  %s4 = inlined_call_operand.vmem [shape: f32[16,16], index: 4, kind: input, shape index: {}]
  %s5 = inlined_call_operand.vmem [shape: f32[16,1], index: 5, kind: input, shape index: {}]
  %s6 = inlined_call_operand.vmem [shape: f32[16,16], index: 6, kind: input, shape index: {}]
  %s7 = inlined_call_operand.vmem [shape: f32[16,1], index: 7, kind: input, shape index: {}]
  %s8 = inlined_call_operand.vmem [shape: f32[16,128], index: 8, kind: input, shape index: {}]
  %s9 = inlined_call_operand.vmem [shape: bf16[16,128], index: 9, kind: output, shape index: {}]
  %s10 = sld [smem:[#allocation0]]
  $region46: #{forward.9} parent=0
    _
  %s12 = ssub.s32 1, %s10
  %s13 = scalar_select 0, %s12, %s10
  // Predicated region
  $region2: #{forward.9} parent=0 // pred_check
    _
  $region3: #{forward.9} parent=0 // pred_check_branch
    %15 = sbr.rel (0) target = $region5
  $region4: #{forward.9} parent=0 // pred_region
    _
  $region5: #{forward.9} parent=0 // pred_fallthru
    _
  // Predicated region
  $region6: #{forward.9} parent=0 // pred_check
    _
  $region7: #{forward.9} parent=0 // pred_check_branch
    %17 = sbr.rel (0) target = $region9
  $region8: #{forward.9} parent=0 // pred_region
    _
  $region9: #{forward.9} parent=0 // pred_fallthru
    _
  // Predicated region
  $region10: #{forward.9} parent=0 // pred_check
    _
  $region11: #{forward.9} parent=0 // pred_check_branch
    %19 = sbr.rel (0) target = $region13
  $region12: #{forward.9} parent=0 // pred_region
    _
  $region13: #{forward.9} parent=0 // pred_fallthru
    _
  // Predicated region
  $region14: #{forward.9} parent=0 // pred_check
    _
  $region15: #{forward.9} parent=0 // pred_check_branch
    %21 = sbr.rel (0) target = $region17
  $region16: #{forward.9} parent=0 // pred_region
    _
  $region17: #{forward.9} parent=0 // pred_fallthru
    _
  // Predicated region
  $region18: #{forward.9} parent=0 // pred_check
    _
  $region19: #{forward.9} parent=0 // pred_check_branch
    %23 = sbr.rel (0) target = $region21
  $region20: #{forward.9} parent=0 // pred_region
    _
  $region21: #{forward.9} parent=0 // pred_fallthru
    _
  // Predicated region
  $region22: #{forward.9} parent=0 // pred_check
    _
  $region23: #{forward.9} parent=0 // pred_check_branch
    %25 = sbr.rel (0) target = $region25
  $region24: #{forward.9} parent=0 // pred_region
    _
  $region25: #{forward.9} parent=0 // pred_fallthru
    _
  // Predicated region
  $region26: #{forward.9} parent=0 // pred_check
    _
  $region27: #{forward.9} parent=0 // pred_check_branch
    %27 = sbr.rel (0) target = $region29
  $region28: #{forward.9} parent=0 // pred_region
    _
  $region29: #{forward.9} parent=0 // pred_fallthru
    _
  // Predicated region
  $region30: #{forward.9} parent=0 // pred_check
    _
  $region31: #{forward.9} parent=0 // pred_check_branch
    %29 = sbr.rel (0) target = $region33
  $region32: #{forward.9} parent=0 // pred_region
    _
  $region33: #{forward.9} parent=0 // pred_fallthru
    _
  // Predicated region
  $region34: #{forward.9} parent=0 // pred_check
    _
  $region35: #{forward.9} parent=0 // pred_check_branch
    %31 = sbr.rel (0) target = $region37
  $region36: #{forward.9} parent=0 // pred_region
    _
  $region37: #{forward.9} parent=0 // pred_fallthru
    _
  %v32 = vld [vmem:[%s4] sm:$0xff]
  %v33 = vld [vmem:[%s4 + $0x8] sm:$0xff]
  %v34 = vld [vmem:[%s2] sm:$0xff]
  %v35 = vld [vmem:[%s2 + $0x8] sm:$0xff]
  %v36 = vld [vmem:[%s5] sm:$0xff]
  %v37 = vld [vmem:[%s5 + $0x8] sm:$0xff]
  %39 = vset.pattern.permute.xlu0 0
  %40 = vperm.xlu0 %39, %v36
  %v41 = vpop.permute.xlu0 %40
  %44 = vset.pattern.permute.xlu0 0
  %45 = vperm.xlu0 %44, %v37
  %v46 = vpop.permute.xlu0 %45
  %vm48 = vcmask 130048
  %v50 = vsel %vm48, %v32, 0
  %v53 = vsel %vm48, %v33, 0
  %55 = vmatpush.msra.mxu0 0.0
  %56 = vmatpush.msra.mxu0 0.0
  %57 = vmatpush.msra.mxu0 0.0
  %58 = vmatpush.msra.mxu0 0.0
  %59 = vmatpush.msra.mxu0 0.0
  %60 = vmatpush.msra.mxu0 0.0
  %61 = vmatpush.msra.mxu0 0.0
  %62 = vmatpush.msra.mxu0 0.0
  %63 = vmatpush.msra.mxu0 0.0
  %64 = vmatpush.msra.mxu0 0.0
  %65 = vmatpush.msra.mxu0 0.0
  %66 = vmatpush.msra.mxu0 0.0
  %67 = vmatpush.msra.mxu0 0.0
  %68 = vmatpush.msra.mxu0 0.0
  %69 = vmatpush.msra.mxu0 %v35
  %70 = vmatpush.msra.mxu0 %v34
  %71 = vmatmul.f32.gmra.mxu0 %v50
  %v72 = vpop.f32.mrf.mxu0
  %v73 = vadd.f32 %v41, %v72
  %74 = vmatmul.f32.gmra.mxu0 %v53
  %v75 = vpop.f32.mrf.mxu0
  %v76 = vadd.f32 %v46, %v75
  %77 = vdwg.mxu0
  %v78 = vxor.u32 %v73, 2147483648
  %v79 = vxor.u32 %v76, 2147483648
  %v80 = vmul.f32 %v78, 1.442695
  %v81 = vpow.pop %v80
  %v82 = vmul.f32 %v79, 1.442695
  %v83 = vpow.pop %v82
  %v84 = vadd.f32 %v81, 1.0
  %v85 = vadd.f32 %v83, 1.0
  %v86 = vrcp.pop %v84
  %v87 = vmul.f32 %v84, %v86
  %v88 = vsub.f32 1.0, %v87
  %v89 = vmul.f32 %v86, %v88
  %v90 = vadd.f32 %v86, %v89
  %vm91 = vweird.f32 %v84
  %vm92 = vweird.f32 %v86
  %vm93 = vmor %vm91, %vm92
  %v94 = vsel %vm93, %v86, %v90
  %v95 = vand.u32 2147483647, %v84
  %vm96 = vcmp.eq.f32.partialorder %v95, 8.507059e+37
  %v97 = vand.u32 %v84, 2147483648
  %v98 = vor.u32 1.1754944e-38, %v97
  %v99 = vsel %vm96, %v98, %v94
  %v100 = vmul.f32 1.0, %v99
  %v101 = vrcp.pop %v85
  %v102 = vmul.f32 %v85, %v101
  %v103 = vsub.f32 1.0, %v102
  %v104 = vmul.f32 %v101, %v103
  %v105 = vadd.f32 %v101, %v104
  %vm106 = vweird.f32 %v85
  %vm107 = vweird.f32 %v101
  %vm108 = vmor %vm106, %vm107
  %v109 = vsel %vm108, %v101, %v105
  %v110 = vand.u32 2147483647, %v85
  %vm111 = vcmp.eq.f32.partialorder %v110, 8.507059e+37
  %v112 = vand.u32 %v85, 2147483648
  %v113 = vor.u32 1.1754944e-38, %v112
  %v114 = vsel %vm111, %v113, %v109
  %v115 = vmul.f32 1.0, %v114
  %v116 = vld [vmem:[%s6] sm:$0xff]
  %v117 = vld [vmem:[%s6 + $0x8] sm:$0xff]
  %v118 = vld [vmem:[%s3] sm:$0xff]
  %v119 = vld [vmem:[%s3 + $0x8] sm:$0xff]
  %v120 = vld [vmem:[%s7] sm:$0xff]
  %v121 = vld [vmem:[%s7 + $0x8] sm:$0xff]
  %123 = vset.pattern.permute.xlu0 0
  %124 = vperm.xlu0 %123, %v120
  %v125 = vpop.permute.xlu0 %124
  %128 = vset.pattern.permute.xlu0 0
  %129 = vperm.xlu0 %128, %v121
  %v130 = vpop.permute.xlu0 %129
  %v133 = vsel %vm48, %v116, 0
  %v136 = vsel %vm48, %v117, 0
  %138 = vmatpush.msra.mxu0 0.0
  %139 = vmatpush.msra.mxu0 0.0
  %140 = vmatpush.msra.mxu0 0.0
  %141 = vmatpush.msra.mxu0 0.0
  %142 = vmatpush.msra.mxu0 0.0
  %143 = vmatpush.msra.mxu0 0.0
  %144 = vmatpush.msra.mxu0 0.0
  %145 = vmatpush.msra.mxu0 0.0
  %146 = vmatpush.msra.mxu0 0.0
  %147 = vmatpush.msra.mxu0 0.0
  %148 = vmatpush.msra.mxu0 0.0
  %149 = vmatpush.msra.mxu0 0.0
  %150 = vmatpush.msra.mxu0 0.0
  %151 = vmatpush.msra.mxu0 0.0
  %152 = vmatpush.msra.mxu0 %v119
  %153 = vmatpush.msra.mxu0 %v118
  %154 = vmatmul.f32.gmra.mxu0 %v133
  %v155 = vpop.f32.mrf.mxu0
  %v156 = vadd.f32 %v125, %v155
  %157 = vmatmul.f32.gmra.mxu0 %v136
  %v158 = vpop.f32.mrf.mxu0
  %v159 = vadd.f32 %v130, %v158
  %160 = vdwg.mxu0
  %v161 = vxor.u32 %v156, 2147483648
  %v162 = vxor.u32 %v159, 2147483648
  %v163 = vmul.f32 %v161, 1.442695
  %v164 = vpow.pop %v163
  %v165 = vmul.f32 %v162, 1.442695
  %v166 = vpow.pop %v165
  %v167 = vadd.f32 %v164, 1.0
  %v168 = vadd.f32 %v166, 1.0
  %v169 = vrcp.pop %v167
  %v170 = vmul.f32 %v167, %v169
  %v171 = vsub.f32 1.0, %v170
  %v172 = vmul.f32 %v169, %v171
  %v173 = vadd.f32 %v169, %v172
  %vm174 = vweird.f32 %v167
  %vm175 = vweird.f32 %v169
  %vm176 = vmor %vm174, %vm175
  %v177 = vsel %vm176, %v169, %v173
  %v178 = vand.u32 2147483647, %v167
  %vm179 = vcmp.eq.f32.partialorder %v178, 8.507059e+37
  %v180 = vand.u32 %v167, 2147483648
  %v181 = vor.u32 1.1754944e-38, %v180
  %v182 = vsel %vm179, %v181, %v177
  %v183 = vmul.f32 1.0, %v182
  %v184 = vrcp.pop %v168
  %v185 = vmul.f32 %v168, %v184
  %v186 = vsub.f32 1.0, %v185
  %v187 = vmul.f32 %v184, %v186
  %v188 = vadd.f32 %v184, %v187
  %vm189 = vweird.f32 %v168
  %vm190 = vweird.f32 %v184
  %vm191 = vmor %vm189, %vm190
  %v192 = vsel %vm191, %v184, %v188
  %v193 = vand.u32 2147483647, %v168
  %vm194 = vcmp.eq.f32.partialorder %v193, 8.507059e+37
  %v195 = vand.u32 %v168, 2147483648
  %v196 = vor.u32 1.1754944e-38, %v195
  %v197 = vsel %vm194, %v196, %v192
  %v198 = vmul.f32 1.0, %v197
  %200 = vset.pattern.permute.xlu0 0
  %201 = vperm.xlu0 %200, %v100
  %v202 = vpop.permute.xlu0 %201
  %205 = vset.pattern.permute.xlu0 0
  %206 = vperm.xlu0 %205, %v115
  %v207 = vpop.permute.xlu0 %206
  %209 = vset.pattern.permute.xlu0 1
  %210 = vperm.xlu0 %209, %v100
  %v211 = vpop.permute.xlu0 %210
  %213 = vset.pattern.permute.xlu0 1
  %214 = vperm.xlu0 %213, %v115
  %v215 = vpop.permute.xlu0 %214
  %vm217 = vcmask 523264
  %v218 = vsel %vm217, %v202, %v211
  %v219 = vsel %vm217, %v207, %v215
  %221 = vset.pattern.permute.xlu0 0
  %222 = vperm.xlu0 %221, %v183
  %v223 = vpop.permute.xlu0 %222
  %226 = vset.pattern.permute.xlu0 0
  %227 = vperm.xlu0 %226, %v198
  %v228 = vpop.permute.xlu0 %227
  %230 = vset.pattern.permute.xlu0 1
  %231 = vperm.xlu0 %230, %v183
  %v232 = vpop.permute.xlu0 %231
  %234 = vset.pattern.permute.xlu0 1
  %235 = vperm.xlu0 %234, %v198
  %v236 = vpop.permute.xlu0 %235
  %v238 = vsel %vm217, %v223, %v232
  %v239 = vsel %vm217, %v228, %v236
  %v240 = vld [vmem:[%s0] sm:$0xff]
  %v241 = vld [vmem:[%s0 + $0x8] sm:$0xff]
  %v242 = vmul.f32 %v240, %v218
  %v243 = vmul.f32 %v241, %v219
  %v244 = vld [vmem:[%s1] sm:$0xff]
  %v245 = vld [vmem:[%s1 + $0x8] sm:$0xff]
  %v246 = vmul.f32 %v244, %v238
  %v247 = vmul.f32 %v245, %v239
  %v248 = vadd.f32 %v242, %v246
  %v249 = vadd.f32 %v243, %v247
  %v250 = vld [vmem:[%s8] sm:$0xff]
  %v251 = vld [vmem:[%s8 + $0x8] sm:$0xff]
  %v252 = vadd.f32 %v248, %v250
  %v253 = vadd.f32 %v249, %v251
  %v254 = vpack.c.bf16 %v252, %v252
  %v255 = vpack.c.bf16 %v253, %v253
  %256 = vst [vmem:[%s9] sm:$0xf] %v254
  %257 = vst [vmem:[%s9 + $0x4] sm:$0xf] %v255
  // Predicated region
  $region38: #{forward.9} parent=0 // pred_check
    _
  $region39: #{forward.9} parent=0 // pred_check_branch
    %259 = sbr.rel (0) target = $region41
  $region40: #{forward.9} parent=0 // pred_region
    _
  $region41: #{forward.9} parent=0 // pred_fallthru
    _
  // Predicated region
  $region42: #{forward.9} parent=0 // pred_check
    _
  $region43: #{forward.9} parent=0 // pred_check_branch
    %261 = sbr.rel (0) target = $region45
  $region44: #{forward.9} parent=0 // pred_region
    _
  $region45: #{forward.9} parent=0 // pred_fallthru
    _

// kernel: forward.8
$region0: #{forward.8}
  #allocation0 [shape = 'u32[]', space=smem, size = 0x4, offset = 0x4, fixed_abs, tag = 'smem constant byte address 0x4 - core index']
  #allocation1 [shape = 'u32[72,128]{1,0:T(1,128)}', space=vmem, size = 0x9000, scoped, tag = 'internal scratch']
  %s0 = inlined_call_operand.vmem [shape: f32[16,9], index: 0, kind: input, shape index: {}]
  %s1 = inlined_call_operand.vmem [shape: bf16[9,128], index: 1, kind: input, shape index: {}]
  %s2 = inlined_call_operand.vmem [shape: f32[16,1], index: 2, kind: input, shape index: {}]
  %s3 = inlined_call_operand.vmem [shape: f32[16,128], index: 3, kind: output, shape index: {}]
  %s4 = sld [smem:[#allocation0]]
  $region22: #{forward.8} parent=0
    _
  %s6 = ssub.s32 1, %s4
  %s7 = scalar_select 0, %s6, %s4
  // Predicated region
  $region2: #{forward.8} parent=0 // pred_check
    _
  $region3: #{forward.8} parent=0 // pred_check_branch
    %9 = sbr.rel (0) target = $region5
  $region4: #{forward.8} parent=0 // pred_region
    _
  $region5: #{forward.8} parent=0 // pred_fallthru
    _
  // Predicated region
  $region6: #{forward.8} parent=0 // pred_check
    _
  $region7: #{forward.8} parent=0 // pred_check_branch
    %11 = sbr.rel (0) target = $region9
  $region8: #{forward.8} parent=0 // pred_region
    _
  $region9: #{forward.8} parent=0 // pred_fallthru
    _
  // Predicated region
  $region10: #{forward.8} parent=0 // pred_check
    _
  $region11: #{forward.8} parent=0 // pred_check_branch
    %13 = sbr.rel (0) target = $region13
  $region12: #{forward.8} parent=0 // pred_region
    _
  $region13: #{forward.8} parent=0 // pred_fallthru
    _
  %v14 = vld [vmem:[%s0] sm:$0xff]
  %v15 = vld [vmem:[%s0 + $0x8] sm:$0xff]
  %v16 = vld [vmem:[%s1] sm:$0xf]
  %v17 = vld [vmem:[%s1 + $0x4] sm:$0x1]
  %v18 = vunpack.c.l.bf16 %v16
  %v19 = vunpack.c.l.bf16 %v17
  %v20 = vld [vmem:[%s2] sm:$0xff]
  %v21 = vld [vmem:[%s2 + $0x8] sm:$0xff]
  %23 = vset.pattern.permute.xlu0 0
  %24 = vperm.xlu0 %23, %v20
  %v25 = vpop.permute.xlu0 %24
  %28 = vset.pattern.permute.xlu0 0
  %29 = vperm.xlu0 %28, %v21
  %v30 = vpop.permute.xlu0 %29
  %vm32 = vcmask 72704
  %v34 = vsel %vm32, %v14, 0
  %v37 = vsel %vm32, %v15, 0
  %vm39 = vcmask 1040384
  %v41 = vsel %vm39, %v19, 0
  %43 = vmatpush.msra.mxu0 0.0
  %44 = vmatpush.msra.mxu0 0.0
  %45 = vmatpush.msra.mxu0 0.0
  %46 = vmatpush.msra.mxu0 0.0
  %47 = vmatpush.msra.mxu0 0.0
  %48 = vmatpush.msra.mxu0 0.0
  %49 = vmatpush.msra.mxu0 0.0
  %50 = vmatpush.msra.mxu0 0.0
  %51 = vmatpush.msra.mxu0 0.0
  %52 = vmatpush.msra.mxu0 0.0
  %53 = vmatpush.msra.mxu0 0.0
  %54 = vmatpush.msra.mxu0 0.0
  %55 = vmatpush.msra.mxu0 0.0
  %56 = vmatpush.msra.mxu0 0.0
  %57 = vmatpush.msra.mxu0 %v41
  %58 = vmatpush.msra.mxu0 %v18
  %59 = vmatmul.f32.gmra.mxu0 %v34
  %v60 = vpop.f32.mrf.mxu0
  %v61 = vadd.f32 %v25, %v60
  %62 = vmatmul.f32.gmra.mxu0 %v37
  %v63 = vpop.f32.mrf.mxu0
  %v64 = vadd.f32 %v30, %v63
  %65 = vdwg.mxu0
  %66 = vst [vmem:[%s3] sm:$0xff] %v61
  %67 = vst [vmem:[%s3 + $0x8] sm:$0xff] %v64
  // Predicated region
  $region14: #{forward.8} parent=0 // pred_check
    _
  $region15: #{forward.8} parent=0 // pred_check_branch
    %69 = sbr.rel (0) target = $region17
  $region16: #{forward.8} parent=0 // pred_region
    _
  $region17: #{forward.8} parent=0 // pred_fallthru
    _
  // Predicated region
  $region18: #{forward.8} parent=0 // pred_check
    _
  $region19: #{forward.8} parent=0 // pred_check_branch
    %71 = sbr.rel (0) target = $region21
  $region20: #{forward.8} parent=0 // pred_region
    _
  $region21: #{forward.8} parent=0 // pred_fallthru
    _

// kernel: forward.10
$region0: #{forward.10}
  #allocation0 [shape = 'u32[]', space=smem, size = 0x4, offset = 0x4, fixed_abs, tag = 'smem constant byte address 0x4 - core index']
  #allocation1 [shape = 'u32[72,128]{1,0:T(1,128)}', space=vmem, size = 0x9000, scoped, tag = 'internal scratch']
  %s0 = inlined_call_operand.vmem [shape: f32[64,128], index: 0, kind: input, shape index: {}]
  %s1 = inlined_call_operand.vmem [shape: bf16[128,128], index: 1, kind: input, shape index: {}]
  %s2 = inlined_call_operand.vmem [shape: f32[64,1], index: 2, kind: input, shape index: {}]
  %s3 = inlined_call_operand.vmem [shape: bf16[64,128], index: 3, kind: output, shape index: {}]
  %s4 = sld [smem:[#allocation0]]
  $region22: #{forward.10} parent=0
    _
  %s6 = ssub.s32 1, %s4
  %s7 = scalar_select 0, %s6, %s4
  // Predicated region
  $region2: #{forward.10} parent=0 // pred_check
    _
  $region3: #{forward.10} parent=0 // pred_check_branch
    %9 = sbr.rel (0) target = $region5
  $region4: #{forward.10} parent=0 // pred_region
    _
  $region5: #{forward.10} parent=0 // pred_fallthru
    _
  // Predicated region
  $region6: #{forward.10} parent=0 // pred_check
    _
  $region7: #{forward.10} parent=0 // pred_check_branch
    %11 = sbr.rel (0) target = $region9
  $region8: #{forward.10} parent=0 // pred_region
    _
  $region9: #{forward.10} parent=0 // pred_fallthru
    _
  // Predicated region
  $region10: #{forward.10} parent=0 // pred_check
    _
  $region11: #{forward.10} parent=0 // pred_check_branch
    %13 = sbr.rel (0) target = $region13
  $region12: #{forward.10} parent=0 // pred_region
    _
  $region13: #{forward.10} parent=0 // pred_fallthru
    _
  %v14 = vld [vmem:[%s0] sm:$0xff]
  %v15 = vld [vmem:[%s0 + $0x8] sm:$0xff]
  %v16 = vld [vmem:[%s0 + $0x10] sm:$0xff]
  %v17 = vld [vmem:[%s0 + $0x18] sm:$0xff]
  %v18 = vld [vmem:[%s0 + $0x20] sm:$0xff]
  %v19 = vld [vmem:[%s0 + $0x28] sm:$0xff]
  %v20 = vld [vmem:[%s0 + $0x30] sm:$0xff]
  %v21 = vld [vmem:[%s0 + $0x38] sm:$0xff]
  %v22 = vld [vmem:[%s1] sm:$0xf]
  %v23 = vld [vmem:[%s1 + $0x4] sm:$0xf]
  %v24 = vld [vmem:[%s1 + $0x8] sm:$0xf]
  %v25 = vld [vmem:[%s1 + $0xc] sm:$0xf]
  %v26 = vld [vmem:[%s1 + $0x10] sm:$0xf]
  %v27 = vld [vmem:[%s1 + $0x14] sm:$0xf]
  %v28 = vld [vmem:[%s1 + $0x18] sm:$0xf]
  %v29 = vld [vmem:[%s1 + $0x1c] sm:$0xf]
  %v30 = vld [vmem:[%s1 + $0x20] sm:$0xf]
  %v31 = vld [vmem:[%s1 + $0x24] sm:$0xf]
  %v32 = vld [vmem:[%s1 + $0x28] sm:$0xf]
  %v33 = vld [vmem:[%s1 + $0x2c] sm:$0xf]
  %v34 = vld [vmem:[%s1 + $0x30] sm:$0xf]
  %v35 = vld [vmem:[%s1 + $0x34] sm:$0xf]
  %v36 = vld [vmem:[%s1 + $0x38] sm:$0xf]
  %v37 = vld [vmem:[%s1 + $0x3c] sm:$0xf]
  %v38 = vunpack.c.l.bf16 %v22
  %v39 = vunpack.c.l.bf16 %v23
  %v40 = vunpack.c.l.bf16 %v24
  %v41 = vunpack.c.l.bf16 %v25
  %v42 = vunpack.c.l.bf16 %v26
  %v43 = vunpack.c.l.bf16 %v27
  %v44 = vunpack.c.l.bf16 %v28
  %v45 = vunpack.c.l.bf16 %v29
  %v46 = vunpack.c.l.bf16 %v30
  %v47 = vunpack.c.l.bf16 %v31
  %v48 = vunpack.c.l.bf16 %v32
  %v49 = vunpack.c.l.bf16 %v33
  %v50 = vunpack.c.l.bf16 %v34
  %v51 = vunpack.c.l.bf16 %v35
  %v52 = vunpack.c.l.bf16 %v36
  %v53 = vunpack.c.l.bf16 %v37
  %v54 = vld [vmem:[%s2] sm:$0xff]
  %v55 = vld [vmem:[%s2 + $0x8] sm:$0xff]
  %v56 = vld [vmem:[%s2 + $0x10] sm:$0xff]
  %v57 = vld [vmem:[%s2 + $0x18] sm:$0xff]
  %v58 = vld [vmem:[%s2 + $0x20] sm:$0xff]
  %v59 = vld [vmem:[%s2 + $0x28] sm:$0xff]
  %v60 = vld [vmem:[%s2 + $0x30] sm:$0xff]
  %v61 = vld [vmem:[%s2 + $0x38] sm:$0xff]
  %63 = vset.pattern.permute.xlu0 0
  %64 = vperm.xlu0 %63, %v54
  %v65 = vpop.permute.xlu0 %64
  %68 = vset.pattern.permute.xlu0 0
  %69 = vperm.xlu0 %68, %v55
  %v70 = vpop.permute.xlu0 %69
  %73 = vset.pattern.permute.xlu0 0
  %74 = vperm.xlu0 %73, %v56
  %v75 = vpop.permute.xlu0 %74
  %78 = vset.pattern.permute.xlu0 0
  %79 = vperm.xlu0 %78, %v57
  %v80 = vpop.permute.xlu0 %79
  %83 = vset.pattern.permute.xlu0 0
  %84 = vperm.xlu0 %83, %v58
  %v85 = vpop.permute.xlu0 %84
  %88 = vset.pattern.permute.xlu0 0
  %89 = vperm.xlu0 %88, %v59
  %v90 = vpop.permute.xlu0 %89
  %93 = vset.pattern.permute.xlu0 0
  %94 = vperm.xlu0 %93, %v60
  %v95 = vpop.permute.xlu0 %94
  %98 = vset.pattern.permute.xlu0 0
  %99 = vperm.xlu0 %98, %v61
  %v100 = vpop.permute.xlu0 %99
  %102 = vmatpush.msra.mxu0 %v53
  %103 = vmatpush.msra.mxu0 %v52
  %104 = vmatpush.msra.mxu0 %v51
  %105 = vmatpush.msra.mxu0 %v50
  %106 = vmatpush.msra.mxu0 %v49
  %107 = vmatpush.msra.mxu0 %v48
  %108 = vmatpush.msra.mxu0 %v47
  %109 = vmatpush.msra.mxu0 %v46
  %110 = vmatpush.msra.mxu0 %v45
  %111 = vmatpush.msra.mxu0 %v44
  %112 = vmatpush.msra.mxu0 %v43
  %113 = vmatpush.msra.mxu0 %v42
  %114 = vmatpush.msra.mxu0 %v41
  %115 = vmatpush.msra.mxu0 %v40
  %116 = vmatpush.msra.mxu0 %v39
  %117 = vmatpush.msra.mxu0 %v38
  %118 = vmatmul.f32.gmra.mxu0 %v14
  %v119 = vpop.f32.mrf.mxu0
  %v120 = vadd.f32 %v65, %v119
  %121 = vmatmul.f32.gmra.mxu0 %v15
  %v122 = vpop.f32.mrf.mxu0
  %v123 = vadd.f32 %v70, %v122
  %124 = vmatmul.f32.gmra.mxu0 %v16
  %v125 = vpop.f32.mrf.mxu0
  %v126 = vadd.f32 %v75, %v125
  %127 = vmatmul.f32.gmra.mxu0 %v17
  %v128 = vpop.f32.mrf.mxu0
  %v129 = vadd.f32 %v80, %v128
  %130 = vmatmul.f32.gmra.mxu0 %v18
  %v131 = vpop.f32.mrf.mxu0
  %v132 = vadd.f32 %v85, %v131
  %133 = vmatmul.f32.gmra.mxu0 %v19
  %v134 = vpop.f32.mrf.mxu0
  %v135 = vadd.f32 %v90, %v134
  %136 = vmatmul.f32.gmra.mxu0 %v20
  %v137 = vpop.f32.mrf.mxu0
  %v138 = vadd.f32 %v95, %v137
  %139 = vmatmul.f32.gmra.mxu0 %v21
  %v140 = vpop.f32.mrf.mxu0
  %v141 = vadd.f32 %v100, %v140
  %142 = vdwg.mxu0
  %v143 = vmax.f32 %v120, 0.0
  %v144 = vmax.f32 %v123, 0.0
  %v145 = vmax.f32 %v126, 0.0
  %v146 = vmax.f32 %v129, 0.0
  %v147 = vmax.f32 %v132, 0.0
  %v148 = vmax.f32 %v135, 0.0
  %v149 = vmax.f32 %v138, 0.0
  %v150 = vmax.f32 %v141, 0.0
  %v151 = vpack.c.bf16 %v143, %v143
  %v152 = vpack.c.bf16 %v144, %v144
  %v153 = vpack.c.bf16 %v145, %v145
  %v154 = vpack.c.bf16 %v146, %v146
  %v155 = vpack.c.bf16 %v147, %v147
  %v156 = vpack.c.bf16 %v148, %v148
  %v157 = vpack.c.bf16 %v149, %v149
  %v158 = vpack.c.bf16 %v150, %v150
  %159 = vst [vmem:[%s3] sm:$0xf] %v151
  %160 = vst [vmem:[%s3 + $0x4] sm:$0xf] %v152
  %161 = vst [vmem:[%s3 + $0x8] sm:$0xf] %v153
  %162 = vst [vmem:[%s3 + $0xc] sm:$0xf] %v154
  %163 = vst [vmem:[%s3 + $0x10] sm:$0xf] %v155
  %164 = vst [vmem:[%s3 + $0x14] sm:$0xf] %v156
  %165 = vst [vmem:[%s3 + $0x18] sm:$0xf] %v157
  %166 = vst [vmem:[%s3 + $0x1c] sm:$0xf] %v158
  // Predicated region
  $region14: #{forward.10} parent=0 // pred_check
    _
  $region15: #{forward.10} parent=0 // pred_check_branch
    %168 = sbr.rel (0) target = $region17
  $region16: #{forward.10} parent=0 // pred_region
    _
  $region17: #{forward.10} parent=0 // pred_fallthru
    _
  // Predicated region
  $region18: #{forward.10} parent=0 // pred_check
    _
  $region19: #{forward.10} parent=0 // pred_check_branch
    %170 = sbr.rel (0) target = $region21
  $region20: #{forward.10} parent=0 // pred_region
    _
  $region21: #{forward.10} parent=0 // pred_fallthru
    _

// kernel: forward.11
$region0: #{forward.11}
  #allocation0 [shape = 'u32[]', space=smem, size = 0x4, offset = 0x4, fixed_abs, tag = 'smem constant byte address 0x4 - core index']
  #allocation1 [shape = 'u32[72,128]{1,0:T(1,128)}', space=vmem, size = 0x9000, scoped, tag = 'internal scratch']
  %s0 = inlined_call_operand.vmem [shape: f32[8,216], index: 0, kind: input, shape index: {}]
  %s1 = inlined_call_operand.vmem [shape: bf16[216,1024], index: 1, kind: input, shape index: {}]
  %s2 = inlined_call_operand.vmem [shape: f32[8,1], index: 2, kind: input, shape index: {}]
  %s3 = inlined_call_operand.vmem [shape: bf16[8,1024], index: 3, kind: input, shape index: {}]
  %s4 = inlined_call_operand.vmem [shape: bf16[8,1024], index: 4, kind: output, shape index: {}]
  %s5 = sld [smem:[#allocation0]]
  $region72: #{forward.11} parent=0
    _
  %s7 = ssub.s32 1, %s5
  %s8 = scalar_select 0, %s7, %s5
  $region1: #{forward.11} parent=0
    #allocation2 [shape = 'u8[442368]{0}', space=vmem, size = 0x6c000, scoped, tag = 'input window, operand 1']
    loop: start=0, step=1, limit=4
    $region2: #{forward.11} parent=1 // loop_pre_header
      _
    $region3: #{forward.11} parent=1 // loop_header
      %s10 = sphi 0, %s14
      %p11 = scmp.ge.s32.totalorder %s10, 4
      %s18 = sphi 0, %s18
      %s20 = sphi 0, %s18
      %s21 = sphi 0, %s20
      %s35 = sphi 0, %s21
      %s41 = sphi 0, %s43
      %s44 = sphi 0, %s41
      %s45 = sphi 0, %s44
      %s61 = sphi 0, %s45
      %s65 = sphi 0, %s65
      %s67 = sphi 0, %s65
      %s68 = sphi 0, %s67
      %s82 = sphi 0, %s68
      %s88 = sphi 0, %s90
      %s91 = sphi 0, %s88
      %s92 = sphi 0, %s91
      %s108 = sphi 0, %s92
      %s114 = sphi 0, %s116
      %s117 = sphi 0, %s114
      %s118 = sphi 0, %s117
      %s134 = sphi 0, %s118
    $region4: #{forward.11} parent=1 // loop_header_branch
      %13 = sbr.rel (%p11) target = $region8
    $region5: #{forward.11} parent=1 // loop_body
      %s15 = ssub.s32 %s10, 1
      %s16 = ssub.s32 %s10, 2
      %s17 = sadd.s32 %s10, 1
      %s19 = sadd.s32 %s18, 1
      %p22 = scmp.eq.s32.totalorder %s10, 1
      %p23 = scmp.ne.s32.totalorder %s18, %s20
      %p24 = scmp.eq.s32.totalorder %s10, 0
      %p25 = por %p23, %p24
      %p26 = scmp.ne.s32.totalorder %s18, %s20
      %p27 = scmp.eq.s32.totalorder %s15, 1
      %p28 = por %p26, %p27
      %p29 = scmp.ne.s32.totalorder %s20, %s21
      %p30 = scmp.eq.s32.totalorder %s15, 0
      %p31 = por %p29, %p30
      %p32 = scmp.ne.s32.totalorder %s20, %s21
      %p33 = scmp.eq.s32.totalorder %s16, 1
      %p34 = por %p32, %p33
      %p36 = scmp.ne.s32.totalorder %s21, %s35
      %p37 = scmp.eq.s32.totalorder %s16, 0
      %p38 = por %p36, %p37
      %s39 = ssub.s32 %s10, %s17
      %p40 = scmp.eq.s32.totalorder %s39, 0
      %s42 = sadd.s32 %s41, 1
      %s43 = scalar_select %p40, %s41, %s42
      %p46 = pneg %p40
      %p47 = scmp.eq.s32.totalorder %s10, 1
      %p48 = por %p46, %p47
      %p49 = scmp.ne.s32.totalorder %s41, %s44
      %p50 = scmp.eq.s32.totalorder %s10, 0
      %p51 = por %p49, %p50
      %p52 = scmp.ne.s32.totalorder %s41, %s44
      %p53 = scmp.eq.s32.totalorder %s15, 1
      %p54 = por %p52, %p53
      %p55 = scmp.ne.s32.totalorder %s44, %s45
      %p56 = scmp.eq.s32.totalorder %s15, 0
      %p57 = por %p55, %p56
      %p58 = scmp.ne.s32.totalorder %s44, %s45
      %p59 = scmp.eq.s32.totalorder %s16, 1
      %p60 = por %p58, %p59
      %p62 = scmp.ne.s32.totalorder %s45, %s61
      %p63 = scmp.eq.s32.totalorder %s16, 0
      %p64 = por %p62, %p63
      %s66 = sadd.s32 %s65, 1
      %p69 = scmp.eq.s32.totalorder %s10, 1
      %p70 = scmp.ne.s32.totalorder %s65, %s67
      %p71 = scmp.eq.s32.totalorder %s10, 0
      %p72 = por %p70, %p71
      %p73 = scmp.ne.s32.totalorder %s65, %s67
      %p74 = scmp.eq.s32.totalorder %s15, 1
      %p75 = por %p73, %p74
      %p76 = scmp.ne.s32.totalorder %s67, %s68
      %p77 = scmp.eq.s32.totalorder %s15, 0
      %p78 = por %p76, %p77
      %p79 = scmp.ne.s32.totalorder %s67, %s68
      %p80 = scmp.eq.s32.totalorder %s16, 1
      %p81 = por %p79, %p80
      %p83 = scmp.ne.s32.totalorder %s68, %s82
      %p84 = scmp.eq.s32.totalorder %s16, 0
      %p85 = por %p83, %p84
      %s86 = ssub.s32 %s10, %s17
      %p87 = scmp.eq.s32.totalorder %s86, 0
      %s89 = sadd.s32 %s88, 1
      %s90 = scalar_select %p87, %s88, %s89
      %p93 = pneg %p87
      %p94 = scmp.eq.s32.totalorder %s10, 1
      %p95 = por %p93, %p94
      %p96 = scmp.ne.s32.totalorder %s88, %s91
      %p97 = scmp.eq.s32.totalorder %s10, 0
      %p98 = por %p96, %p97
      %p99 = scmp.ne.s32.totalorder %s88, %s91
      %p100 = scmp.eq.s32.totalorder %s15, 1
      %p101 = por %p99, %p100
      %p102 = scmp.ne.s32.totalorder %s91, %s92
      %p103 = scmp.eq.s32.totalorder %s15, 0
      %p104 = por %p102, %p103
      %p105 = scmp.ne.s32.totalorder %s91, %s92
      %p106 = scmp.eq.s32.totalorder %s16, 1
      %p107 = por %p105, %p106
      %p109 = scmp.ne.s32.totalorder %s92, %s108
      %p110 = scmp.eq.s32.totalorder %s16, 0
      %p111 = por %p109, %p110
      %s112 = ssub.s32 %s10, %s17
      %p113 = scmp.eq.s32.totalorder %s112, 0
      %s115 = sadd.s32 %s114, 1
      %s116 = scalar_select %p113, %s114, %s115
      %p119 = pneg %p113
      %p120 = scmp.eq.s32.totalorder %s10, 1
      %p121 = por %p119, %p120
      %p122 = scmp.ne.s32.totalorder %s114, %s117
      %p123 = scmp.eq.s32.totalorder %s10, 0
      %p124 = por %p122, %p123
      %p125 = scmp.ne.s32.totalorder %s114, %s117
      %p126 = scmp.eq.s32.totalorder %s15, 1
      %p127 = por %p125, %p126
      %p128 = scmp.ne.s32.totalorder %s117, %s118
      %p129 = scmp.eq.s32.totalorder %s15, 0
      %p130 = por %p128, %p129
      %p131 = scmp.ne.s32.totalorder %s117, %s118
      %p132 = scmp.eq.s32.totalorder %s16, 1
      %p133 = por %p131, %p132
      %p135 = scmp.ne.s32.totalorder %s118, %s134
      %p136 = scmp.eq.s32.totalorder %s16, 0
      %p137 = por %p135, %p136
      %p138 = scmp.le.s32.totalorder 1, %s10
      %p139 = scmp.lt.s32.totalorder %s10, 3
      %p140 = pnand %p138, %p139
      %p141 = pneg %p140
      // Predicated region
      $region9: #{forward.11} parent=5 // pred_check
        _
      $region10: #{forward.11} parent=5 // pred_check_branch
        %143 = sbr.rel (%p140) target = $region12
      $region11: #{forward.11} parent=5 // pred_region
        %s144 = ssub.s32 %s10, 1
        // Predicated region
        $region13: #{forward.11} parent=11 // pred_check
          %p145 = pneg %p31
        $region14: #{forward.11} parent=11 // pred_check_branch
          %147 = sbr.rel (%p145) target = $region16
        $region15: #{forward.11} parent=11 // pred_region
          _
        $region16: #{forward.11} parent=11 // pred_fallthru
          _
        // Predicated region
        $region17: #{forward.11} parent=11 // pred_check
          %p148 = pneg %p78
        $region18: #{forward.11} parent=11 // pred_check_branch
          %150 = sbr.rel (%p148) target = $region20
        $region19: #{forward.11} parent=11 // pred_region
          _
        $region20: #{forward.11} parent=11 // pred_fallthru
          _
      $region12: #{forward.11} parent=5 // pred_fallthru
        _
      %p151 = scmp.lt.s32.totalorder %s10, 2
      // Predicated region
      $region21: #{forward.11} parent=5 // pred_check
        %p152 = pneg %p151
      $region22: #{forward.11} parent=5 // pred_check_branch
        %154 = sbr.rel (%p152) target = $region24
      $region23: #{forward.11} parent=5 // pred_region
        // Predicated region
        $region25: #{forward.11} parent=23 // pred_check
          %p155 = pneg %p51
        $region26: #{forward.11} parent=23 // pred_check_branch
          %157 = sbr.rel (%p155) target = $region28
        $region27: #{forward.11} parent=23 // pred_region
          %s158 = sand.u32 %s41, 1
          %s159 = sand.u32 %s41, 1
          %s160 = smul.addr %s159, 432
          %s161 = scalar_lea.vmem [#allocation2], %s160
          %s162 = smul.u32 4, %s10
          %s163 = smul.addr %s162, 4
          %s164 = scalar_lea.vmem %s1, %s163
          // Predicated region
          $region29: #{forward.11} parent=27 // pred_check
            _
          $region30: #{forward.11} parent=27 // pred_check_branch
            %166 = sbr.rel (0) target = $region32
          $region31: #{forward.11} parent=27 // pred_region
            // Predicated region
            $region33: #{forward.11} parent=31 // pred_check
              _
            $region34: #{forward.11} parent=31 // pred_check_branch
              %168 = sbr.rel (0) target = $region36
            $region35: #{forward.11} parent=31 // pred_region
              loop: start=0, step=1, limit=1
              $region37: #{forward.11} parent=35 // loop_pre_header
                _
              $region38: #{forward.11} parent=35 // loop_header
                %s170 = sphi 0, %s174
                %p171 = scmp.ge.s32.totalorder %s170, 1
                %s175 = sphi %s164, %s164
                %s176 = sphi %s161, %s161
              $region39: #{forward.11} parent=35 // loop_header_branch
                %173 = sbr.rel (%p171) target = $region43
              $region40: #{forward.11} parent=35 // loop_body
                %v177 = vld [vmem:[%s175] sm:$0xff]
                %178 = vst [vmem:[%s176] sm:$0xff] %v177
                %v179 = vld [vmem:[%s175 + $0x8] sm:$0xff]
                %180 = vst [vmem:[%s176 + $0x8] sm:$0xff] %v179
                %v181 = vld [vmem:[%s175 + $0x20] sm:$0xff]
                %182 = vst [vmem:[%s176 + $0x10] sm:$0xff] %v181
                %v183 = vld [vmem:[%s175 + $0x28] sm:$0xff]
                %184 = vst [vmem:[%s176 + $0x18] sm:$0xff] %v183
                %v185 = vld [vmem:[%s175 + $0x40] sm:$0xff]
                %186 = vst [vmem:[%s176 + $0x20] sm:$0xff] %v185
                %v187 = vld [vmem:[%s175 + $0x48] sm:$0xff]
                %188 = vst [vmem:[%s176 + $0x28] sm:$0xff] %v187
                %v189 = vld [vmem:[%s175 + $0x60] sm:$0xff]
                %190 = vst [vmem:[%s176 + $0x30] sm:$0xff] %v189
                %v191 = vld [vmem:[%s175 + $0x68] sm:$0xff]
                %192 = vst [vmem:[%s176 + $0x38] sm:$0xff] %v191
                %v193 = vld [vmem:[%s175 + $0x80] sm:$0xff]
                %194 = vst [vmem:[%s176 + $0x40] sm:$0xff] %v193
                %v195 = vld [vmem:[%s175 + $0x88] sm:$0xff]
                %196 = vst [vmem:[%s176 + $0x48] sm:$0xff] %v195
                %v197 = vld [vmem:[%s175 + $0xa0] sm:$0xff]
                %198 = vst [vmem:[%s176 + $0x50] sm:$0xff] %v197
                %v199 = vld [vmem:[%s175 + $0xa8] sm:$0xff]
                %200 = vst [vmem:[%s176 + $0x58] sm:$0xff] %v199
                %v201 = vld [vmem:[%s175 + $0xc0] sm:$0xff]
                %202 = vst [vmem:[%s176 + $0x60] sm:$0xff] %v201
                %v203 = vld [vmem:[%s175 + $0xc8] sm:$0xff]
                %204 = vst [vmem:[%s176 + $0x68] sm:$0xff] %v203
                %v205 = vld [vmem:[%s175 + $0xe0] sm:$0xff]
                %206 = vst [vmem:[%s176 + $0x70] sm:$0xff] %v205
                %v207 = vld [vmem:[%s175 + $0xe8] sm:$0xff]
                %208 = vst [vmem:[%s176 + $0x78] sm:$0xff] %v207
                %v209 = vld [vmem:[%s175 + $0x100] sm:$0xff]
                %210 = vst [vmem:[%s176 + $0x80] sm:$0xff] %v209
                %v211 = vld [vmem:[%s175 + $0x108] sm:$0xff]
                %212 = vst [vmem:[%s176 + $0x88] sm:$0xff] %v211
                %v213 = vld [vmem:[%s175 + $0x120] sm:$0xff]
                %214 = vst [vmem:[%s176 + $0x90] sm:$0xff] %v213
                %v215 = vld [vmem:[%s175 + $0x128] sm:$0xff]
                %216 = vst [vmem:[%s176 + $0x98] sm:$0xff] %v215
                %v217 = vld [vmem:[%s175 + $0x140] sm:$0xff]
                %218 = vst [vmem:[%s176 + $0xa0] sm:$0xff] %v217
                %v219 = vld [vmem:[%s175 + $0x148] sm:$0xff]
                %220 = vst [vmem:[%s176 + $0xa8] sm:$0xff] %v219
                %v221 = vld [vmem:[%s175 + $0x160] sm:$0xff]
                %222 = vst [vmem:[%s176 + $0xb0] sm:$0xff] %v221
                %v223 = vld [vmem:[%s175 + $0x168] sm:$0xff]
                %224 = vst [vmem:[%s176 + $0xb8] sm:$0xff] %v223
                %v225 = vld [vmem:[%s175 + $0x180] sm:$0xff]
                %226 = vst [vmem:[%s176 + $0xc0] sm:$0xff] %v225
                %v227 = vld [vmem:[%s175 + $0x188] sm:$0xff]
                %228 = vst [vmem:[%s176 + $0xc8] sm:$0xff] %v227
                %v229 = vld [vmem:[%s175 + $0x1a0] sm:$0xff]
                %230 = vst [vmem:[%s176 + $0xd0] sm:$0xff] %v229
                %v231 = vld [vmem:[%s175 + $0x1a8] sm:$0xff]
                %232 = vst [vmem:[%s176 + $0xd8] sm:$0xff] %v231
                %v233 = vld [vmem:[%s175 + $0x1c0] sm:$0xff]
                %234 = vst [vmem:[%s176 + $0xe0] sm:$0xff] %v233
                %v235 = vld [vmem:[%s175 + $0x1c8] sm:$0xff]
                %236 = vst [vmem:[%s176 + $0xe8] sm:$0xff] %v235
                %v237 = vld [vmem:[%s175 + $0x1e0] sm:$0xff]
                %238 = vst [vmem:[%s176 + $0xf0] sm:$0xff] %v237
                %v239 = vld [vmem:[%s175 + $0x1e8] sm:$0xff]
                %240 = vst [vmem:[%s176 + $0xf8] sm:$0xff] %v239
                %v241 = vld [vmem:[%s175 + $0x200] sm:$0xff]
                %242 = vst [vmem:[%s176 + $0x100] sm:$0xff] %v241
                %v243 = vld [vmem:[%s175 + $0x208] sm:$0xff]
                %244 = vst [vmem:[%s176 + $0x108] sm:$0xff] %v243
                %v245 = vld [vmem:[%s175 + $0x220] sm:$0xff]
                %246 = vst [vmem:[%s176 + $0x110] sm:$0xff] %v245
                %v247 = vld [vmem:[%s175 + $0x228] sm:$0xff]
                %248 = vst [vmem:[%s176 + $0x118] sm:$0xff] %v247
                %v249 = vld [vmem:[%s175 + $0x240] sm:$0xff]
                %250 = vst [vmem:[%s176 + $0x120] sm:$0xff] %v249
                %v251 = vld [vmem:[%s175 + $0x248] sm:$0xff]
                %252 = vst [vmem:[%s176 + $0x128] sm:$0xff] %v251
                %v253 = vld [vmem:[%s175 + $0x260] sm:$0xff]
                %254 = vst [vmem:[%s176 + $0x130] sm:$0xff] %v253
                %v255 = vld [vmem:[%s175 + $0x268] sm:$0xff]
                %256 = vst [vmem:[%s176 + $0x138] sm:$0xff] %v255
                %v257 = vld [vmem:[%s175 + $0x280] sm:$0xff]
                %258 = vst [vmem:[%s176 + $0x140] sm:$0xff] %v257
                %v259 = vld [vmem:[%s175 + $0x288] sm:$0xff]
                %260 = vst [vmem:[%s176 + $0x148] sm:$0xff] %v259
                %v261 = vld [vmem:[%s175 + $0x2a0] sm:$0xff]
                %262 = vst [vmem:[%s176 + $0x150] sm:$0xff] %v261
                %v263 = vld [vmem:[%s175 + $0x2a8] sm:$0xff]
                %264 = vst [vmem:[%s176 + $0x158] sm:$0xff] %v263
                %v265 = vld [vmem:[%s175 + $0x2c0] sm:$0xff]
                %266 = vst [vmem:[%s176 + $0x160] sm:$0xff] %v265
                %v267 = vld [vmem:[%s175 + $0x2c8] sm:$0xff]
                %268 = vst [vmem:[%s176 + $0x168] sm:$0xff] %v267
                %v269 = vld [vmem:[%s175 + $0x2e0] sm:$0xff]
                %270 = vst [vmem:[%s176 + $0x170] sm:$0xff] %v269
                %v271 = vld [vmem:[%s175 + $0x2e8] sm:$0xff]
                %272 = vst [vmem:[%s176 + $0x178] sm:$0xff] %v271
                %v273 = vld [vmem:[%s175 + $0x300] sm:$0xff]
                %274 = vst [vmem:[%s176 + $0x180] sm:$0xff] %v273
                %v275 = vld [vmem:[%s175 + $0x308] sm:$0xff]
                %276 = vst [vmem:[%s176 + $0x188] sm:$0xff] %v275
                %v277 = vld [vmem:[%s175 + $0x320] sm:$0xff]
                %278 = vst [vmem:[%s176 + $0x190] sm:$0xff] %v277
                %v279 = vld [vmem:[%s175 + $0x328] sm:$0xff]
                %280 = vst [vmem:[%s176 + $0x198] sm:$0xff] %v279
                %v281 = vld [vmem:[%s175 + $0x340] sm:$0xff]
                %282 = vst [vmem:[%s176 + $0x1a0] sm:$0xff] %v281
                %v283 = vld [vmem:[%s175 + $0x348] sm:$0xff]
                %284 = vst [vmem:[%s176 + $0x1a8] sm:$0xff] %v283
              $region41: #{forward.11} parent=35 // loop_footer
                %s174 = sadd.s32 1, %s170
              $region42: #{forward.11} parent=35 // loop_footer_branch
                %169 = sbr.rel target = $region38
              $region43: #{forward.11} parent=35 // loop_exit
                _
            $region36: #{forward.11} parent=31 // pred_fallthru
              _
            // Predicated region
            $region44: #{forward.11} parent=31 // pred_check
              _
            $region45: #{forward.11} parent=31 // pred_check_branch
              %286 = sbr.rel target = $region47
            $region46: #{forward.11} parent=31 // pred_region
              _
            $region47: #{forward.11} parent=31 // pred_fallthru
              _
          $region32: #{forward.11} parent=27 // pred_fallthru
            _
          %287 = vnop
        $region28: #{forward.11} parent=23 // pred_fallthru
          _
        // Predicated region
        $region48: #{forward.11} parent=23 // pred_check
          %p288 = pneg %p98
        $region49: #{forward.11} parent=23 // pred_check_branch
          %290 = sbr.rel (%p288) target = $region51
        $region50: #{forward.11} parent=23 // pred_region
          %s291 = smul.u32 4, %s10
          %p292 = scmp.lt.s32.totalorder %s291, 7
          %s293 = scalar_select %p292, %s291, 7
          %s294 = smul.addr %s293, 4
          %s295 = scalar_lea.vmem %s3, %s294
          %s296 = smul.u32 4, %s10
        $region51: #{forward.11} parent=23 // pred_fallthru
          _
      $region24: #{forward.11} parent=5 // pred_fallthru
        _
      %p297 = scmp.le.s32.totalorder 1, %s10
      %p298 = scmp.lt.s32.totalorder %s10, 3
      %p299 = pnand %p297, %p298
      %p300 = pneg %p299
      // Predicated region
      $region52: #{forward.11} parent=5 // pred_check
        _
      $region53: #{forward.11} parent=5 // pred_check_branch
        %302 = sbr.rel (%p299) target = $region55
      $region54: #{forward.11} parent=5 // pred_region
        %s303 = ssub.s32 %s10, 1
        %s304 = sand.u32 %s44, 1
        %s305 = sand.u32 %s44, 1
        %s306 = smul.addr %s305, 432
        %s307 = scalar_lea.vmem [#allocation2], %s306
        // Predicated region
        $region56: #{forward.11} parent=54 // pred_check
          %p308 = pneg %p57
        $region57: #{forward.11} parent=54 // pred_check_branch
          %310 = sbr.rel (%p308) target = $region59
        $region58: #{forward.11} parent=54 // pred_region
          _
        $region59: #{forward.11} parent=54 // pred_fallthru
          _
        %p311 = pneg %p31
        %p312 = pneg %p28
        %s313 = sand.u32 %s44, 1
        %s314 = sand.u32 %s44, 1
        %s315 = smul.addr %s314, 432
        %s316 = scalar_lea.vmem [#allocation2], %s315
        %p317 = pneg %p57
        %p318 = pneg %p54
        %p319 = pneg %p78
        %p320 = pneg %p75
        %s321 = smul.u32 4, %s15
        %p322 = scmp.lt.s32.totalorder %s321, 7
        %s323 = scalar_select %p322, %s321, 7
        %s324 = smul.addr %s323, 4
        %s325 = scalar_lea.vmem %s3, %s324
        %p326 = pneg %p104
        %p327 = pneg %p101
        %p328 = pneg %p130
        %p329 = pneg %p127
        %s330 = smul.u32 4, %s15
        %p331 = scmp.lt.s32.totalorder %s330, 7
        %s332 = scalar_select %p331, %s330, 7
        %s333 = smul.addr %s332, 4
        %s334 = scalar_lea.vmem %s4, %s333
        %s335 = smul.u32 4, %s15
        %s336 = smul.u32 4, %s15
        %p337 = scmp.lt.s32.totalorder %s336, 7
        %s338 = scalar_select %p337, %s336, 7
        %s339 = smul.addr %s338, 4
        %s340 = scalar_lea.vmem %s3, %s339
        %s341 = smul.u32 4, %s15
        %s342 = smul.u32 4, %s15
        %p343 = scmp.lt.s32.totalorder %s342, 7
        %s344 = scalar_select %p343, %s342, 7
        %s345 = smul.addr %s344, 4
        %s346 = scalar_lea.vmem %s4, %s345
        %s347 = smul.u32 4, %s15
        %v348 = vld [vmem:[%s0] sm:$0xff]
        %v349 = vld [vmem:[%s0 + $0x8] sm:$0xff]
        %v350 = vld [vmem:[%s307] sm:$0xff]
        %v351 = vld [vmem:[%s307 + $0x8] sm:$0xff]
        %v352 = vld [vmem:[%s307 + $0x10] sm:$0xff]
        %v353 = vld [vmem:[%s307 + $0x18] sm:$0xff]
        %v354 = vld [vmem:[%s307 + $0x20] sm:$0xff]
        %v355 = vld [vmem:[%s307 + $0x28] sm:$0xff]
        %v356 = vld [vmem:[%s307 + $0x30] sm:$0xff]
        %v357 = vld [vmem:[%s307 + $0x38] sm:$0xff]
        %v358 = vld [vmem:[%s307 + $0x40] sm:$0xff]
        %v359 = vld [vmem:[%s307 + $0x48] sm:$0xff]
        %v360 = vld [vmem:[%s307 + $0x50] sm:$0xff]
        %v361 = vld [vmem:[%s307 + $0x58] sm:$0xff]
        %v362 = vld [vmem:[%s307 + $0x60] sm:$0xff]
        %v363 = vld [vmem:[%s307 + $0x68] sm:$0xff]
        %v364 = vld [vmem:[%s307 + $0x70] sm:$0xff]
        %v365 = vld [vmem:[%s307 + $0x78] sm:$0xff]
        %v366 = vld [vmem:[%s307 + $0x80] sm:$0xff]
        %v367 = vld [vmem:[%s307 + $0x88] sm:$0xff]
        %v368 = vld [vmem:[%s307 + $0x90] sm:$0xff]
        %v369 = vld [vmem:[%s307 + $0x98] sm:$0xff]
        %v370 = vld [vmem:[%s307 + $0xa0] sm:$0xff]
        %v371 = vld [vmem:[%s307 + $0xa8] sm:$0xff]
        %v372 = vld [vmem:[%s307 + $0xb0] sm:$0xff]
        %v373 = vld [vmem:[%s307 + $0xb8] sm:$0xff]
        %v374 = vld [vmem:[%s307 + $0xc0] sm:$0xff]
        %v375 = vld [vmem:[%s307 + $0xc8] sm:$0xff]
        %v376 = vld [vmem:[%s307 + $0xd0] sm:$0xff]
        %v377 = vld [vmem:[%s307 + $0xd8] sm:$0xff]
        %v378 = vld [vmem:[%s307 + $0xe0] sm:$0xff]
        %v379 = vld [vmem:[%s307 + $0xe8] sm:$0xff]
        %v380 = vld [vmem:[%s307 + $0xf0] sm:$0xff]
        %v381 = vld [vmem:[%s307 + $0xf8] sm:$0xff]
        %v382 = vld [vmem:[%s307 + $0x100] sm:$0xff]
        %v383 = vld [vmem:[%s307 + $0x108] sm:$0xff]
        %v384 = vld [vmem:[%s307 + $0x110] sm:$0xff]
        %v385 = vld [vmem:[%s307 + $0x118] sm:$0xff]
        %v386 = vld [vmem:[%s307 + $0x120] sm:$0xff]
        %v387 = vld [vmem:[%s307 + $0x128] sm:$0xff]
        %v388 = vld [vmem:[%s307 + $0x130] sm:$0xff]
        %v389 = vld [vmem:[%s307 + $0x138] sm:$0xff]
        %v390 = vld [vmem:[%s307 + $0x140] sm:$0xff]
        %v391 = vld [vmem:[%s307 + $0x148] sm:$0xff]
        %v392 = vld [vmem:[%s307 + $0x150] sm:$0xff]
        %v393 = vld [vmem:[%s307 + $0x158] sm:$0xff]
        %v394 = vld [vmem:[%s307 + $0x160] sm:$0xff]
        %v395 = vld [vmem:[%s307 + $0x168] sm:$0xff]
        %v396 = vld [vmem:[%s307 + $0x170] sm:$0xff]
        %v397 = vld [vmem:[%s307 + $0x178] sm:$0xff]
        %v398 = vld [vmem:[%s307 + $0x180] sm:$0xff]
        %v399 = vld [vmem:[%s307 + $0x188] sm:$0xff]
        %v400 = vld [vmem:[%s307 + $0x190] sm:$0xff]
        %v401 = vld [vmem:[%s307 + $0x198] sm:$0xff]
        %v402 = vld [vmem:[%s307 + $0x1a0] sm:$0xff]
        %v403 = vld [vmem:[%s307 + $0x1a8] sm:$0xff]
        %v404 = vunpack.c.l.bf16 %v350
        %v405 = vunpack.c.h.bf16 %v350
        %v406 = vunpack.c.l.bf16 %v351
        %v407 = vunpack.c.h.bf16 %v351
        %v408 = vunpack.c.l.bf16 %v352
        %v409 = vunpack.c.h.bf16 %v352
        %v410 = vunpack.c.l.bf16 %v353
        %v411 = vunpack.c.h.bf16 %v353
        %v412 = vunpack.c.l.bf16 %v354
        %v413 = vunpack.c.h.bf16 %v354
        %v414 = vunpack.c.l.bf16 %v355
        %v415 = vunpack.c.h.bf16 %v355
        %v416 = vunpack.c.l.bf16 %v356
        %v417 = vunpack.c.h.bf16 %v356
        %v418 = vunpack.c.l.bf16 %v357
        %v419 = vunpack.c.h.bf16 %v357
        %v420 = vunpack.c.l.bf16 %v358
        %v421 = vunpack.c.h.bf16 %v358
        %v422 = vunpack.c.l.bf16 %v359
        %v423 = vunpack.c.h.bf16 %v359
        %v424 = vunpack.c.l.bf16 %v360
        %v425 = vunpack.c.h.bf16 %v360
        %v426 = vunpack.c.l.bf16 %v361
        %v427 = vunpack.c.h.bf16 %v361
        %v428 = vunpack.c.l.bf16 %v362
        %v429 = vunpack.c.h.bf16 %v362
        %v430 = vunpack.c.l.bf16 %v363
        %v431 = vunpack.c.h.bf16 %v363
        %v432 = vunpack.c.l.bf16 %v364
        %v433 = vunpack.c.h.bf16 %v364
        %v434 = vunpack.c.l.bf16 %v365
        %v435 = vunpack.c.h.bf16 %v365
        %v436 = vunpack.c.l.bf16 %v366
        %v437 = vunpack.c.h.bf16 %v366
        %v438 = vunpack.c.l.bf16 %v367
        %v439 = vunpack.c.h.bf16 %v367
        %v440 = vunpack.c.l.bf16 %v368
        %v441 = vunpack.c.h.bf16 %v368
        %v442 = vunpack.c.l.bf16 %v369
        %v443 = vunpack.c.h.bf16 %v369
        %v444 = vunpack.c.l.bf16 %v370
        %v445 = vunpack.c.h.bf16 %v370
        %v446 = vunpack.c.l.bf16 %v371
        %v447 = vunpack.c.h.bf16 %v371
        %v448 = vunpack.c.l.bf16 %v372
        %v449 = vunpack.c.h.bf16 %v372
        %v450 = vunpack.c.l.bf16 %v373
        %v451 = vunpack.c.h.bf16 %v373
        %v452 = vunpack.c.l.bf16 %v374
        %v453 = vunpack.c.h.bf16 %v374
        %v454 = vunpack.c.l.bf16 %v375
        %v455 = vunpack.c.h.bf16 %v375
        %v456 = vunpack.c.l.bf16 %v376
        %v457 = vunpack.c.h.bf16 %v376
        %v458 = vunpack.c.l.bf16 %v377
        %v459 = vunpack.c.h.bf16 %v377
        %v460 = vunpack.c.l.bf16 %v378
        %v461 = vunpack.c.h.bf16 %v378
        %v462 = vunpack.c.l.bf16 %v379
        %v463 = vunpack.c.h.bf16 %v379
        %v464 = vunpack.c.l.bf16 %v380
        %v465 = vunpack.c.h.bf16 %v380
        %v466 = vunpack.c.l.bf16 %v381
        %v467 = vunpack.c.h.bf16 %v381
        %v468 = vunpack.c.l.bf16 %v382
        %v469 = vunpack.c.h.bf16 %v382
        %v470 = vunpack.c.l.bf16 %v383
        %v471 = vunpack.c.h.bf16 %v383
        %v472 = vunpack.c.l.bf16 %v384
        %v473 = vunpack.c.h.bf16 %v384
        %v474 = vunpack.c.l.bf16 %v385
        %v475 = vunpack.c.h.bf16 %v385
        %v476 = vunpack.c.l.bf16 %v386
        %v477 = vunpack.c.h.bf16 %v386
        %v478 = vunpack.c.l.bf16 %v387
        %v479 = vunpack.c.h.bf16 %v387
        %v480 = vunpack.c.l.bf16 %v388
        %v481 = vunpack.c.h.bf16 %v388
        %v482 = vunpack.c.l.bf16 %v389
        %v483 = vunpack.c.h.bf16 %v389
        %v484 = vunpack.c.l.bf16 %v390
        %v485 = vunpack.c.h.bf16 %v390
        %v486 = vunpack.c.l.bf16 %v391
        %v487 = vunpack.c.h.bf16 %v391
        %v488 = vunpack.c.l.bf16 %v392
        %v489 = vunpack.c.h.bf16 %v392
        %v490 = vunpack.c.l.bf16 %v393
        %v491 = vunpack.c.h.bf16 %v393
        %v492 = vunpack.c.l.bf16 %v394
        %v493 = vunpack.c.h.bf16 %v394
        %v494 = vunpack.c.l.bf16 %v395
        %v495 = vunpack.c.h.bf16 %v395
        %v496 = vunpack.c.l.bf16 %v396
        %v497 = vunpack.c.h.bf16 %v396
        %v498 = vunpack.c.l.bf16 %v397
        %v499 = vunpack.c.h.bf16 %v397
        %v500 = vunpack.c.l.bf16 %v398
        %v501 = vunpack.c.h.bf16 %v398
        %v502 = vunpack.c.l.bf16 %v399
        %v503 = vunpack.c.h.bf16 %v399
        %v504 = vunpack.c.l.bf16 %v400
        %v505 = vunpack.c.h.bf16 %v400
        %v506 = vunpack.c.l.bf16 %v401
        %v507 = vunpack.c.h.bf16 %v401
        %v508 = vunpack.c.l.bf16 %v402
        %v509 = vunpack.c.h.bf16 %v402
        %v510 = vunpack.c.l.bf16 %v403
        %v511 = vunpack.c.h.bf16 %v403
        %v512 = vld [vmem:[%s2] sm:$0xff]
        %514 = vset.pattern.permute.xlu0 0
        %515 = vperm.xlu0 %514, %v512
        %v516 = vpop.permute.xlu0 %515
        %vm518 = vcmask 719872
        %v520 = vsel %vm518, %v349, 0
        %522 = vmatpush.msra.mxu0 %v464
        %523 = vmatpush.msra.mxu0 %v460
        %524 = vmatpush.msra.mxu0 %v456
        %525 = vmatpush.msra.mxu0 %v452
        %526 = vmatpush.msra.mxu0 %v448
        %527 = vmatpush.msra.mxu0 %v444
        %528 = vmatpush.msra.mxu0 %v440
        %529 = vmatpush.msra.mxu0 %v436
        %530 = vmatpush.msra.mxu0 %v432
        %531 = vmatpush.msra.mxu0 %v428
        %532 = vmatpush.msra.mxu0 %v424
        %533 = vmatpush.msra.mxu0 %v420
        %534 = vmatpush.msra.mxu0 %v416
        %535 = vmatpush.msra.mxu0 %v412
        %536 = vmatpush.msra.mxu0 %v408
        %537 = vmatpush.msra.mxu0 %v404
        %538 = vmatmul.f32.gmra.mxu0 %v348
        %v539 = vpop.f32.mrf.mxu0
        %v540 = vadd.f32 %v516, %v539
        %541 = vdwg.mxu0
        %542 = vmatpush.msra.mxu0 0.0
        %543 = vmatpush.msra.mxu0 0.0
        %544 = vmatpush.msra.mxu0 0.0
        %545 = vmatpush.msra.mxu0 0.0
        %546 = vmatpush.msra.mxu0 0.0
        %547 = vmatpush.msra.mxu0 %v508
        %548 = vmatpush.msra.mxu0 %v504
        %549 = vmatpush.msra.mxu0 %v500
        %550 = vmatpush.msra.mxu0 %v496
        %551 = vmatpush.msra.mxu0 %v492
        %552 = vmatpush.msra.mxu0 %v488
        %553 = vmatpush.msra.mxu0 %v484
        %554 = vmatpush.msra.mxu0 %v480
        %555 = vmatpush.msra.mxu0 %v476
        %556 = vmatpush.msra.mxu0 %v472
        %557 = vmatpush.msra.mxu0 %v468
        %558 = vmatmul.f32.gmra.mxu0 %v520
        %v559 = vpop.f32.mrf.mxu0
        %v560 = vadd.f32 %v540, %v559
        %561 = vdwg.mxu0
        %562 = vmatpush.msra.mxu0 %v465
        %563 = vmatpush.msra.mxu0 %v461
        %564 = vmatpush.msra.mxu0 %v457
        %565 = vmatpush.msra.mxu0 %v453
        %566 = vmatpush.msra.mxu0 %v449
        %567 = vmatpush.msra.mxu0 %v445
        %568 = vmatpush.msra.mxu0 %v441
        %569 = vmatpush.msra.mxu0 %v437
        %570 = vmatpush.msra.mxu0 %v433
        %571 = vmatpush.msra.mxu0 %v429
        %572 = vmatpush.msra.mxu0 %v425
        %573 = vmatpush.msra.mxu0 %v421
        %574 = vmatpush.msra.mxu0 %v417
        %575 = vmatpush.msra.mxu0 %v413
        %576 = vmatpush.msra.mxu0 %v409
        %577 = vmatpush.msra.mxu0 %v405
        %578 = vmatmul.f32.gmra.mxu0 %v348
        %v579 = vpop.f32.mrf.mxu0
        %v580 = vadd.f32 %v516, %v579
        %581 = vdwg.mxu0
        %582 = vmatpush.msra.mxu0 0.0
        %583 = vmatpush.msra.mxu0 0.0
        %584 = vmatpush.msra.mxu0 0.0
        %585 = vmatpush.msra.mxu0 0.0
        %586 = vmatpush.msra.mxu0 0.0
        %587 = vmatpush.msra.mxu0 %v509
        %588 = vmatpush.msra.mxu0 %v505
        %589 = vmatpush.msra.mxu0 %v501
        %590 = vmatpush.msra.mxu0 %v497
        %591 = vmatpush.msra.mxu0 %v493
        %592 = vmatpush.msra.mxu0 %v489
        %593 = vmatpush.msra.mxu0 %v485
        %594 = vmatpush.msra.mxu0 %v481
        %595 = vmatpush.msra.mxu0 %v477
        %596 = vmatpush.msra.mxu0 %v473
        %597 = vmatpush.msra.mxu0 %v469
        %598 = vmatmul.f32.gmra.mxu0 %v520
        %v599 = vpop.f32.mrf.mxu0
        %v600 = vadd.f32 %v580, %v599
        %601 = vdwg.mxu0
        %602 = vmatpush.msra.mxu0 %v466
        %603 = vmatpush.msra.mxu0 %v462
        %604 = vmatpush.msra.mxu0 %v458
        %605 = vmatpush.msra.mxu0 %v454
        %606 = vmatpush.msra.mxu0 %v450
        %607 = vmatpush.msra.mxu0 %v446
        %608 = vmatpush.msra.mxu0 %v442
        %609 = vmatpush.msra.mxu0 %v438
        %610 = vmatpush.msra.mxu0 %v434
        %611 = vmatpush.msra.mxu0 %v430
        %612 = vmatpush.msra.mxu0 %v426
        %613 = vmatpush.msra.mxu0 %v422
        %614 = vmatpush.msra.mxu0 %v418
        %615 = vmatpush.msra.mxu0 %v414
        %616 = vmatpush.msra.mxu0 %v410
        %617 = vmatpush.msra.mxu0 %v406
        %618 = vmatmul.f32.gmra.mxu0 %v348
        %v619 = vpop.f32.mrf.mxu0
        %v620 = vadd.f32 %v516, %v619
        %621 = vdwg.mxu0
        %622 = vmatpush.msra.mxu0 0.0
        %623 = vmatpush.msra.mxu0 0.0
        %624 = vmatpush.msra.mxu0 0.0
        %625 = vmatpush.msra.mxu0 0.0
        %626 = vmatpush.msra.mxu0 0.0
        %627 = vmatpush.msra.mxu0 %v510
        %628 = vmatpush.msra.mxu0 %v506
        %629 = vmatpush.msra.mxu0 %v502
        %630 = vmatpush.msra.mxu0 %v498
        %631 = vmatpush.msra.mxu0 %v494
        %632 = vmatpush.msra.mxu0 %v490
        %633 = vmatpush.msra.mxu0 %v486
        %634 = vmatpush.msra.mxu0 %v482
        %635 = vmatpush.msra.mxu0 %v478
        %636 = vmatpush.msra.mxu0 %v474
        %637 = vmatpush.msra.mxu0 %v470
        %638 = vmatmul.f32.gmra.mxu0 %v520
        %v639 = vpop.f32.mrf.mxu0
        %v640 = vadd.f32 %v620, %v639
        %641 = vdwg.mxu0
        %642 = vmatpush.msra.mxu0 %v467
        %643 = vmatpush.msra.mxu0 %v463
        %644 = vmatpush.msra.mxu0 %v459
        %645 = vmatpush.msra.mxu0 %v455
        %646 = vmatpush.msra.mxu0 %v451
        %647 = vmatpush.msra.mxu0 %v447
        %648 = vmatpush.msra.mxu0 %v443
        %649 = vmatpush.msra.mxu0 %v439
        %650 = vmatpush.msra.mxu0 %v435
        %651 = vmatpush.msra.mxu0 %v431
        %652 = vmatpush.msra.mxu0 %v427
        %653 = vmatpush.msra.mxu0 %v423
        %654 = vmatpush.msra.mxu0 %v419
        %655 = vmatpush.msra.mxu0 %v415
        %656 = vmatpush.msra.mxu0 %v411
        %657 = vmatpush.msra.mxu0 %v407
        %658 = vmatmul.f32.gmra.mxu0 %v348
        %v659 = vpop.f32.mrf.mxu0
        %v660 = vadd.f32 %v516, %v659
        %661 = vdwg.mxu0
        %662 = vmatpush.msra.mxu0 0.0
        %663 = vmatpush.msra.mxu0 0.0
        %664 = vmatpush.msra.mxu0 0.0
        %665 = vmatpush.msra.mxu0 0.0
        %666 = vmatpush.msra.mxu0 0.0
        %667 = vmatpush.msra.mxu0 %v511
        %668 = vmatpush.msra.mxu0 %v507
        %669 = vmatpush.msra.mxu0 %v503
        %670 = vmatpush.msra.mxu0 %v499
        %671 = vmatpush.msra.mxu0 %v495
        %672 = vmatpush.msra.mxu0 %v491
        %673 = vmatpush.msra.mxu0 %v487
        %674 = vmatpush.msra.mxu0 %v483
        %675 = vmatpush.msra.mxu0 %v479
        %676 = vmatpush.msra.mxu0 %v475
        %677 = vmatpush.msra.mxu0 %v471
        %678 = vmatmul.f32.gmra.mxu0 %v520
        %v679 = vpop.f32.mrf.mxu0
        %v680 = vadd.f32 %v660, %v679
        %681 = vdwg.mxu0
        %v682 = vmax.f32 %v560, 0.0
        %v683 = vmax.f32 %v600, 0.0
        %v684 = vmax.f32 %v640, 0.0
        %v685 = vmax.f32 %v680, 0.0
        %v686 = vld [vmem:[%s340] sm:$0xff]
        %v687 = vld [vmem:[%s340 + $0x8] sm:$0xff]
        %v688 = vunpack.c.l.bf16 %v686
        %v689 = vunpack.c.h.bf16 %v686
        %v690 = vunpack.c.l.bf16 %v687
        %v691 = vunpack.c.h.bf16 %v687
        %v692 = vadd.f32 %v682, %v688
        %v693 = vadd.f32 %v683, %v689
        %v694 = vadd.f32 %v684, %v690
        %v695 = vadd.f32 %v685, %v691
        %v696 = vpack.c.bf16 %v693, %v692
        %v697 = vpack.c.bf16 %v695, %v694
        %698 = vst [vmem:[%s346] sm:$0xff] %v696
        %699 = vst [vmem:[%s346 + $0x8] sm:$0xff] %v697
        %s700 = smul.u32 4, %s15
        %p701 = scmp.lt.s32.totalorder %s700, 7
        %s702 = scalar_select %p701, %s700, 7
        %s703 = smul.addr %s702, 4
        %s704 = scalar_lea.vmem %s4, %s703
        // Predicated region
        $region60: #{forward.11} parent=54 // pred_check
          %p705 = pneg %p127
        $region61: #{forward.11} parent=54 // pred_check_branch
          %707 = sbr.rel (%p705) target = $region63
        $region62: #{forward.11} parent=54 // pred_region
          %s708 = smul.u32 4, %s15
        $region63: #{forward.11} parent=54 // pred_fallthru
          _
      $region55: #{forward.11} parent=5 // pred_fallthru
        _
      %p709 = scmp.le.s32.totalorder 2, %s10
      // Predicated region
      $region64: #{forward.11} parent=5 // pred_check
        %p710 = pneg %p709
      $region65: #{forward.11} parent=5 // pred_check_branch
        %712 = sbr.rel (%p710) target = $region67
      $region66: #{forward.11} parent=5 // pred_region
        %s713 = ssub.s32 %s10, 2
        // Predicated region
        $region68: #{forward.11} parent=66 // pred_check
          %p714 = pneg %p133
        $region69: #{forward.11} parent=66 // pred_check_branch
          %716 = sbr.rel (%p714) target = $region71
        $region70: #{forward.11} parent=66 // pred_region
          %s717 = smul.u32 4, %s16
          %p718 = scmp.lt.s32.totalorder %s717, 7
          %s719 = scalar_select %p718, %s717, 7
          %s720 = smul.addr %s719, 4
          %s721 = scalar_lea.vmem %s4, %s720
        $region71: #{forward.11} parent=66 // pred_fallthru
          _
      $region67: #{forward.11} parent=5 // pred_fallthru
        _
    $region6: #{forward.11} parent=1 // loop_footer
      %s14 = sadd.s32 1, %s10
    $region7: #{forward.11} parent=1 // loop_footer_branch
      %9 = sbr.rel target = $region3
    $region8: #{forward.11} parent=1 // loop_exit
      _

// kernel: forward.12
$region0: #{forward.12}
  #allocation0 [shape = 'u32[]', space=smem, size = 0x4, offset = 0x4, fixed_abs, tag = 'smem constant byte address 0x4 - core index']
  #allocation1 [shape = 'u32[72,128]{1,0:T(1,128)}', space=vmem, size = 0x9000, scoped, tag = 'internal scratch']
  %s0 = inlined_call_operand.vmem [shape: f32[64,64], index: 0, kind: input, shape index: {}]
  %s1 = inlined_call_operand.vmem [shape: bf16[64,1024], index: 1, kind: input, shape index: {}]
  %s2 = inlined_call_operand.vmem [shape: f32[64,1], index: 2, kind: input, shape index: {}]
  %s3 = inlined_call_operand.vmem [shape: bf16[64,1024], index: 3, kind: output, shape index: {}]
  %s4 = sld [smem:[#allocation0]]
  $region87: #{forward.12} parent=0
    _
  %s6 = ssub.s32 1, %s4
  %s7 = scalar_select 0, %s6, %s4
  $region1: #{forward.12} parent=0
    #allocation2 [shape = 'u8[131072]{0}', space=vmem, size = 0x20000, scoped, tag = 'input window, operand 1']
    #allocation3 [shape = 'u8[131072]{0}', space=vmem, size = 0x20000, scoped, tag = 'output window, operand 0']
    loop: start=0, step=1, limit=4
    $region2: #{forward.12} parent=1 // loop_pre_header
      _
    $region3: #{forward.12} parent=1 // loop_header
      %s9 = sphi 0, %s13
      %p10 = scmp.ge.s32.totalorder %s9, 4
      %s17 = sphi 0, %s17
      %s19 = sphi 0, %s17
      %s20 = sphi 0, %s19
      %s34 = sphi 0, %s20
      %s40 = sphi 0, %s42
      %s43 = sphi 0, %s40
      %s44 = sphi 0, %s43
      %s60 = sphi 0, %s44
      %s64 = sphi 0, %s64
      %s66 = sphi 0, %s64
      %s67 = sphi 0, %s66
      %s81 = sphi 0, %s67
      %s87 = sphi 0, %s89
      %s90 = sphi 0, %s87
      %s91 = sphi 0, %s90
      %s107 = sphi 0, %s91
    $region4: #{forward.12} parent=1 // loop_header_branch
      %12 = sbr.rel (%p10) target = $region8
    $region5: #{forward.12} parent=1 // loop_body
      %s14 = ssub.s32 %s9, 1
      %s15 = ssub.s32 %s9, 2
      %s16 = sadd.s32 %s9, 1
      %s18 = sadd.s32 %s17, 1
      %p21 = scmp.eq.s32.totalorder %s9, 1
      %p22 = scmp.ne.s32.totalorder %s17, %s19
      %p23 = scmp.eq.s32.totalorder %s9, 0
      %p24 = por %p22, %p23
      %p25 = scmp.ne.s32.totalorder %s17, %s19
      %p26 = scmp.eq.s32.totalorder %s14, 1
      %p27 = por %p25, %p26
      %p28 = scmp.ne.s32.totalorder %s19, %s20
      %p29 = scmp.eq.s32.totalorder %s14, 0
      %p30 = por %p28, %p29
      %p31 = scmp.ne.s32.totalorder %s19, %s20
      %p32 = scmp.eq.s32.totalorder %s15, 1
      %p33 = por %p31, %p32
      %p35 = scmp.ne.s32.totalorder %s20, %s34
      %p36 = scmp.eq.s32.totalorder %s15, 0
      %p37 = por %p35, %p36
      %s38 = ssub.s32 %s9, %s16
      %p39 = scmp.eq.s32.totalorder %s38, 0
      %s41 = sadd.s32 %s40, 1
      %s42 = scalar_select %p39, %s40, %s41
      %p45 = pneg %p39
      %p46 = scmp.eq.s32.totalorder %s9, 1
      %p47 = por %p45, %p46
      %p48 = scmp.ne.s32.totalorder %s40, %s43
      %p49 = scmp.eq.s32.totalorder %s9, 0
      %p50 = por %p48, %p49
      %p51 = scmp.ne.s32.totalorder %s40, %s43
      %p52 = scmp.eq.s32.totalorder %s14, 1
      %p53 = por %p51, %p52
      %p54 = scmp.ne.s32.totalorder %s43, %s44
      %p55 = scmp.eq.s32.totalorder %s14, 0
      %p56 = por %p54, %p55
      %p57 = scmp.ne.s32.totalorder %s43, %s44
      %p58 = scmp.eq.s32.totalorder %s15, 1
      %p59 = por %p57, %p58
      %p61 = scmp.ne.s32.totalorder %s44, %s60
      %p62 = scmp.eq.s32.totalorder %s15, 0
      %p63 = por %p61, %p62
      %s65 = sadd.s32 %s64, 1
      %p68 = scmp.eq.s32.totalorder %s9, 1
      %p69 = scmp.ne.s32.totalorder %s64, %s66
      %p70 = scmp.eq.s32.totalorder %s9, 0
      %p71 = por %p69, %p70
      %p72 = scmp.ne.s32.totalorder %s64, %s66
      %p73 = scmp.eq.s32.totalorder %s14, 1
      %p74 = por %p72, %p73
      %p75 = scmp.ne.s32.totalorder %s66, %s67
      %p76 = scmp.eq.s32.totalorder %s14, 0
      %p77 = por %p75, %p76
      %p78 = scmp.ne.s32.totalorder %s66, %s67
      %p79 = scmp.eq.s32.totalorder %s15, 1
      %p80 = por %p78, %p79
      %p82 = scmp.ne.s32.totalorder %s67, %s81
      %p83 = scmp.eq.s32.totalorder %s15, 0
      %p84 = por %p82, %p83
      %s85 = ssub.s32 %s9, %s16
      %p86 = scmp.eq.s32.totalorder %s85, 0
      %s88 = sadd.s32 %s87, 1
      %s89 = scalar_select %p86, %s87, %s88
      %p92 = pneg %p86
      %p93 = scmp.eq.s32.totalorder %s9, 1
      %p94 = por %p92, %p93
      %p95 = scmp.ne.s32.totalorder %s87, %s90
      %p96 = scmp.eq.s32.totalorder %s9, 0
      %p97 = por %p95, %p96
      %p98 = scmp.ne.s32.totalorder %s87, %s90
      %p99 = scmp.eq.s32.totalorder %s14, 1
      %p100 = por %p98, %p99
      %p101 = scmp.ne.s32.totalorder %s90, %s91
      %p102 = scmp.eq.s32.totalorder %s14, 0
      %p103 = por %p101, %p102
      %p104 = scmp.ne.s32.totalorder %s90, %s91
      %p105 = scmp.eq.s32.totalorder %s15, 1
      %p106 = por %p104, %p105
      %p108 = scmp.ne.s32.totalorder %s91, %s107
      %p109 = scmp.eq.s32.totalorder %s15, 0
      %p110 = por %p108, %p109
      %p111 = scmp.le.s32.totalorder 1, %s9
      %p112 = scmp.lt.s32.totalorder %s9, 3
      %p113 = pnand %p111, %p112
      %p114 = pneg %p113
      // Predicated region
      $region9: #{forward.12} parent=5 // pred_check
        _
      $region10: #{forward.12} parent=5 // pred_check_branch
        %116 = sbr.rel (%p113) target = $region12
      $region11: #{forward.12} parent=5 // pred_region
        %s117 = ssub.s32 %s9, 1
        // Predicated region
        $region13: #{forward.12} parent=11 // pred_check
          %p118 = pneg %p30
        $region14: #{forward.12} parent=11 // pred_check_branch
          %120 = sbr.rel (%p118) target = $region16
        $region15: #{forward.12} parent=11 // pred_region
          _
        $region16: #{forward.12} parent=11 // pred_fallthru
          _
        // Predicated region
        $region17: #{forward.12} parent=11 // pred_check
          %p121 = pneg %p77
        $region18: #{forward.12} parent=11 // pred_check_branch
          %123 = sbr.rel (%p121) target = $region20
        $region19: #{forward.12} parent=11 // pred_region
          _
        $region20: #{forward.12} parent=11 // pred_fallthru
          _
      $region12: #{forward.12} parent=5 // pred_fallthru
        _
      %p124 = scmp.lt.s32.totalorder %s9, 2
      // Predicated region
      $region21: #{forward.12} parent=5 // pred_check
        %p125 = pneg %p124
      $region22: #{forward.12} parent=5 // pred_check_branch
        %127 = sbr.rel (%p125) target = $region24
      $region23: #{forward.12} parent=5 // pred_region
        // Predicated region
        $region25: #{forward.12} parent=23 // pred_check
          %p128 = pneg %p50
        $region26: #{forward.12} parent=23 // pred_check_branch
          %130 = sbr.rel (%p128) target = $region28
        $region27: #{forward.12} parent=23 // pred_region
          %s131 = sand.u32 %s40, 1
          %s132 = sand.u32 %s40, 1
          %s133 = smul.addr %s132, 128
          %s134 = scalar_lea.vmem [#allocation2], %s133
          %s135 = smul.u32 4, %s9
          %s136 = smul.addr %s135, 4
          %s137 = scalar_lea.vmem %s1, %s136
          // Predicated region
          $region29: #{forward.12} parent=27 // pred_check
            _
          $region30: #{forward.12} parent=27 // pred_check_branch
            %139 = sbr.rel (0) target = $region32
          $region31: #{forward.12} parent=27 // pred_region
            // Predicated region
            $region33: #{forward.12} parent=31 // pred_check
              _
            $region34: #{forward.12} parent=31 // pred_check_branch
              %141 = sbr.rel (0) target = $region36
            $region35: #{forward.12} parent=31 // pred_region
              loop: start=0, step=1, limit=1
              $region37: #{forward.12} parent=35 // loop_pre_header
                _
              $region38: #{forward.12} parent=35 // loop_header
                %s143 = sphi 0, %s147
                %p144 = scmp.ge.s32.totalorder %s143, 1
                %s148 = sphi %s137, %s137
                %s149 = sphi %s134, %s134
              $region39: #{forward.12} parent=35 // loop_header_branch
                %146 = sbr.rel (%p144) target = $region43
              $region40: #{forward.12} parent=35 // loop_body
                %v150 = vld [vmem:[%s148] sm:$0xff]
                %151 = vst [vmem:[%s149] sm:$0xff] %v150
                %v152 = vld [vmem:[%s148 + $0x8] sm:$0xff]
                %153 = vst [vmem:[%s149 + $0x8] sm:$0xff] %v152
                %v154 = vld [vmem:[%s148 + $0x20] sm:$0xff]
                %155 = vst [vmem:[%s149 + $0x10] sm:$0xff] %v154
                %v156 = vld [vmem:[%s148 + $0x28] sm:$0xff]
                %157 = vst [vmem:[%s149 + $0x18] sm:$0xff] %v156
                %v158 = vld [vmem:[%s148 + $0x40] sm:$0xff]
                %159 = vst [vmem:[%s149 + $0x20] sm:$0xff] %v158
                %v160 = vld [vmem:[%s148 + $0x48] sm:$0xff]
                %161 = vst [vmem:[%s149 + $0x28] sm:$0xff] %v160
                %v162 = vld [vmem:[%s148 + $0x60] sm:$0xff]
                %163 = vst [vmem:[%s149 + $0x30] sm:$0xff] %v162
                %v164 = vld [vmem:[%s148 + $0x68] sm:$0xff]
                %165 = vst [vmem:[%s149 + $0x38] sm:$0xff] %v164
                %v166 = vld [vmem:[%s148 + $0x80] sm:$0xff]
                %167 = vst [vmem:[%s149 + $0x40] sm:$0xff] %v166
                %v168 = vld [vmem:[%s148 + $0x88] sm:$0xff]
                %169 = vst [vmem:[%s149 + $0x48] sm:$0xff] %v168
                %v170 = vld [vmem:[%s148 + $0xa0] sm:$0xff]
                %171 = vst [vmem:[%s149 + $0x50] sm:$0xff] %v170
                %v172 = vld [vmem:[%s148 + $0xa8] sm:$0xff]
                %173 = vst [vmem:[%s149 + $0x58] sm:$0xff] %v172
                %v174 = vld [vmem:[%s148 + $0xc0] sm:$0xff]
                %175 = vst [vmem:[%s149 + $0x60] sm:$0xff] %v174
                %v176 = vld [vmem:[%s148 + $0xc8] sm:$0xff]
                %177 = vst [vmem:[%s149 + $0x68] sm:$0xff] %v176
                %v178 = vld [vmem:[%s148 + $0xe0] sm:$0xff]
                %179 = vst [vmem:[%s149 + $0x70] sm:$0xff] %v178
                %v180 = vld [vmem:[%s148 + $0xe8] sm:$0xff]
                %181 = vst [vmem:[%s149 + $0x78] sm:$0xff] %v180
              $region41: #{forward.12} parent=35 // loop_footer
                %s147 = sadd.s32 1, %s143
              $region42: #{forward.12} parent=35 // loop_footer_branch
                %142 = sbr.rel target = $region38
              $region43: #{forward.12} parent=35 // loop_exit
                _
            $region36: #{forward.12} parent=31 // pred_fallthru
              _
            // Predicated region
            $region44: #{forward.12} parent=31 // pred_check
              _
            $region45: #{forward.12} parent=31 // pred_check_branch
              %183 = sbr.rel target = $region47
            $region46: #{forward.12} parent=31 // pred_region
              _
            $region47: #{forward.12} parent=31 // pred_fallthru
              _
          $region32: #{forward.12} parent=27 // pred_fallthru
            _
          %184 = vnop
        $region28: #{forward.12} parent=23 // pred_fallthru
          _
      $region24: #{forward.12} parent=5 // pred_fallthru
        _
      %p185 = scmp.le.s32.totalorder 1, %s9
      %p186 = scmp.lt.s32.totalorder %s9, 3
      %p187 = pnand %p185, %p186
      %p188 = pneg %p187
      // Predicated region
      $region48: #{forward.12} parent=5 // pred_check
        _
      $region49: #{forward.12} parent=5 // pred_check_branch
        %190 = sbr.rel (%p187) target = $region51
      $region50: #{forward.12} parent=5 // pred_region
        %s191 = ssub.s32 %s9, 1
        %s192 = sand.u32 %s43, 1
        %s193 = sand.u32 %s43, 1
        %s194 = smul.addr %s193, 128
        %s195 = scalar_lea.vmem [#allocation2], %s194
        // Predicated region
        $region52: #{forward.12} parent=50 // pred_check
          %p196 = pneg %p56
        $region53: #{forward.12} parent=50 // pred_check_branch
          %198 = sbr.rel (%p196) target = $region55
        $region54: #{forward.12} parent=50 // pred_region
          _
        $region55: #{forward.12} parent=50 // pred_fallthru
          _
        %p199 = pneg %p30
        %p200 = pneg %p27
        %s201 = sand.u32 %s43, 1
        %s202 = sand.u32 %s43, 1
        %s203 = smul.addr %s202, 128
        %s204 = scalar_lea.vmem [#allocation2], %s203
        %p205 = pneg %p56
        %p206 = pneg %p53
        %p207 = pneg %p77
        %p208 = pneg %p74
        %p209 = pneg %p103
        %p210 = pneg %p100
        %s211 = sand.u32 %s90, 1
        %s212 = sand.u32 %s90, 1
        %s213 = smul.addr %s212, 128
        %s214 = scalar_lea.vmem [#allocation3], %s213
        %s215 = smul.u32 4, %s14
        %s216 = smul.u32 4, %s14
        %v217 = vld [vmem:[%s0] sm:$0xff]
        %v218 = vld [vmem:[%s0 + $0x8] sm:$0xff]
        %v219 = vld [vmem:[%s0 + $0x10] sm:$0xff]
        %v220 = vld [vmem:[%s0 + $0x18] sm:$0xff]
        %v221 = vld [vmem:[%s0 + $0x20] sm:$0xff]
        %v222 = vld [vmem:[%s0 + $0x28] sm:$0xff]
        %v223 = vld [vmem:[%s0 + $0x30] sm:$0xff]
        %v224 = vld [vmem:[%s0 + $0x38] sm:$0xff]
        %v225 = vld [vmem:[%s195] sm:$0xff]
        %v226 = vld [vmem:[%s195 + $0x8] sm:$0xff]
        %v227 = vld [vmem:[%s195 + $0x10] sm:$0xff]
        %v228 = vld [vmem:[%s195 + $0x18] sm:$0xff]
        %v229 = vld [vmem:[%s195 + $0x20] sm:$0xff]
        %v230 = vld [vmem:[%s195 + $0x28] sm:$0xff]
        %v231 = vld [vmem:[%s195 + $0x30] sm:$0xff]
        %v232 = vld [vmem:[%s195 + $0x38] sm:$0xff]
        %v233 = vld [vmem:[%s195 + $0x40] sm:$0xff]
        %v234 = vld [vmem:[%s195 + $0x48] sm:$0xff]
        %v235 = vld [vmem:[%s195 + $0x50] sm:$0xff]
        %v236 = vld [vmem:[%s195 + $0x58] sm:$0xff]
        %v237 = vld [vmem:[%s195 + $0x60] sm:$0xff]
        %v238 = vld [vmem:[%s195 + $0x68] sm:$0xff]
        %v239 = vld [vmem:[%s195 + $0x70] sm:$0xff]
        %v240 = vld [vmem:[%s195 + $0x78] sm:$0xff]
        %v241 = vunpack.c.l.bf16 %v225
        %v242 = vunpack.c.h.bf16 %v225
        %v243 = vunpack.c.l.bf16 %v226
        %v244 = vunpack.c.h.bf16 %v226
        %v245 = vunpack.c.l.bf16 %v227
        %v246 = vunpack.c.h.bf16 %v227
        %v247 = vunpack.c.l.bf16 %v228
        %v248 = vunpack.c.h.bf16 %v228
        %v249 = vunpack.c.l.bf16 %v229
        %v250 = vunpack.c.h.bf16 %v229
        %v251 = vunpack.c.l.bf16 %v230
        %v252 = vunpack.c.h.bf16 %v230
        %v253 = vunpack.c.l.bf16 %v231
        %v254 = vunpack.c.h.bf16 %v231
        %v255 = vunpack.c.l.bf16 %v232
        %v256 = vunpack.c.h.bf16 %v232
        %v257 = vunpack.c.l.bf16 %v233
        %v258 = vunpack.c.h.bf16 %v233
        %v259 = vunpack.c.l.bf16 %v234
        %v260 = vunpack.c.h.bf16 %v234
        %v261 = vunpack.c.l.bf16 %v235
        %v262 = vunpack.c.h.bf16 %v235
        %v263 = vunpack.c.l.bf16 %v236
        %v264 = vunpack.c.h.bf16 %v236
        %v265 = vunpack.c.l.bf16 %v237
        %v266 = vunpack.c.h.bf16 %v237
        %v267 = vunpack.c.l.bf16 %v238
        %v268 = vunpack.c.h.bf16 %v238
        %v269 = vunpack.c.l.bf16 %v239
        %v270 = vunpack.c.h.bf16 %v239
        %v271 = vunpack.c.l.bf16 %v240
        %v272 = vunpack.c.h.bf16 %v240
        %v273 = vld [vmem:[%s2] sm:$0xff]
        %v274 = vld [vmem:[%s2 + $0x8] sm:$0xff]
        %v275 = vld [vmem:[%s2 + $0x10] sm:$0xff]
        %v276 = vld [vmem:[%s2 + $0x18] sm:$0xff]
        %v277 = vld [vmem:[%s2 + $0x20] sm:$0xff]
        %v278 = vld [vmem:[%s2 + $0x28] sm:$0xff]
        %v279 = vld [vmem:[%s2 + $0x30] sm:$0xff]
        %v280 = vld [vmem:[%s2 + $0x38] sm:$0xff]
        %282 = vset.pattern.permute.xlu0 0
        %283 = vperm.xlu0 %282, %v273
        %v284 = vpop.permute.xlu0 %283
        %287 = vset.pattern.permute.xlu0 0
        %288 = vperm.xlu0 %287, %v274
        %v289 = vpop.permute.xlu0 %288
        %292 = vset.pattern.permute.xlu0 0
        %293 = vperm.xlu0 %292, %v275
        %v294 = vpop.permute.xlu0 %293
        %297 = vset.pattern.permute.xlu0 0
        %298 = vperm.xlu0 %297, %v276
        %v299 = vpop.permute.xlu0 %298
        %302 = vset.pattern.permute.xlu0 0
        %303 = vperm.xlu0 %302, %v277
        %v304 = vpop.permute.xlu0 %303
        %307 = vset.pattern.permute.xlu0 0
        %308 = vperm.xlu0 %307, %v278
        %v309 = vpop.permute.xlu0 %308
        %312 = vset.pattern.permute.xlu0 0
        %313 = vperm.xlu0 %312, %v279
        %v314 = vpop.permute.xlu0 %313
        %317 = vset.pattern.permute.xlu0 0
        %318 = vperm.xlu0 %317, %v280
        %v319 = vpop.permute.xlu0 %318
        %vm321 = vcmask 523264
        %v323 = vsel %vm321, %v217, 0
        %v326 = vsel %vm321, %v218, 0
        %v329 = vsel %vm321, %v219, 0
        %v332 = vsel %vm321, %v220, 0
        %v335 = vsel %vm321, %v221, 0
        %v338 = vsel %vm321, %v222, 0
        %v341 = vsel %vm321, %v223, 0
        %v344 = vsel %vm321, %v224, 0
        %346 = vmatpush.msra.mxu0 0.0
        %347 = vmatpush.msra.mxu0 0.0
        %348 = vmatpush.msra.mxu0 0.0
        %349 = vmatpush.msra.mxu0 0.0
        %350 = vmatpush.msra.mxu0 0.0
        %351 = vmatpush.msra.mxu0 0.0
        %352 = vmatpush.msra.mxu0 0.0
        %353 = vmatpush.msra.mxu0 0.0
        %354 = vmatpush.msra.mxu0 %v269
        %355 = vmatpush.msra.mxu0 %v265
        %356 = vmatpush.msra.mxu0 %v261
        %357 = vmatpush.msra.mxu0 %v257
        %358 = vmatpush.msra.mxu0 %v253
        %359 = vmatpush.msra.mxu0 %v249
        %360 = vmatpush.msra.mxu0 %v245
        %361 = vmatpush.msra.mxu0 %v241
        %362 = vmatmul.f32.gmra.mxu0 %v323
        %v363 = vpop.f32.mrf.mxu0
        %v364 = vadd.f32 %v284, %v363
        %365 = vmatmul.f32.gmra.mxu0 %v326
        %v366 = vpop.f32.mrf.mxu0
        %v367 = vadd.f32 %v289, %v366
        %368 = vmatmul.f32.gmra.mxu0 %v329
        %v369 = vpop.f32.mrf.mxu0
        %v370 = vadd.f32 %v294, %v369
        %371 = vmatmul.f32.gmra.mxu0 %v332
        %v372 = vpop.f32.mrf.mxu0
        %v373 = vadd.f32 %v299, %v372
        %374 = vmatmul.f32.gmra.mxu0 %v335
        %v375 = vpop.f32.mrf.mxu0
        %v376 = vadd.f32 %v304, %v375
        %377 = vmatmul.f32.gmra.mxu0 %v338
        %v378 = vpop.f32.mrf.mxu0
        %v379 = vadd.f32 %v309, %v378
        %380 = vmatmul.f32.gmra.mxu0 %v341
        %v381 = vpop.f32.mrf.mxu0
        %v382 = vadd.f32 %v314, %v381
        %383 = vmatmul.f32.gmra.mxu0 %v344
        %v384 = vpop.f32.mrf.mxu0
        %v385 = vadd.f32 %v319, %v384
        %386 = vdwg.mxu0
        %387 = vmatpush.msra.mxu0 0.0
        %388 = vmatpush.msra.mxu0 0.0
        %389 = vmatpush.msra.mxu0 0.0
        %390 = vmatpush.msra.mxu0 0.0
        %391 = vmatpush.msra.mxu0 0.0
        %392 = vmatpush.msra.mxu0 0.0
        %393 = vmatpush.msra.mxu0 0.0
        %394 = vmatpush.msra.mxu0 0.0
        %395 = vmatpush.msra.mxu0 %v270
        %396 = vmatpush.msra.mxu0 %v266
        %397 = vmatpush.msra.mxu0 %v262
        %398 = vmatpush.msra.mxu0 %v258
        %399 = vmatpush.msra.mxu0 %v254
        %400 = vmatpush.msra.mxu0 %v250
        %401 = vmatpush.msra.mxu0 %v246
        %402 = vmatpush.msra.mxu0 %v242
        %403 = vmatmul.f32.gmra.mxu0 %v323
        %v404 = vpop.f32.mrf.mxu0
        %v405 = vadd.f32 %v284, %v404
        %406 = vmatmul.f32.gmra.mxu0 %v326
        %v407 = vpop.f32.mrf.mxu0
        %v408 = vadd.f32 %v289, %v407
        %409 = vmatmul.f32.gmra.mxu0 %v329
        %v410 = vpop.f32.mrf.mxu0
        %v411 = vadd.f32 %v294, %v410
        %412 = vmatmul.f32.gmra.mxu0 %v332
        %v413 = vpop.f32.mrf.mxu0
        %v414 = vadd.f32 %v299, %v413
        %415 = vmatmul.f32.gmra.mxu0 %v335
        %v416 = vpop.f32.mrf.mxu0
        %v417 = vadd.f32 %v304, %v416
        %418 = vmatmul.f32.gmra.mxu0 %v338
        %v419 = vpop.f32.mrf.mxu0
        %v420 = vadd.f32 %v309, %v419
        %421 = vmatmul.f32.gmra.mxu0 %v341
        %v422 = vpop.f32.mrf.mxu0
        %v423 = vadd.f32 %v314, %v422
        %424 = vmatmul.f32.gmra.mxu0 %v344
        %v425 = vpop.f32.mrf.mxu0
        %v426 = vadd.f32 %v319, %v425
        %427 = vdwg.mxu0
        %428 = vmatpush.msra.mxu0 0.0
        %429 = vmatpush.msra.mxu0 0.0
        %430 = vmatpush.msra.mxu0 0.0
        %431 = vmatpush.msra.mxu0 0.0
        %432 = vmatpush.msra.mxu0 0.0
        %433 = vmatpush.msra.mxu0 0.0
        %434 = vmatpush.msra.mxu0 0.0
        %435 = vmatpush.msra.mxu0 0.0
        %436 = vmatpush.msra.mxu0 %v271
        %437 = vmatpush.msra.mxu0 %v267
        %438 = vmatpush.msra.mxu0 %v263
        %439 = vmatpush.msra.mxu0 %v259
        %440 = vmatpush.msra.mxu0 %v255
        %441 = vmatpush.msra.mxu0 %v251
        %442 = vmatpush.msra.mxu0 %v247
        %443 = vmatpush.msra.mxu0 %v243
        %444 = vmatmul.f32.gmra.mxu0 %v323
        %v445 = vpop.f32.mrf.mxu0
        %v446 = vadd.f32 %v284, %v445
        %447 = vmatmul.f32.gmra.mxu0 %v326
        %v448 = vpop.f32.mrf.mxu0
        %v449 = vadd.f32 %v289, %v448
        %450 = vmatmul.f32.gmra.mxu0 %v329
        %v451 = vpop.f32.mrf.mxu0
        %v452 = vadd.f32 %v294, %v451
        %453 = vmatmul.f32.gmra.mxu0 %v332
        %v454 = vpop.f32.mrf.mxu0
        %v455 = vadd.f32 %v299, %v454
        %456 = vmatmul.f32.gmra.mxu0 %v335
        %v457 = vpop.f32.mrf.mxu0
        %v458 = vadd.f32 %v304, %v457
        %459 = vmatmul.f32.gmra.mxu0 %v338
        %v460 = vpop.f32.mrf.mxu0
        %v461 = vadd.f32 %v309, %v460
        %462 = vmatmul.f32.gmra.mxu0 %v341
        %v463 = vpop.f32.mrf.mxu0
        %v464 = vadd.f32 %v314, %v463
        %465 = vmatmul.f32.gmra.mxu0 %v344
        %v466 = vpop.f32.mrf.mxu0
        %v467 = vadd.f32 %v319, %v466
        %468 = vdwg.mxu0
        %469 = vmatpush.msra.mxu0 0.0
        %470 = vmatpush.msra.mxu0 0.0
        %471 = vmatpush.msra.mxu0 0.0
        %472 = vmatpush.msra.mxu0 0.0
        %473 = vmatpush.msra.mxu0 0.0
        %474 = vmatpush.msra.mxu0 0.0
        %475 = vmatpush.msra.mxu0 0.0
        %476 = vmatpush.msra.mxu0 0.0
        %477 = vmatpush.msra.mxu0 %v272
        %478 = vmatpush.msra.mxu0 %v268
        %479 = vmatpush.msra.mxu0 %v264
        %480 = vmatpush.msra.mxu0 %v260
        %481 = vmatpush.msra.mxu0 %v256
        %482 = vmatpush.msra.mxu0 %v252
        %483 = vmatpush.msra.mxu0 %v248
        %484 = vmatpush.msra.mxu0 %v244
        %485 = vmatmul.f32.gmra.mxu0 %v323
        %v486 = vpop.f32.mrf.mxu0
        %v487 = vadd.f32 %v284, %v486
        %488 = vmatmul.f32.gmra.mxu0 %v326
        %v489 = vpop.f32.mrf.mxu0
        %v490 = vadd.f32 %v289, %v489
        %491 = vmatmul.f32.gmra.mxu0 %v329
        %v492 = vpop.f32.mrf.mxu0
        %v493 = vadd.f32 %v294, %v492
        %494 = vmatmul.f32.gmra.mxu0 %v332
        %v495 = vpop.f32.mrf.mxu0
        %v496 = vadd.f32 %v299, %v495
        %497 = vmatmul.f32.gmra.mxu0 %v335
        %v498 = vpop.f32.mrf.mxu0
        %v499 = vadd.f32 %v304, %v498
        %500 = vmatmul.f32.gmra.mxu0 %v338
        %v501 = vpop.f32.mrf.mxu0
        %v502 = vadd.f32 %v309, %v501
        %503 = vmatmul.f32.gmra.mxu0 %v341
        %v504 = vpop.f32.mrf.mxu0
        %v505 = vadd.f32 %v314, %v504
        %506 = vmatmul.f32.gmra.mxu0 %v344
        %v507 = vpop.f32.mrf.mxu0
        %v508 = vadd.f32 %v319, %v507
        %509 = vdwg.mxu0
        %v510 = vmax.f32 %v364, 0.0
        %v511 = vmax.f32 %v405, 0.0
        %v512 = vmax.f32 %v446, 0.0
        %v513 = vmax.f32 %v487, 0.0
        %v514 = vmax.f32 %v367, 0.0
        %v515 = vmax.f32 %v408, 0.0
        %v516 = vmax.f32 %v449, 0.0
        %v517 = vmax.f32 %v490, 0.0
        %v518 = vmax.f32 %v370, 0.0
        %v519 = vmax.f32 %v411, 0.0
        %v520 = vmax.f32 %v452, 0.0
        %v521 = vmax.f32 %v493, 0.0
        %v522 = vmax.f32 %v373, 0.0
        %v523 = vmax.f32 %v414, 0.0
        %v524 = vmax.f32 %v455, 0.0
        %v525 = vmax.f32 %v496, 0.0
        %v526 = vmax.f32 %v376, 0.0
        %v527 = vmax.f32 %v417, 0.0
        %v528 = vmax.f32 %v458, 0.0
        %v529 = vmax.f32 %v499, 0.0
        %v530 = vmax.f32 %v379, 0.0
        %v531 = vmax.f32 %v420, 0.0
        %v532 = vmax.f32 %v461, 0.0
        %v533 = vmax.f32 %v502, 0.0
        %v534 = vmax.f32 %v382, 0.0
        %v535 = vmax.f32 %v423, 0.0
        %v536 = vmax.f32 %v464, 0.0
        %v537 = vmax.f32 %v505, 0.0
        %v538 = vmax.f32 %v385, 0.0
        %v539 = vmax.f32 %v426, 0.0
        %v540 = vmax.f32 %v467, 0.0
        %v541 = vmax.f32 %v508, 0.0
        %v542 = vpack.c.bf16 %v511, %v510
        %v543 = vpack.c.bf16 %v513, %v512
        %v544 = vpack.c.bf16 %v515, %v514
        %v545 = vpack.c.bf16 %v517, %v516
        %v546 = vpack.c.bf16 %v519, %v518
        %v547 = vpack.c.bf16 %v521, %v520
        %v548 = vpack.c.bf16 %v523, %v522
        %v549 = vpack.c.bf16 %v525, %v524
        %v550 = vpack.c.bf16 %v527, %v526
        %v551 = vpack.c.bf16 %v529, %v528
        %v552 = vpack.c.bf16 %v531, %v530
        %v553 = vpack.c.bf16 %v533, %v532
        %v554 = vpack.c.bf16 %v535, %v534
        %v555 = vpack.c.bf16 %v537, %v536
        %v556 = vpack.c.bf16 %v539, %v538
        %v557 = vpack.c.bf16 %v541, %v540
        %558 = vst [vmem:[%s214] sm:$0xff] %v542
        %559 = vst [vmem:[%s214 + $0x8] sm:$0xff] %v543
        %560 = vst [vmem:[%s214 + $0x10] sm:$0xff] %v544
        %561 = vst [vmem:[%s214 + $0x18] sm:$0xff] %v545
        %562 = vst [vmem:[%s214 + $0x20] sm:$0xff] %v546
        %563 = vst [vmem:[%s214 + $0x28] sm:$0xff] %v547
        %564 = vst [vmem:[%s214 + $0x30] sm:$0xff] %v548
        %565 = vst [vmem:[%s214 + $0x38] sm:$0xff] %v549
        %566 = vst [vmem:[%s214 + $0x40] sm:$0xff] %v550
        %567 = vst [vmem:[%s214 + $0x48] sm:$0xff] %v551
        %568 = vst [vmem:[%s214 + $0x50] sm:$0xff] %v552
        %569 = vst [vmem:[%s214 + $0x58] sm:$0xff] %v553
        %570 = vst [vmem:[%s214 + $0x60] sm:$0xff] %v554
        %571 = vst [vmem:[%s214 + $0x68] sm:$0xff] %v555
        %572 = vst [vmem:[%s214 + $0x70] sm:$0xff] %v556
        %573 = vst [vmem:[%s214 + $0x78] sm:$0xff] %v557
        %s574 = sand.u32 %s90, 1
        %s575 = sand.u32 %s90, 1
        %s576 = smul.addr %s575, 128
        %s577 = scalar_lea.vmem [#allocation3], %s576
        // Predicated region
        $region56: #{forward.12} parent=50 // pred_check
          %p578 = pneg %p100
        $region57: #{forward.12} parent=50 // pred_check_branch
          %580 = sbr.rel (%p578) target = $region59
        $region58: #{forward.12} parent=50 // pred_region
          %s581 = smul.u32 4, %s14
          %s582 = smul.addr %s581, 4
          %s583 = scalar_lea.vmem %s3, %s582
          // Predicated region
          $region60: #{forward.12} parent=58 // pred_check
            _
          $region61: #{forward.12} parent=58 // pred_check_branch
            %585 = sbr.rel (0) target = $region63
          $region62: #{forward.12} parent=58 // pred_region
            // Predicated region
            $region64: #{forward.12} parent=62 // pred_check
              _
            $region65: #{forward.12} parent=62 // pred_check_branch
              %587 = sbr.rel (0) target = $region67
            $region66: #{forward.12} parent=62 // pred_region
              loop: start=0, step=1, limit=1
              $region68: #{forward.12} parent=66 // loop_pre_header
                _
              $region69: #{forward.12} parent=66 // loop_header
                %s589 = sphi 0, %s593
                %p590 = scmp.ge.s32.totalorder %s589, 1
                %s594 = sphi %s577, %s577
                %s595 = sphi %s583, %s583
              $region70: #{forward.12} parent=66 // loop_header_branch
                %592 = sbr.rel (%p590) target = $region74
              $region71: #{forward.12} parent=66 // loop_body
                %v596 = vld [vmem:[%s594] sm:$0xff]
                %597 = vst [vmem:[%s595] sm:$0xff] %v596
                %v598 = vld [vmem:[%s594 + $0x8] sm:$0xff]
                %599 = vst [vmem:[%s595 + $0x8] sm:$0xff] %v598
                %v600 = vld [vmem:[%s594 + $0x10] sm:$0xff]
                %601 = vst [vmem:[%s595 + $0x20] sm:$0xff] %v600
                %v602 = vld [vmem:[%s594 + $0x18] sm:$0xff]
                %603 = vst [vmem:[%s595 + $0x28] sm:$0xff] %v602
                %v604 = vld [vmem:[%s594 + $0x20] sm:$0xff]
                %605 = vst [vmem:[%s595 + $0x40] sm:$0xff] %v604
                %v606 = vld [vmem:[%s594 + $0x28] sm:$0xff]
                %607 = vst [vmem:[%s595 + $0x48] sm:$0xff] %v606
                %v608 = vld [vmem:[%s594 + $0x30] sm:$0xff]
                %609 = vst [vmem:[%s595 + $0x60] sm:$0xff] %v608
                %v610 = vld [vmem:[%s594 + $0x38] sm:$0xff]
                %611 = vst [vmem:[%s595 + $0x68] sm:$0xff] %v610
                %v612 = vld [vmem:[%s594 + $0x40] sm:$0xff]
                %613 = vst [vmem:[%s595 + $0x80] sm:$0xff] %v612
                %v614 = vld [vmem:[%s594 + $0x48] sm:$0xff]
                %615 = vst [vmem:[%s595 + $0x88] sm:$0xff] %v614
                %v616 = vld [vmem:[%s594 + $0x50] sm:$0xff]
                %617 = vst [vmem:[%s595 + $0xa0] sm:$0xff] %v616
                %v618 = vld [vmem:[%s594 + $0x58] sm:$0xff]
                %619 = vst [vmem:[%s595 + $0xa8] sm:$0xff] %v618
                %v620 = vld [vmem:[%s594 + $0x60] sm:$0xff]
                %621 = vst [vmem:[%s595 + $0xc0] sm:$0xff] %v620
                %v622 = vld [vmem:[%s594 + $0x68] sm:$0xff]
                %623 = vst [vmem:[%s595 + $0xc8] sm:$0xff] %v622
                %v624 = vld [vmem:[%s594 + $0x70] sm:$0xff]
                %625 = vst [vmem:[%s595 + $0xe0] sm:$0xff] %v624
                %v626 = vld [vmem:[%s594 + $0x78] sm:$0xff]
                %627 = vst [vmem:[%s595 + $0xe8] sm:$0xff] %v626
              $region72: #{forward.12} parent=66 // loop_footer
                %s593 = sadd.s32 1, %s589
              $region73: #{forward.12} parent=66 // loop_footer_branch
                %588 = sbr.rel target = $region69
              $region74: #{forward.12} parent=66 // loop_exit
                _
            $region67: #{forward.12} parent=62 // pred_fallthru
              _
            // Predicated region
            $region75: #{forward.12} parent=62 // pred_check
              _
            $region76: #{forward.12} parent=62 // pred_check_branch
              %629 = sbr.rel target = $region78
            $region77: #{forward.12} parent=62 // pred_region
              _
            $region78: #{forward.12} parent=62 // pred_fallthru
              _
          $region63: #{forward.12} parent=58 // pred_fallthru
            _
          %630 = vnop
        $region59: #{forward.12} parent=50 // pred_fallthru
          _
      $region51: #{forward.12} parent=5 // pred_fallthru
        _
      %p631 = scmp.le.s32.totalorder 2, %s9
      // Predicated region
      $region79: #{forward.12} parent=5 // pred_check
        %p632 = pneg %p631
      $region80: #{forward.12} parent=5 // pred_check_branch
        %634 = sbr.rel (%p632) target = $region82
      $region81: #{forward.12} parent=5 // pred_region
        %s635 = ssub.s32 %s9, 2
        // Predicated region
        $region83: #{forward.12} parent=81 // pred_check
          %p636 = pneg %p106
        $region84: #{forward.12} parent=81 // pred_check_branch
          %638 = sbr.rel (%p636) target = $region86
        $region85: #{forward.12} parent=81 // pred_region
          %s639 = sand.u32 %s91, 1
          %s640 = sand.u32 %s91, 1
          %s641 = smul.addr %s640, 128
          %s642 = scalar_lea.vmem [#allocation3], %s641
        $region86: #{forward.12} parent=81 // pred_fallthru
          _
      $region82: #{forward.12} parent=5 // pred_fallthru
        _
    $region6: #{forward.12} parent=1 // loop_footer
      %s13 = sadd.s32 1, %s9
    $region7: #{forward.12} parent=1 // loop_footer_branch
      %8 = sbr.rel target = $region3
    $region8: #{forward.12} parent=1 // loop_exit
      _

// kernel: forward.13
$region0: #{forward.13}
  #allocation0 [shape = 'u32[]', space=smem, size = 0x4, offset = 0x4, fixed_abs, tag = 'smem constant byte address 0x4 - core index']
  #allocation1 [shape = 'u32[72,128]{1,0:T(1,128)}', space=vmem, size = 0x9000, scoped, tag = 'internal scratch']
  %s0 = inlined_call_operand.vmem [shape: f32[8,216], index: 0, kind: input, shape index: {}]
  %s1 = inlined_call_operand.vmem [shape: bf16[216,8192], index: 1, kind: input, shape index: {}]
  %s2 = inlined_call_operand.vmem [shape: f32[8,1], index: 2, kind: input, shape index: {}]
  %s3 = inlined_call_operand.vmem [shape: f32[16,8], index: 3, kind: input, shape index: {}]
  %s4 = inlined_call_operand.vmem [shape: f32[16,1], index: 4, kind: input, shape index: {}]
  %s5 = inlined_call_operand.vmem [shape: f32[16,8192], index: 5, kind: output, shape index: {}]
  %s6 = sld [smem:[#allocation0]]
  $region95: #{forward.13} parent=0
    _
  %s8 = ssub.s32 1, %s6
  %s9 = scalar_select 0, %s8, %s6
  $region1: #{forward.13} parent=0
    #allocation2 [shape = 'u8[1769472]{0}', space=vmem, size = 0x1b0000, scoped, tag = 'input window, operand 1']
    #allocation3 [shape = 'u8[262144]{0}', space=vmem, size = 0x40000, scoped, tag = 'output window, operand 0']
    loop: start=0, step=1, limit=6
    $region2: #{forward.13} parent=1 // loop_pre_header
      _
    $region3: #{forward.13} parent=1 // loop_header
      %s11 = sphi 0, %s15
      %p12 = scmp.ge.s32.totalorder %s11, 6
      %s19 = sphi 0, %s19
      %s21 = sphi 0, %s19
      %s22 = sphi 0, %s21
      %s36 = sphi 0, %s22
      %s42 = sphi 0, %s44
      %s45 = sphi 0, %s42
      %s46 = sphi 0, %s45
      %s62 = sphi 0, %s46
      %s66 = sphi 0, %s66
      %s68 = sphi 0, %s66
      %s69 = sphi 0, %s68
      %s83 = sphi 0, %s69
      %s87 = sphi 0, %s87
      %s89 = sphi 0, %s87
      %s90 = sphi 0, %s89
      %s104 = sphi 0, %s90
      %s108 = sphi 0, %s108
      %s110 = sphi 0, %s108
      %s111 = sphi 0, %s110
      %s125 = sphi 0, %s111
      %s131 = sphi 0, %s133
      %s134 = sphi 0, %s131
      %s135 = sphi 0, %s134
      %s151 = sphi 0, %s135
    $region4: #{forward.13} parent=1 // loop_header_branch
      %14 = sbr.rel (%p12) target = $region8
    $region5: #{forward.13} parent=1 // loop_body
      %s16 = ssub.s32 %s11, 1
      %s17 = ssub.s32 %s11, 2
      %s18 = sadd.s32 %s11, 1
      %s20 = sadd.s32 %s19, 1
      %p23 = scmp.eq.s32.totalorder %s11, 3
      %p24 = scmp.ne.s32.totalorder %s19, %s21
      %p25 = scmp.eq.s32.totalorder %s11, 0
      %p26 = por %p24, %p25
      %p27 = scmp.ne.s32.totalorder %s19, %s21
      %p28 = scmp.eq.s32.totalorder %s16, 3
      %p29 = por %p27, %p28
      %p30 = scmp.ne.s32.totalorder %s21, %s22
      %p31 = scmp.eq.s32.totalorder %s16, 0
      %p32 = por %p30, %p31
      %p33 = scmp.ne.s32.totalorder %s21, %s22
      %p34 = scmp.eq.s32.totalorder %s17, 3
      %p35 = por %p33, %p34
      %p37 = scmp.ne.s32.totalorder %s22, %s36
      %p38 = scmp.eq.s32.totalorder %s17, 0
      %p39 = por %p37, %p38
      %s40 = ssub.s32 %s11, %s18
      %p41 = scmp.eq.s32.totalorder %s40, 0
      %s43 = sadd.s32 %s42, 1
      %s44 = scalar_select %p41, %s42, %s43
      %p47 = pneg %p41
      %p48 = scmp.eq.s32.totalorder %s11, 3
      %p49 = por %p47, %p48
      %p50 = scmp.ne.s32.totalorder %s42, %s45
      %p51 = scmp.eq.s32.totalorder %s11, 0
      %p52 = por %p50, %p51
      %p53 = scmp.ne.s32.totalorder %s42, %s45
      %p54 = scmp.eq.s32.totalorder %s16, 3
      %p55 = por %p53, %p54
      %p56 = scmp.ne.s32.totalorder %s45, %s46
      %p57 = scmp.eq.s32.totalorder %s16, 0
      %p58 = por %p56, %p57
      %p59 = scmp.ne.s32.totalorder %s45, %s46
      %p60 = scmp.eq.s32.totalorder %s17, 3
      %p61 = por %p59, %p60
      %p63 = scmp.ne.s32.totalorder %s46, %s62
      %p64 = scmp.eq.s32.totalorder %s17, 0
      %p65 = por %p63, %p64
      %s67 = sadd.s32 %s66, 1
      %p70 = scmp.eq.s32.totalorder %s11, 3
      %p71 = scmp.ne.s32.totalorder %s66, %s68
      %p72 = scmp.eq.s32.totalorder %s11, 0
      %p73 = por %p71, %p72
      %p74 = scmp.ne.s32.totalorder %s66, %s68
      %p75 = scmp.eq.s32.totalorder %s16, 3
      %p76 = por %p74, %p75
      %p77 = scmp.ne.s32.totalorder %s68, %s69
      %p78 = scmp.eq.s32.totalorder %s16, 0
      %p79 = por %p77, %p78
      %p80 = scmp.ne.s32.totalorder %s68, %s69
      %p81 = scmp.eq.s32.totalorder %s17, 3
      %p82 = por %p80, %p81
      %p84 = scmp.ne.s32.totalorder %s69, %s83
      %p85 = scmp.eq.s32.totalorder %s17, 0
      %p86 = por %p84, %p85
      %s88 = sadd.s32 %s87, 1
      %p91 = scmp.eq.s32.totalorder %s11, 3
      %p92 = scmp.ne.s32.totalorder %s87, %s89
      %p93 = scmp.eq.s32.totalorder %s11, 0
      %p94 = por %p92, %p93
      %p95 = scmp.ne.s32.totalorder %s87, %s89
      %p96 = scmp.eq.s32.totalorder %s16, 3
      %p97 = por %p95, %p96
      %p98 = scmp.ne.s32.totalorder %s89, %s90
      %p99 = scmp.eq.s32.totalorder %s16, 0
      %p100 = por %p98, %p99
      %p101 = scmp.ne.s32.totalorder %s89, %s90
      %p102 = scmp.eq.s32.totalorder %s17, 3
      %p103 = por %p101, %p102
      %p105 = scmp.ne.s32.totalorder %s90, %s104
      %p106 = scmp.eq.s32.totalorder %s17, 0
      %p107 = por %p105, %p106
      %s109 = sadd.s32 %s108, 1
      %p112 = scmp.eq.s32.totalorder %s11, 3
      %p113 = scmp.ne.s32.totalorder %s108, %s110
      %p114 = scmp.eq.s32.totalorder %s11, 0
      %p115 = por %p113, %p114
      %p116 = scmp.ne.s32.totalorder %s108, %s110
      %p117 = scmp.eq.s32.totalorder %s16, 3
      %p118 = por %p116, %p117
      %p119 = scmp.ne.s32.totalorder %s110, %s111
      %p120 = scmp.eq.s32.totalorder %s16, 0
      %p121 = por %p119, %p120
      %p122 = scmp.ne.s32.totalorder %s110, %s111
      %p123 = scmp.eq.s32.totalorder %s17, 3
      %p124 = por %p122, %p123
      %p126 = scmp.ne.s32.totalorder %s111, %s125
      %p127 = scmp.eq.s32.totalorder %s17, 0
      %p128 = por %p126, %p127
      %s129 = ssub.s32 %s11, %s18
      %p130 = scmp.eq.s32.totalorder %s129, 0
      %s132 = sadd.s32 %s131, 1
      %s133 = scalar_select %p130, %s131, %s132
      %p136 = pneg %p130
      %p137 = scmp.eq.s32.totalorder %s11, 3
      %p138 = por %p136, %p137
      %p139 = scmp.ne.s32.totalorder %s131, %s134
      %p140 = scmp.eq.s32.totalorder %s11, 0
      %p141 = por %p139, %p140
      %p142 = scmp.ne.s32.totalorder %s131, %s134
      %p143 = scmp.eq.s32.totalorder %s16, 3
      %p144 = por %p142, %p143
      %p145 = scmp.ne.s32.totalorder %s134, %s135
      %p146 = scmp.eq.s32.totalorder %s16, 0
      %p147 = por %p145, %p146
      %p148 = scmp.ne.s32.totalorder %s134, %s135
      %p149 = scmp.eq.s32.totalorder %s17, 3
      %p150 = por %p148, %p149
      %p152 = scmp.ne.s32.totalorder %s135, %s151
      %p153 = scmp.eq.s32.totalorder %s17, 0
      %p154 = por %p152, %p153
      %p155 = scmp.le.s32.totalorder 1, %s11
      %p156 = scmp.lt.s32.totalorder %s11, 5
      %p157 = pnand %p155, %p156
      %p158 = pneg %p157
      // Predicated region
      $region9: #{forward.13} parent=5 // pred_check
        _
      $region10: #{forward.13} parent=5 // pred_check_branch
        %160 = sbr.rel (%p157) target = $region12
      $region11: #{forward.13} parent=5 // pred_region
        %s161 = ssub.s32 %s11, 1
        // Predicated region
        $region13: #{forward.13} parent=11 // pred_check
          %p162 = pneg %p32
        $region14: #{forward.13} parent=11 // pred_check_branch
          %164 = sbr.rel (%p162) target = $region16
        $region15: #{forward.13} parent=11 // pred_region
          _
        $region16: #{forward.13} parent=11 // pred_fallthru
          _
        // Predicated region
        $region17: #{forward.13} parent=11 // pred_check
          %p165 = pneg %p79
        $region18: #{forward.13} parent=11 // pred_check_branch
          %167 = sbr.rel (%p165) target = $region20
        $region19: #{forward.13} parent=11 // pred_region
          _
        $region20: #{forward.13} parent=11 // pred_fallthru
          _
        // Predicated region
        $region21: #{forward.13} parent=11 // pred_check
          %p168 = pneg %p100
        $region22: #{forward.13} parent=11 // pred_check_branch
          %170 = sbr.rel (%p168) target = $region24
        $region23: #{forward.13} parent=11 // pred_region
          _
        $region24: #{forward.13} parent=11 // pred_fallthru
          _
        // Predicated region
        $region25: #{forward.13} parent=11 // pred_check
          %p171 = pneg %p121
        $region26: #{forward.13} parent=11 // pred_check_branch
          %173 = sbr.rel (%p171) target = $region28
        $region27: #{forward.13} parent=11 // pred_region
          _
        $region28: #{forward.13} parent=11 // pred_fallthru
          _
      $region12: #{forward.13} parent=5 // pred_fallthru
        _
      %p174 = scmp.lt.s32.totalorder %s11, 4
      // Predicated region
      $region29: #{forward.13} parent=5 // pred_check
        %p175 = pneg %p174
      $region30: #{forward.13} parent=5 // pred_check_branch
        %177 = sbr.rel (%p175) target = $region32
      $region31: #{forward.13} parent=5 // pred_region
        // Predicated region
        $region33: #{forward.13} parent=31 // pred_check
          %p178 = pneg %p52
        $region34: #{forward.13} parent=31 // pred_check_branch
          %180 = sbr.rel (%p178) target = $region36
        $region35: #{forward.13} parent=31 // pred_region
          %s181 = sand.u32 %s42, 1
          %s182 = sand.u32 %s42, 1
          %s183 = smul.addr %s182, 1728
          %s184 = scalar_lea.vmem [#allocation2], %s183
          %s185 = smul.u32 16, %s11
          %s186 = smul.addr %s185, 4
          %s187 = scalar_lea.vmem %s1, %s186
          // Predicated region
          $region37: #{forward.13} parent=35 // pred_check
            _
          $region38: #{forward.13} parent=35 // pred_check_branch
            %189 = sbr.rel (0) target = $region40
          $region39: #{forward.13} parent=35 // pred_region
            // Predicated region
            $region41: #{forward.13} parent=39 // pred_check
              _
            $region42: #{forward.13} parent=39 // pred_check_branch
              %191 = sbr.rel (0) target = $region44
            $region43: #{forward.13} parent=39 // pred_region
              loop: start=0, step=1, limit=1
              $region45: #{forward.13} parent=43 // loop_pre_header
                _
              $region46: #{forward.13} parent=43 // loop_header
                %s193 = sphi 0, %s197
                %p194 = scmp.ge.s32.totalorder %s193, 1
                %s198 = sphi %s187, %s187
                %s199 = sphi %s184, %s184
              $region47: #{forward.13} parent=43 // loop_header_branch
                %196 = sbr.rel (%p194) target = $region51
              $region48: #{forward.13} parent=43 // loop_body
                %v200 = vld [vmem:[%s198] sm:$0xff]
                %201 = vst [vmem:[%s199] sm:$0xff] %v200
                %v202 = vld [vmem:[%s198 + $0x8] sm:$0xff]
                %203 = vst [vmem:[%s199 + $0x8] sm:$0xff] %v202
                %v204 = vld [vmem:[%s198 + $0x10] sm:$0xff]
                %205 = vst [vmem:[%s199 + $0x10] sm:$0xff] %v204
                %v206 = vld [vmem:[%s198 + $0x18] sm:$0xff]
                %207 = vst [vmem:[%s199 + $0x18] sm:$0xff] %v206
                %v208 = vld [vmem:[%s198 + $0x20] sm:$0xff]
                %209 = vst [vmem:[%s199 + $0x20] sm:$0xff] %v208
                %v210 = vld [vmem:[%s198 + $0x28] sm:$0xff]
                %211 = vst [vmem:[%s199 + $0x28] sm:$0xff] %v210
                %v212 = vld [vmem:[%s198 + $0x30] sm:$0xff]
                %213 = vst [vmem:[%s199 + $0x30] sm:$0xff] %v212
                %v214 = vld [vmem:[%s198 + $0x38] sm:$0xff]
                %215 = vst [vmem:[%s199 + $0x38] sm:$0xff] %v214
                %v216 = vld [vmem:[%s198 + $0x100] sm:$0xff]
                %217 = vst [vmem:[%s199 + $0x40] sm:$0xff] %v216
                %v218 = vld [vmem:[%s198 + $0x108] sm:$0xff]
                %219 = vst [vmem:[%s199 + $0x48] sm:$0xff] %v218
                %v220 = vld [vmem:[%s198 + $0x110] sm:$0xff]
                %221 = vst [vmem:[%s199 + $0x50] sm:$0xff] %v220
                %v222 = vld [vmem:[%s198 + $0x118] sm:$0xff]
                %223 = vst [vmem:[%s199 + $0x58] sm:$0xff] %v222
                %v224 = vld [vmem:[%s198 + $0x120] sm:$0xff]
                %225 = vst [vmem:[%s199 + $0x60] sm:$0xff] %v224
                %v226 = vld [vmem:[%s198 + $0x128] sm:$0xff]
                %227 = vst [vmem:[%s199 + $0x68] sm:$0xff] %v226
                %v228 = vld [vmem:[%s198 + $0x130] sm:$0xff]
                %229 = vst [vmem:[%s199 + $0x70] sm:$0xff] %v228
                %v230 = vld [vmem:[%s198 + $0x138] sm:$0xff]
                %231 = vst [vmem:[%s199 + $0x78] sm:$0xff] %v230
                %v232 = vld [vmem:[%s198 + $0x200] sm:$0xff]
                %233 = vst [vmem:[%s199 + $0x80] sm:$0xff] %v232
                %v234 = vld [vmem:[%s198 + $0x208] sm:$0xff]
                %235 = vst [vmem:[%s199 + $0x88] sm:$0xff] %v234
                %v236 = vld [vmem:[%s198 + $0x210] sm:$0xff]
                %237 = vst [vmem:[%s199 + $0x90] sm:$0xff] %v236
                %v238 = vld [vmem:[%s198 + $0x218] sm:$0xff]
                %239 = vst [vmem:[%s199 + $0x98] sm:$0xff] %v238
                %v240 = vld [vmem:[%s198 + $0x220] sm:$0xff]
                %241 = vst [vmem:[%s199 + $0xa0] sm:$0xff] %v240
                %v242 = vld [vmem:[%s198 + $0x228] sm:$0xff]
                %243 = vst [vmem:[%s199 + $0xa8] sm:$0xff] %v242
                %v244 = vld [vmem:[%s198 + $0x230] sm:$0xff]
                %245 = vst [vmem:[%s199 + $0xb0] sm:$0xff] %v244
                %v246 = vld [vmem:[%s198 + $0x238] sm:$0xff]
                %247 = vst [vmem:[%s199 + $0xb8] sm:$0xff] %v246
                %v248 = vld [vmem:[%s198 + $0x300] sm:$0xff]
                %249 = vst [vmem:[%s199 + $0xc0] sm:$0xff] %v248
                %v250 = vld [vmem:[%s198 + $0x308] sm:$0xff]
                %251 = vst [vmem:[%s199 + $0xc8] sm:$0xff] %v250
                %v252 = vld [vmem:[%s198 + $0x310] sm:$0xff]
                %253 = vst [vmem:[%s199 + $0xd0] sm:$0xff] %v252
                %v254 = vld [vmem:[%s198 + $0x318] sm:$0xff]
                %255 = vst [vmem:[%s199 + $0xd8] sm:$0xff] %v254
                %v256 = vld [vmem:[%s198 + $0x320] sm:$0xff]
                %257 = vst [vmem:[%s199 + $0xe0] sm:$0xff] %v256
                %v258 = vld [vmem:[%s198 + $0x328] sm:$0xff]
                %259 = vst [vmem:[%s199 + $0xe8] sm:$0xff] %v258
                %v260 = vld [vmem:[%s198 + $0x330] sm:$0xff]
                %261 = vst [vmem:[%s199 + $0xf0] sm:$0xff] %v260
                %v262 = vld [vmem:[%s198 + $0x338] sm:$0xff]
                %263 = vst [vmem:[%s199 + $0xf8] sm:$0xff] %v262
                %v264 = vld [vmem:[%s198 + $0x400] sm:$0xff]
                %265 = vst [vmem:[%s199 + $0x100] sm:$0xff] %v264
                %v266 = vld [vmem:[%s198 + $0x408] sm:$0xff]
                %267 = vst [vmem:[%s199 + $0x108] sm:$0xff] %v266
                %v268 = vld [vmem:[%s198 + $0x410] sm:$0xff]
                %269 = vst [vmem:[%s199 + $0x110] sm:$0xff] %v268
                %v270 = vld [vmem:[%s198 + $0x418] sm:$0xff]
                %271 = vst [vmem:[%s199 + $0x118] sm:$0xff] %v270
                %v272 = vld [vmem:[%s198 + $0x420] sm:$0xff]
                %273 = vst [vmem:[%s199 + $0x120] sm:$0xff] %v272
                %v274 = vld [vmem:[%s198 + $0x428] sm:$0xff]
                %275 = vst [vmem:[%s199 + $0x128] sm:$0xff] %v274
                %v276 = vld [vmem:[%s198 + $0x430] sm:$0xff]
                %277 = vst [vmem:[%s199 + $0x130] sm:$0xff] %v276
                %v278 = vld [vmem:[%s198 + $0x438] sm:$0xff]
                %279 = vst [vmem:[%s199 + $0x138] sm:$0xff] %v278
                %v280 = vld [vmem:[%s198 + $0x500] sm:$0xff]
                %281 = vst [vmem:[%s199 + $0x140] sm:$0xff] %v280
                %v282 = vld [vmem:[%s198 + $0x508] sm:$0xff]
                %283 = vst [vmem:[%s199 + $0x148] sm:$0xff] %v282
                %v284 = vld [vmem:[%s198 + $0x510] sm:$0xff]
                %285 = vst [vmem:[%s199 + $0x150] sm:$0xff] %v284
                %v286 = vld [vmem:[%s198 + $0x518] sm:$0xff]
                %287 = vst [vmem:[%s199 + $0x158] sm:$0xff] %v286
                %v288 = vld [vmem:[%s198 + $0x520] sm:$0xff]
                %289 = vst [vmem:[%s199 + $0x160] sm:$0xff] %v288
                %v290 = vld [vmem:[%s198 + $0x528] sm:$0xff]
                %291 = vst [vmem:[%s199 + $0x168] sm:$0xff] %v290
                %v292 = vld [vmem:[%s198 + $0x530] sm:$0xff]
                %293 = vst [vmem:[%s199 + $0x170] sm:$0xff] %v292
                %v294 = vld [vmem:[%s198 + $0x538] sm:$0xff]
                %295 = vst [vmem:[%s199 + $0x178] sm:$0xff] %v294
                %v296 = vld [vmem:[%s198 + $0x600] sm:$0xff]
                %297 = vst [vmem:[%s199 + $0x180] sm:$0xff] %v296
                %v298 = vld [vmem:[%s198 + $0x608] sm:$0xff]
                %299 = vst [vmem:[%s199 + $0x188] sm:$0xff] %v298
                %v300 = vld [vmem:[%s198 + $0x610] sm:$0xff]
                %301 = vst [vmem:[%s199 + $0x190] sm:$0xff] %v300
                %v302 = vld [vmem:[%s198 + $0x618] sm:$0xff]
                %303 = vst [vmem:[%s199 + $0x198] sm:$0xff] %v302
                %v304 = vld [vmem:[%s198 + $0x620] sm:$0xff]
                %305 = vst [vmem:[%s199 + $0x1a0] sm:$0xff] %v304
                %v306 = vld [vmem:[%s198 + $0x628] sm:$0xff]
                %307 = vst [vmem:[%s199 + $0x1a8] sm:$0xff] %v306
                %v308 = vld [vmem:[%s198 + $0x630] sm:$0xff]
                %309 = vst [vmem:[%s199 + $0x1b0] sm:$0xff] %v308
                %v310 = vld [vmem:[%s198 + $0x638] sm:$0xff]
                %311 = vst [vmem:[%s199 + $0x1b8] sm:$0xff] %v310
                %v312 = vld [vmem:[%s198 + $0x700] sm:$0xff]
                %313 = vst [vmem:[%s199 + $0x1c0] sm:$0xff] %v312
                %v314 = vld [vmem:[%s198 + $0x708] sm:$0xff]
                %315 = vst [vmem:[%s199 + $0x1c8] sm:$0xff] %v314
                %v316 = vld [vmem:[%s198 + $0x710] sm:$0xff]
                %317 = vst [vmem:[%s199 + $0x1d0] sm:$0xff] %v316
                %v318 = vld [vmem:[%s198 + $0x718] sm:$0xff]
                %319 = vst [vmem:[%s199 + $0x1d8] sm:$0xff] %v318
                %v320 = vld [vmem:[%s198 + $0x720] sm:$0xff]
                %321 = vst [vmem:[%s199 + $0x1e0] sm:$0xff] %v320
                %v322 = vld [vmem:[%s198 + $0x728] sm:$0xff]
                %323 = vst [vmem:[%s199 + $0x1e8] sm:$0xff] %v322
                %v324 = vld [vmem:[%s198 + $0x730] sm:$0xff]
                %325 = vst [vmem:[%s199 + $0x1f0] sm:$0xff] %v324
                %v326 = vld [vmem:[%s198 + $0x738] sm:$0xff]
                %327 = vst [vmem:[%s199 + $0x1f8] sm:$0xff] %v326
                %v328 = vld [vmem:[%s198 + $0x800] sm:$0xff]
                %329 = vst [vmem:[%s199 + $0x200] sm:$0xff] %v328
                %v330 = vld [vmem:[%s198 + $0x808] sm:$0xff]
                %331 = vst [vmem:[%s199 + $0x208] sm:$0xff] %v330
                %v332 = vld [vmem:[%s198 + $0x810] sm:$0xff]
                %333 = vst [vmem:[%s199 + $0x210] sm:$0xff] %v332
                %v334 = vld [vmem:[%s198 + $0x818] sm:$0xff]
                %335 = vst [vmem:[%s199 + $0x218] sm:$0xff] %v334
                %v336 = vld [vmem:[%s198 + $0x820] sm:$0xff]
                %337 = vst [vmem:[%s199 + $0x220] sm:$0xff] %v336
                %v338 = vld [vmem:[%s198 + $0x828] sm:$0xff]
                %339 = vst [vmem:[%s199 + $0x228] sm:$0xff] %v338
                %v340 = vld [vmem:[%s198 + $0x830] sm:$0xff]
                %341 = vst [vmem:[%s199 + $0x230] sm:$0xff] %v340
                %v342 = vld [vmem:[%s198 + $0x838] sm:$0xff]
                %343 = vst [vmem:[%s199 + $0x238] sm:$0xff] %v342
                %v344 = vld [vmem:[%s198 + $0x900] sm:$0xff]
                %345 = vst [vmem:[%s199 + $0x240] sm:$0xff] %v344
                %v346 = vld [vmem:[%s198 + $0x908] sm:$0xff]
                %347 = vst [vmem:[%s199 + $0x248] sm:$0xff] %v346
                %v348 = vld [vmem:[%s198 + $0x910] sm:$0xff]
                %349 = vst [vmem:[%s199 + $0x250] sm:$0xff] %v348
                %v350 = vld [vmem:[%s198 + $0x918] sm:$0xff]
                %351 = vst [vmem:[%s199 + $0x258] sm:$0xff] %v350
                %v352 = vld [vmem:[%s198 + $0x920] sm:$0xff]
                %353 = vst [vmem:[%s199 + $0x260] sm:$0xff] %v352
                %v354 = vld [vmem:[%s198 + $0x928] sm:$0xff]
                %355 = vst [vmem:[%s199 + $0x268] sm:$0xff] %v354
                %v356 = vld [vmem:[%s198 + $0x930] sm:$0xff]
                %357 = vst [vmem:[%s199 + $0x270] sm:$0xff] %v356
                %v358 = vld [vmem:[%s198 + $0x938] sm:$0xff]
                %359 = vst [vmem:[%s199 + $0x278] sm:$0xff] %v358
                %v360 = vld [vmem:[%s198 + $0xa00] sm:$0xff]
                %361 = vst [vmem:[%s199 + $0x280] sm:$0xff] %v360
                %v362 = vld [vmem:[%s198 + $0xa08] sm:$0xff]
                %363 = vst [vmem:[%s199 + $0x288] sm:$0xff] %v362
                %v364 = vld [vmem:[%s198 + $0xa10] sm:$0xff]
                %365 = vst [vmem:[%s199 + $0x290] sm:$0xff] %v364
                %v366 = vld [vmem:[%s198 + $0xa18] sm:$0xff]
                %367 = vst [vmem:[%s199 + $0x298] sm:$0xff] %v366
                %v368 = vld [vmem:[%s198 + $0xa20] sm:$0xff]
                %369 = vst [vmem:[%s199 + $0x2a0] sm:$0xff] %v368
                %v370 = vld [vmem:[%s198 + $0xa28] sm:$0xff]
                %371 = vst [vmem:[%s199 + $0x2a8] sm:$0xff] %v370
                %v372 = vld [vmem:[%s198 + $0xa30] sm:$0xff]
                %373 = vst [vmem:[%s199 + $0x2b0] sm:$0xff] %v372
                %v374 = vld [vmem:[%s198 + $0xa38] sm:$0xff]
                %375 = vst [vmem:[%s199 + $0x2b8] sm:$0xff] %v374
                %v376 = vld [vmem:[%s198 + $0xb00] sm:$0xff]
                %377 = vst [vmem:[%s199 + $0x2c0] sm:$0xff] %v376
                %v378 = vld [vmem:[%s198 + $0xb08] sm:$0xff]
                %379 = vst [vmem:[%s199 + $0x2c8] sm:$0xff] %v378
                %v380 = vld [vmem:[%s198 + $0xb10] sm:$0xff]
                %381 = vst [vmem:[%s199 + $0x2d0] sm:$0xff] %v380
                %v382 = vld [vmem:[%s198 + $0xb18] sm:$0xff]
                %383 = vst [vmem:[%s199 + $0x2d8] sm:$0xff] %v382
                %v384 = vld [vmem:[%s198 + $0xb20] sm:$0xff]
                %385 = vst [vmem:[%s199 + $0x2e0] sm:$0xff] %v384
                %v386 = vld [vmem:[%s198 + $0xb28] sm:$0xff]
                %387 = vst [vmem:[%s199 + $0x2e8] sm:$0xff] %v386
                %v388 = vld [vmem:[%s198 + $0xb30] sm:$0xff]
                %389 = vst [vmem:[%s199 + $0x2f0] sm:$0xff] %v388
                %v390 = vld [vmem:[%s198 + $0xb38] sm:$0xff]
                %391 = vst [vmem:[%s199 + $0x2f8] sm:$0xff] %v390
                %v392 = vld [vmem:[%s198 + $0xc00] sm:$0xff]
                %393 = vst [vmem:[%s199 + $0x300] sm:$0xff] %v392
                %v394 = vld [vmem:[%s198 + $0xc08] sm:$0xff]
                %395 = vst [vmem:[%s199 + $0x308] sm:$0xff] %v394
                %v396 = vld [vmem:[%s198 + $0xc10] sm:$0xff]
                %397 = vst [vmem:[%s199 + $0x310] sm:$0xff] %v396
                %v398 = vld [vmem:[%s198 + $0xc18] sm:$0xff]
                %399 = vst [vmem:[%s199 + $0x318] sm:$0xff] %v398
                %v400 = vld [vmem:[%s198 + $0xc20] sm:$0xff]
                %401 = vst [vmem:[%s199 + $0x320] sm:$0xff] %v400
                %v402 = vld [vmem:[%s198 + $0xc28] sm:$0xff]
                %403 = vst [vmem:[%s199 + $0x328] sm:$0xff] %v402
                %v404 = vld [vmem:[%s198 + $0xc30] sm:$0xff]
                %405 = vst [vmem:[%s199 + $0x330] sm:$0xff] %v404
                %v406 = vld [vmem:[%s198 + $0xc38] sm:$0xff]
                %407 = vst [vmem:[%s199 + $0x338] sm:$0xff] %v406
                %v408 = vld [vmem:[%s198 + $0xd00] sm:$0xff]
                %409 = vst [vmem:[%s199 + $0x340] sm:$0xff] %v408
                %v410 = vld [vmem:[%s198 + $0xd08] sm:$0xff]
                %411 = vst [vmem:[%s199 + $0x348] sm:$0xff] %v410
                %v412 = vld [vmem:[%s198 + $0xd10] sm:$0xff]
                %413 = vst [vmem:[%s199 + $0x350] sm:$0xff] %v412
                %v414 = vld [vmem:[%s198 + $0xd18] sm:$0xff]
                %415 = vst [vmem:[%s199 + $0x358] sm:$0xff] %v414
                %v416 = vld [vmem:[%s198 + $0xd20] sm:$0xff]
                %417 = vst [vmem:[%s199 + $0x360] sm:$0xff] %v416
                %v418 = vld [vmem:[%s198 + $0xd28] sm:$0xff]
                %419 = vst [vmem:[%s199 + $0x368] sm:$0xff] %v418
                %v420 = vld [vmem:[%s198 + $0xd30] sm:$0xff]
                %421 = vst [vmem:[%s199 + $0x370] sm:$0xff] %v420
                %v422 = vld [vmem:[%s198 + $0xd38] sm:$0xff]
                %423 = vst [vmem:[%s199 + $0x378] sm:$0xff] %v422
                %v424 = vld [vmem:[%s198 + $0xe00] sm:$0xff]
                %425 = vst [vmem:[%s199 + $0x380] sm:$0xff] %v424
                %v426 = vld [vmem:[%s198 + $0xe08] sm:$0xff]
                %427 = vst [vmem:[%s199 + $0x388] sm:$0xff] %v426
                %v428 = vld [vmem:[%s198 + $0xe10] sm:$0xff]
                %429 = vst [vmem:[%s199 + $0x390] sm:$0xff] %v428
                %v430 = vld [vmem:[%s198 + $0xe18] sm:$0xff]
                %431 = vst [vmem:[%s199 + $0x398] sm:$0xff] %v430
                %v432 = vld [vmem:[%s198 + $0xe20] sm:$0xff]
                %433 = vst [vmem:[%s199 + $0x3a0] sm:$0xff] %v432
                %v434 = vld [vmem:[%s198 + $0xe28] sm:$0xff]
                %435 = vst [vmem:[%s199 + $0x3a8] sm:$0xff] %v434
                %v436 = vld [vmem:[%s198 + $0xe30] sm:$0xff]
                %437 = vst [vmem:[%s199 + $0x3b0] sm:$0xff] %v436
                %v438 = vld [vmem:[%s198 + $0xe38] sm:$0xff]
                %439 = vst [vmem:[%s199 + $0x3b8] sm:$0xff] %v438
                %v440 = vld [vmem:[%s198 + $0xf00] sm:$0xff]
                %441 = vst [vmem:[%s199 + $0x3c0] sm:$0xff] %v440
                %v442 = vld [vmem:[%s198 + $0xf08] sm:$0xff]
                %443 = vst [vmem:[%s199 + $0x3c8] sm:$0xff] %v442
                %v444 = vld [vmem:[%s198 + $0xf10] sm:$0xff]
                %445 = vst [vmem:[%s199 + $0x3d0] sm:$0xff] %v444
                %v446 = vld [vmem:[%s198 + $0xf18] sm:$0xff]
                %447 = vst [vmem:[%s199 + $0x3d8] sm:$0xff] %v446
                %v448 = vld [vmem:[%s198 + $0xf20] sm:$0xff]
                %449 = vst [vmem:[%s199 + $0x3e0] sm:$0xff] %v448
                %v450 = vld [vmem:[%s198 + $0xf28] sm:$0xff]
                %451 = vst [vmem:[%s199 + $0x3e8] sm:$0xff] %v450
                %v452 = vld [vmem:[%s198 + $0xf30] sm:$0xff]
                %453 = vst [vmem:[%s199 + $0x3f0] sm:$0xff] %v452
                %v454 = vld [vmem:[%s198 + $0xf38] sm:$0xff]
                %455 = vst [vmem:[%s199 + $0x3f8] sm:$0xff] %v454
                %v456 = vld [vmem:[%s198 + $0x1000] sm:$0xff]
                %457 = vst [vmem:[%s199 + $0x400] sm:$0xff] %v456
                %v458 = vld [vmem:[%s198 + $0x1008] sm:$0xff]
                %459 = vst [vmem:[%s199 + $0x408] sm:$0xff] %v458
                %v460 = vld [vmem:[%s198 + $0x1010] sm:$0xff]
                %461 = vst [vmem:[%s199 + $0x410] sm:$0xff] %v460
                %v462 = vld [vmem:[%s198 + $0x1018] sm:$0xff]
                %463 = vst [vmem:[%s199 + $0x418] sm:$0xff] %v462
                %v464 = vld [vmem:[%s198 + $0x1020] sm:$0xff]
                %465 = vst [vmem:[%s199 + $0x420] sm:$0xff] %v464
                %v466 = vld [vmem:[%s198 + $0x1028] sm:$0xff]
                %467 = vst [vmem:[%s199 + $0x428] sm:$0xff] %v466
                %v468 = vld [vmem:[%s198 + $0x1030] sm:$0xff]
                %469 = vst [vmem:[%s199 + $0x430] sm:$0xff] %v468
                %v470 = vld [vmem:[%s198 + $0x1038] sm:$0xff]
                %471 = vst [vmem:[%s199 + $0x438] sm:$0xff] %v470
                %v472 = vld [vmem:[%s198 + $0x1100] sm:$0xff]
                %473 = vst [vmem:[%s199 + $0x440] sm:$0xff] %v472
                %v474 = vld [vmem:[%s198 + $0x1108] sm:$0xff]
                %475 = vst [vmem:[%s199 + $0x448] sm:$0xff] %v474
                %v476 = vld [vmem:[%s198 + $0x1110] sm:$0xff]
                %477 = vst [vmem:[%s199 + $0x450] sm:$0xff] %v476
                %v478 = vld [vmem:[%s198 + $0x1118] sm:$0xff]
                %479 = vst [vmem:[%s199 + $0x458] sm:$0xff] %v478
                %v480 = vld [vmem:[%s198 + $0x1120] sm:$0xff]
                %481 = vst [vmem:[%s199 + $0x460] sm:$0xff] %v480
                %v482 = vld [vmem:[%s198 + $0x1128] sm:$0xff]
                %483 = vst [vmem:[%s199 + $0x468] sm:$0xff] %v482
                %v484 = vld [vmem:[%s198 + $0x1130] sm:$0xff]
                %485 = vst [vmem:[%s199 + $0x470] sm:$0xff] %v484
                %v486 = vld [vmem:[%s198 + $0x1138] sm:$0xff]
                %487 = vst [vmem:[%s199 + $0x478] sm:$0xff] %v486
                %v488 = vld [vmem:[%s198 + $0x1200] sm:$0xff]
                %489 = vst [vmem:[%s199 + $0x480] sm:$0xff] %v488
                %v490 = vld [vmem:[%s198 + $0x1208] sm:$0xff]
                %491 = vst [vmem:[%s199 + $0x488] sm:$0xff] %v490
                %v492 = vld [vmem:[%s198 + $0x1210] sm:$0xff]
                %493 = vst [vmem:[%s199 + $0x490] sm:$0xff] %v492
                %v494 = vld [vmem:[%s198 + $0x1218] sm:$0xff]
                %495 = vst [vmem:[%s199 + $0x498] sm:$0xff] %v494
                %v496 = vld [vmem:[%s198 + $0x1220] sm:$0xff]
                %497 = vst [vmem:[%s199 + $0x4a0] sm:$0xff] %v496
                %v498 = vld [vmem:[%s198 + $0x1228] sm:$0xff]
                %499 = vst [vmem:[%s199 + $0x4a8] sm:$0xff] %v498
                %v500 = vld [vmem:[%s198 + $0x1230] sm:$0xff]
                %501 = vst [vmem:[%s199 + $0x4b0] sm:$0xff] %v500
                %v502 = vld [vmem:[%s198 + $0x1238] sm:$0xff]
                %503 = vst [vmem:[%s199 + $0x4b8] sm:$0xff] %v502
                %v504 = vld [vmem:[%s198 + $0x1300] sm:$0xff]
                %505 = vst [vmem:[%s199 + $0x4c0] sm:$0xff] %v504
                %v506 = vld [vmem:[%s198 + $0x1308] sm:$0xff]
                %507 = vst [vmem:[%s199 + $0x4c8] sm:$0xff] %v506
                %v508 = vld [vmem:[%s198 + $0x1310] sm:$0xff]
                %509 = vst [vmem:[%s199 + $0x4d0] sm:$0xff] %v508
                %v510 = vld [vmem:[%s198 + $0x1318] sm:$0xff]
                %511 = vst [vmem:[%s199 + $0x4d8] sm:$0xff] %v510
                %v512 = vld [vmem:[%s198 + $0x1320] sm:$0xff]
                %513 = vst [vmem:[%s199 + $0x4e0] sm:$0xff] %v512
                %v514 = vld [vmem:[%s198 + $0x1328] sm:$0xff]
                %515 = vst [vmem:[%s199 + $0x4e8] sm:$0xff] %v514
                %v516 = vld [vmem:[%s198 + $0x1330] sm:$0xff]
                %517 = vst [vmem:[%s199 + $0x4f0] sm:$0xff] %v516
                %v518 = vld [vmem:[%s198 + $0x1338] sm:$0xff]
                %519 = vst [vmem:[%s199 + $0x4f8] sm:$0xff] %v518
                %v520 = vld [vmem:[%s198 + $0x1400] sm:$0xff]
                %521 = vst [vmem:[%s199 + $0x500] sm:$0xff] %v520
                %v522 = vld [vmem:[%s198 + $0x1408] sm:$0xff]
                %523 = vst [vmem:[%s199 + $0x508] sm:$0xff] %v522
                %v524 = vld [vmem:[%s198 + $0x1410] sm:$0xff]
                %525 = vst [vmem:[%s199 + $0x510] sm:$0xff] %v524
                %v526 = vld [vmem:[%s198 + $0x1418] sm:$0xff]
                %527 = vst [vmem:[%s199 + $0x518] sm:$0xff] %v526
                %v528 = vld [vmem:[%s198 + $0x1420] sm:$0xff]
                %529 = vst [vmem:[%s199 + $0x520] sm:$0xff] %v528
                %v530 = vld [vmem:[%s198 + $0x1428] sm:$0xff]
                %531 = vst [vmem:[%s199 + $0x528] sm:$0xff] %v530
                %v532 = vld [vmem:[%s198 + $0x1430] sm:$0xff]
                %533 = vst [vmem:[%s199 + $0x530] sm:$0xff] %v532
                %v534 = vld [vmem:[%s198 + $0x1438] sm:$0xff]
                %535 = vst [vmem:[%s199 + $0x538] sm:$0xff] %v534
                %v536 = vld [vmem:[%s198 + $0x1500] sm:$0xff]
                %537 = vst [vmem:[%s199 + $0x540] sm:$0xff] %v536
                %v538 = vld [vmem:[%s198 + $0x1508] sm:$0xff]
                %539 = vst [vmem:[%s199 + $0x548] sm:$0xff] %v538
                %v540 = vld [vmem:[%s198 + $0x1510] sm:$0xff]
                %541 = vst [vmem:[%s199 + $0x550] sm:$0xff] %v540
                %v542 = vld [vmem:[%s198 + $0x1518] sm:$0xff]
                %543 = vst [vmem:[%s199 + $0x558] sm:$0xff] %v542
                %v544 = vld [vmem:[%s198 + $0x1520] sm:$0xff]
                %545 = vst [vmem:[%s199 + $0x560] sm:$0xff] %v544
                %v546 = vld [vmem:[%s198 + $0x1528] sm:$0xff]
                %547 = vst [vmem:[%s199 + $0x568] sm:$0xff] %v546
                %v548 = vld [vmem:[%s198 + $0x1530] sm:$0xff]
                %549 = vst [vmem:[%s199 + $0x570] sm:$0xff] %v548
                %v550 = vld [vmem:[%s198 + $0x1538] sm:$0xff]
                %551 = vst [vmem:[%s199 + $0x578] sm:$0xff] %v550
                %v552 = vld [vmem:[%s198 + $0x1600] sm:$0xff]
                %553 = vst [vmem:[%s199 + $0x580] sm:$0xff] %v552
                %v554 = vld [vmem:[%s198 + $0x1608] sm:$0xff]
                %555 = vst [vmem:[%s199 + $0x588] sm:$0xff] %v554
                %v556 = vld [vmem:[%s198 + $0x1610] sm:$0xff]
                %557 = vst [vmem:[%s199 + $0x590] sm:$0xff] %v556
                %v558 = vld [vmem:[%s198 + $0x1618] sm:$0xff]
                %559 = vst [vmem:[%s199 + $0x598] sm:$0xff] %v558
                %v560 = vld [vmem:[%s198 + $0x1620] sm:$0xff]
                %561 = vst [vmem:[%s199 + $0x5a0] sm:$0xff] %v560
                %v562 = vld [vmem:[%s198 + $0x1628] sm:$0xff]
                %563 = vst [vmem:[%s199 + $0x5a8] sm:$0xff] %v562
                %v564 = vld [vmem:[%s198 + $0x1630] sm:$0xff]
                %565 = vst [vmem:[%s199 + $0x5b0] sm:$0xff] %v564
                %v566 = vld [vmem:[%s198 + $0x1638] sm:$0xff]
                %567 = vst [vmem:[%s199 + $0x5b8] sm:$0xff] %v566
                %v568 = vld [vmem:[%s198 + $0x1700] sm:$0xff]
                %569 = vst [vmem:[%s199 + $0x5c0] sm:$0xff] %v568
                %v570 = vld [vmem:[%s198 + $0x1708] sm:$0xff]
                %571 = vst [vmem:[%s199 + $0x5c8] sm:$0xff] %v570
                %v572 = vld [vmem:[%s198 + $0x1710] sm:$0xff]
                %573 = vst [vmem:[%s199 + $0x5d0] sm:$0xff] %v572
                %v574 = vld [vmem:[%s198 + $0x1718] sm:$0xff]
                %575 = vst [vmem:[%s199 + $0x5d8] sm:$0xff] %v574
                %v576 = vld [vmem:[%s198 + $0x1720] sm:$0xff]
                %577 = vst [vmem:[%s199 + $0x5e0] sm:$0xff] %v576
                %v578 = vld [vmem:[%s198 + $0x1728] sm:$0xff]
                %579 = vst [vmem:[%s199 + $0x5e8] sm:$0xff] %v578
                %v580 = vld [vmem:[%s198 + $0x1730] sm:$0xff]
                %581 = vst [vmem:[%s199 + $0x5f0] sm:$0xff] %v580
                %v582 = vld [vmem:[%s198 + $0x1738] sm:$0xff]
                %583 = vst [vmem:[%s199 + $0x5f8] sm:$0xff] %v582
                %v584 = vld [vmem:[%s198 + $0x1800] sm:$0xff]
                %585 = vst [vmem:[%s199 + $0x600] sm:$0xff] %v584
                %v586 = vld [vmem:[%s198 + $0x1808] sm:$0xff]
                %587 = vst [vmem:[%s199 + $0x608] sm:$0xff] %v586
                %v588 = vld [vmem:[%s198 + $0x1810] sm:$0xff]
                %589 = vst [vmem:[%s199 + $0x610] sm:$0xff] %v588
                %v590 = vld [vmem:[%s198 + $0x1818] sm:$0xff]
                %591 = vst [vmem:[%s199 + $0x618] sm:$0xff] %v590
                %v592 = vld [vmem:[%s198 + $0x1820] sm:$0xff]
                %593 = vst [vmem:[%s199 + $0x620] sm:$0xff] %v592
                %v594 = vld [vmem:[%s198 + $0x1828] sm:$0xff]
                %595 = vst [vmem:[%s199 + $0x628] sm:$0xff] %v594
                %v596 = vld [vmem:[%s198 + $0x1830] sm:$0xff]
                %597 = vst [vmem:[%s199 + $0x630] sm:$0xff] %v596
                %v598 = vld [vmem:[%s198 + $0x1838] sm:$0xff]
                %599 = vst [vmem:[%s199 + $0x638] sm:$0xff] %v598
                %v600 = vld [vmem:[%s198 + $0x1900] sm:$0xff]
                %601 = vst [vmem:[%s199 + $0x640] sm:$0xff] %v600
                %v602 = vld [vmem:[%s198 + $0x1908] sm:$0xff]
                %603 = vst [vmem:[%s199 + $0x648] sm:$0xff] %v602
                %v604 = vld [vmem:[%s198 + $0x1910] sm:$0xff]
                %605 = vst [vmem:[%s199 + $0x650] sm:$0xff] %v604
                %v606 = vld [vmem:[%s198 + $0x1918] sm:$0xff]
                %607 = vst [vmem:[%s199 + $0x658] sm:$0xff] %v606
                %v608 = vld [vmem:[%s198 + $0x1920] sm:$0xff]
                %609 = vst [vmem:[%s199 + $0x660] sm:$0xff] %v608
                %v610 = vld [vmem:[%s198 + $0x1928] sm:$0xff]
                %611 = vst [vmem:[%s199 + $0x668] sm:$0xff] %v610
                %v612 = vld [vmem:[%s198 + $0x1930] sm:$0xff]
                %613 = vst [vmem:[%s199 + $0x670] sm:$0xff] %v612
                %v614 = vld [vmem:[%s198 + $0x1938] sm:$0xff]
                %615 = vst [vmem:[%s199 + $0x678] sm:$0xff] %v614
                %v616 = vld [vmem:[%s198 + $0x1a00] sm:$0xff]
                %617 = vst [vmem:[%s199 + $0x680] sm:$0xff] %v616
                %v618 = vld [vmem:[%s198 + $0x1a08] sm:$0xff]
                %619 = vst [vmem:[%s199 + $0x688] sm:$0xff] %v618
                %v620 = vld [vmem:[%s198 + $0x1a10] sm:$0xff]
                %621 = vst [vmem:[%s199 + $0x690] sm:$0xff] %v620
                %v622 = vld [vmem:[%s198 + $0x1a18] sm:$0xff]
                %623 = vst [vmem:[%s199 + $0x698] sm:$0xff] %v622
                %v624 = vld [vmem:[%s198 + $0x1a20] sm:$0xff]
                %625 = vst [vmem:[%s199 + $0x6a0] sm:$0xff] %v624
                %v626 = vld [vmem:[%s198 + $0x1a28] sm:$0xff]
                %627 = vst [vmem:[%s199 + $0x6a8] sm:$0xff] %v626
                %v628 = vld [vmem:[%s198 + $0x1a30] sm:$0xff]
                %629 = vst [vmem:[%s199 + $0x6b0] sm:$0xff] %v628
                %v630 = vld [vmem:[%s198 + $0x1a38] sm:$0xff]
                %631 = vst [vmem:[%s199 + $0x6b8] sm:$0xff] %v630
              $region49: #{forward.13} parent=43 // loop_footer
                %s197 = sadd.s32 1, %s193
              $region50: #{forward.13} parent=43 // loop_footer_branch
                %192 = sbr.rel target = $region46
              $region51: #{forward.13} parent=43 // loop_exit
                _
            $region44: #{forward.13} parent=39 // pred_fallthru
              _
            // Predicated region
            $region52: #{forward.13} parent=39 // pred_check
              _
            $region53: #{forward.13} parent=39 // pred_check_branch
              %633 = sbr.rel target = $region55
            $region54: #{forward.13} parent=39 // pred_region
              _
            $region55: #{forward.13} parent=39 // pred_fallthru
              _
          $region40: #{forward.13} parent=35 // pred_fallthru
            _
          %634 = vnop
        $region36: #{forward.13} parent=31 // pred_fallthru
          _
      $region32: #{forward.13} parent=5 // pred_fallthru
        _
      %p635 = scmp.le.s32.totalorder 1, %s11
      %p636 = scmp.lt.s32.totalorder %s11, 5
      %p637 = pnand %p635, %p636
      %p638 = pneg %p637
      // Predicated region
      $region56: #{forward.13} parent=5 // pred_check
        _
      $region57: #{forward.13} parent=5 // pred_check_branch
        %640 = sbr.rel (%p637) target = $region59
      $region58: #{forward.13} parent=5 // pred_region
        %s641 = ssub.s32 %s11, 1
        %s642 = sand.u32 %s45, 1
        %s643 = sand.u32 %s45, 1
        %s644 = smul.addr %s643, 1728
        %s645 = scalar_lea.vmem [#allocation2], %s644
        // Predicated region
        $region60: #{forward.13} parent=58 // pred_check
          %p646 = pneg %p58
        $region61: #{forward.13} parent=58 // pred_check_branch
          %648 = sbr.rel (%p646) target = $region63
        $region62: #{forward.13} parent=58 // pred_region
          _
        $region63: #{forward.13} parent=58 // pred_fallthru
          _
        %p649 = pneg %p32
        %p650 = pneg %p29
        %s651 = sand.u32 %s45, 1
        %s652 = sand.u32 %s45, 1
        %s653 = smul.addr %s652, 1728
        %s654 = scalar_lea.vmem [#allocation2], %s653
        %p655 = pneg %p58
        %p656 = pneg %p55
        %p657 = pneg %p79
        %p658 = pneg %p76
        %p659 = pneg %p100
        %p660 = pneg %p97
        %p661 = pneg %p121
        %p662 = pneg %p118
        %p663 = pneg %p147
        %p664 = pneg %p144
        %s665 = sand.u32 %s134, 1
        %s666 = sand.u32 %s134, 1
        %s667 = smul.addr %s666, 256
        %s668 = scalar_lea.vmem [#allocation3], %s667
        %s669 = smul.u32 16, %s16
        %s670 = smul.u32 16, %s16
        %v671 = vld [vmem:[%s0] sm:$0xff]
        %v672 = vld [vmem:[%s0 + $0x8] sm:$0xff]
        %v673 = vld [vmem:[%s645] sm:$0xff]
        %v674 = vld [vmem:[%s645 + $0x8] sm:$0xff]
        %v675 = vld [vmem:[%s645 + $0x10] sm:$0xff]
        %v676 = vld [vmem:[%s645 + $0x18] sm:$0xff]
        %v677 = vld [vmem:[%s645 + $0x20] sm:$0xff]
        %v678 = vld [vmem:[%s645 + $0x28] sm:$0xff]
        %v679 = vld [vmem:[%s645 + $0x30] sm:$0xff]
        %v680 = vld [vmem:[%s645 + $0x38] sm:$0xff]
        %v681 = vld [vmem:[%s645 + $0x40] sm:$0xff]
        %v682 = vld [vmem:[%s645 + $0x48] sm:$0xff]
        %v683 = vld [vmem:[%s645 + $0x50] sm:$0xff]
        %v684 = vld [vmem:[%s645 + $0x58] sm:$0xff]
        %v685 = vld [vmem:[%s645 + $0x60] sm:$0xff]
        %v686 = vld [vmem:[%s645 + $0x68] sm:$0xff]
        %v687 = vld [vmem:[%s645 + $0x70] sm:$0xff]
        %v688 = vld [vmem:[%s645 + $0x78] sm:$0xff]
        %v689 = vld [vmem:[%s645 + $0x80] sm:$0xff]
        %v690 = vld [vmem:[%s645 + $0x88] sm:$0xff]
        %v691 = vld [vmem:[%s645 + $0x90] sm:$0xff]
        %v692 = vld [vmem:[%s645 + $0x98] sm:$0xff]
        %v693 = vld [vmem:[%s645 + $0xa0] sm:$0xff]
        %v694 = vld [vmem:[%s645 + $0xa8] sm:$0xff]
        %v695 = vld [vmem:[%s645 + $0xb0] sm:$0xff]
        %v696 = vld [vmem:[%s645 + $0xb8] sm:$0xff]
        %v697 = vld [vmem:[%s645 + $0xc0] sm:$0xff]
        %v698 = vld [vmem:[%s645 + $0xc8] sm:$0xff]
        %v699 = vld [vmem:[%s645 + $0xd0] sm:$0xff]
        %v700 = vld [vmem:[%s645 + $0xd8] sm:$0xff]
        %v701 = vld [vmem:[%s645 + $0xe0] sm:$0xff]
        %v702 = vld [vmem:[%s645 + $0xe8] sm:$0xff]
        %v703 = vld [vmem:[%s645 + $0xf0] sm:$0xff]
        %v704 = vld [vmem:[%s645 + $0xf8] sm:$0xff]
        %v705 = vld [vmem:[%s645 + $0x100] sm:$0xff]
        %v706 = vld [vmem:[%s645 + $0x108] sm:$0xff]
        %v707 = vld [vmem:[%s645 + $0x110] sm:$0xff]
        %v708 = vld [vmem:[%s645 + $0x118] sm:$0xff]
        %v709 = vld [vmem:[%s645 + $0x120] sm:$0xff]
        %v710 = vld [vmem:[%s645 + $0x128] sm:$0xff]
        %v711 = vld [vmem:[%s645 + $0x130] sm:$0xff]
        %v712 = vld [vmem:[%s645 + $0x138] sm:$0xff]
        %v713 = vld [vmem:[%s645 + $0x140] sm:$0xff]
        %v714 = vld [vmem:[%s645 + $0x148] sm:$0xff]
        %v715 = vld [vmem:[%s645 + $0x150] sm:$0xff]
        %v716 = vld [vmem:[%s645 + $0x158] sm:$0xff]
        %v717 = vld [vmem:[%s645 + $0x160] sm:$0xff]
        %v718 = vld [vmem:[%s645 + $0x168] sm:$0xff]
        %v719 = vld [vmem:[%s645 + $0x170] sm:$0xff]
        %v720 = vld [vmem:[%s645 + $0x178] sm:$0xff]
        %v721 = vld [vmem:[%s645 + $0x180] sm:$0xff]
        %v722 = vld [vmem:[%s645 + $0x188] sm:$0xff]
        %v723 = vld [vmem:[%s645 + $0x190] sm:$0xff]
        %v724 = vld [vmem:[%s645 + $0x198] sm:$0xff]
        %v725 = vld [vmem:[%s645 + $0x1a0] sm:$0xff]
        %v726 = vld [vmem:[%s645 + $0x1a8] sm:$0xff]
        %v727 = vld [vmem:[%s645 + $0x1b0] sm:$0xff]
        %v728 = vld [vmem:[%s645 + $0x1b8] sm:$0xff]
        %v729 = vld [vmem:[%s645 + $0x1c0] sm:$0xff]
        %v730 = vld [vmem:[%s645 + $0x1c8] sm:$0xff]
        %v731 = vld [vmem:[%s645 + $0x1d0] sm:$0xff]
        %v732 = vld [vmem:[%s645 + $0x1d8] sm:$0xff]
        %v733 = vld [vmem:[%s645 + $0x1e0] sm:$0xff]
        %v734 = vld [vmem:[%s645 + $0x1e8] sm:$0xff]
        %v735 = vld [vmem:[%s645 + $0x1f0] sm:$0xff]
        %v736 = vld [vmem:[%s645 + $0x1f8] sm:$0xff]
        %v737 = vld [vmem:[%s645 + $0x200] sm:$0xff]
        %v738 = vld [vmem:[%s645 + $0x208] sm:$0xff]
        %v739 = vld [vmem:[%s645 + $0x210] sm:$0xff]
        %v740 = vld [vmem:[%s645 + $0x218] sm:$0xff]
        %v741 = vld [vmem:[%s645 + $0x220] sm:$0xff]
        %v742 = vld [vmem:[%s645 + $0x228] sm:$0xff]
        %v743 = vld [vmem:[%s645 + $0x230] sm:$0xff]
        %v744 = vld [vmem:[%s645 + $0x238] sm:$0xff]
        %v745 = vld [vmem:[%s645 + $0x240] sm:$0xff]
        %v746 = vld [vmem:[%s645 + $0x248] sm:$0xff]
        %v747 = vld [vmem:[%s645 + $0x250] sm:$0xff]
        %v748 = vld [vmem:[%s645 + $0x258] sm:$0xff]
        %v749 = vld [vmem:[%s645 + $0x260] sm:$0xff]
        %v750 = vld [vmem:[%s645 + $0x268] sm:$0xff]
        %v751 = vld [vmem:[%s645 + $0x270] sm:$0xff]
        %v752 = vld [vmem:[%s645 + $0x278] sm:$0xff]
        %v753 = vld [vmem:[%s645 + $0x280] sm:$0xff]
        %v754 = vld [vmem:[%s645 + $0x288] sm:$0xff]
        %v755 = vld [vmem:[%s645 + $0x290] sm:$0xff]
        %v756 = vld [vmem:[%s645 + $0x298] sm:$0xff]
        %v757 = vld [vmem:[%s645 + $0x2a0] sm:$0xff]
        %v758 = vld [vmem:[%s645 + $0x2a8] sm:$0xff]
        %v759 = vld [vmem:[%s645 + $0x2b0] sm:$0xff]
        %v760 = vld [vmem:[%s645 + $0x2b8] sm:$0xff]
        %v761 = vld [vmem:[%s645 + $0x2c0] sm:$0xff]
        %v762 = vld [vmem:[%s645 + $0x2c8] sm:$0xff]
        %v763 = vld [vmem:[%s645 + $0x2d0] sm:$0xff]
        %v764 = vld [vmem:[%s645 + $0x2d8] sm:$0xff]
        %v765 = vld [vmem:[%s645 + $0x2e0] sm:$0xff]
        %v766 = vld [vmem:[%s645 + $0x2e8] sm:$0xff]
        %v767 = vld [vmem:[%s645 + $0x2f0] sm:$0xff]
        %v768 = vld [vmem:[%s645 + $0x2f8] sm:$0xff]
        %v769 = vld [vmem:[%s645 + $0x300] sm:$0xff]
        %v770 = vld [vmem:[%s645 + $0x308] sm:$0xff]
        %v771 = vld [vmem:[%s645 + $0x310] sm:$0xff]
        %v772 = vld [vmem:[%s645 + $0x318] sm:$0xff]
        %v773 = vld [vmem:[%s645 + $0x320] sm:$0xff]
        %v774 = vld [vmem:[%s645 + $0x328] sm:$0xff]
        %v775 = vld [vmem:[%s645 + $0x330] sm:$0xff]
        %v776 = vld [vmem:[%s645 + $0x338] sm:$0xff]
        %v777 = vld [vmem:[%s645 + $0x340] sm:$0xff]
        %v778 = vld [vmem:[%s645 + $0x348] sm:$0xff]
        %v779 = vld [vmem:[%s645 + $0x350] sm:$0xff]
        %v780 = vld [vmem:[%s645 + $0x358] sm:$0xff]
        %v781 = vld [vmem:[%s645 + $0x360] sm:$0xff]
        %v782 = vld [vmem:[%s645 + $0x368] sm:$0xff]
        %v783 = vld [vmem:[%s645 + $0x370] sm:$0xff]
        %v784 = vld [vmem:[%s645 + $0x378] sm:$0xff]
        %v785 = vld [vmem:[%s645 + $0x380] sm:$0xff]
        %v786 = vld [vmem:[%s645 + $0x388] sm:$0xff]
        %v787 = vld [vmem:[%s645 + $0x390] sm:$0xff]
        %v788 = vld [vmem:[%s645 + $0x398] sm:$0xff]
        %v789 = vld [vmem:[%s645 + $0x3a0] sm:$0xff]
        %v790 = vld [vmem:[%s645 + $0x3a8] sm:$0xff]
        %v791 = vld [vmem:[%s645 + $0x3b0] sm:$0xff]
        %v792 = vld [vmem:[%s645 + $0x3b8] sm:$0xff]
        %v793 = vld [vmem:[%s645 + $0x3c0] sm:$0xff]
        %v794 = vld [vmem:[%s645 + $0x3c8] sm:$0xff]
        %v795 = vld [vmem:[%s645 + $0x3d0] sm:$0xff]
        %v796 = vld [vmem:[%s645 + $0x3d8] sm:$0xff]
        %v797 = vld [vmem:[%s645 + $0x3e0] sm:$0xff]
        %v798 = vld [vmem:[%s645 + $0x3e8] sm:$0xff]
        %v799 = vld [vmem:[%s645 + $0x3f0] sm:$0xff]
        %v800 = vld [vmem:[%s645 + $0x3f8] sm:$0xff]
        %v801 = vld [vmem:[%s645 + $0x400] sm:$0xff]
        %v802 = vld [vmem:[%s645 + $0x408] sm:$0xff]
        %v803 = vld [vmem:[%s645 + $0x410] sm:$0xff]
        %v804 = vld [vmem:[%s645 + $0x418] sm:$0xff]
        %v805 = vld [vmem:[%s645 + $0x420] sm:$0xff]
        %v806 = vld [vmem:[%s645 + $0x428] sm:$0xff]
        %v807 = vld [vmem:[%s645 + $0x430] sm:$0xff]
        %v808 = vld [vmem:[%s645 + $0x438] sm:$0xff]
        %v809 = vld [vmem:[%s645 + $0x440] sm:$0xff]
        %v810 = vld [vmem:[%s645 + $0x448] sm:$0xff]
        %v811 = vld [vmem:[%s645 + $0x450] sm:$0xff]
        %v812 = vld [vmem:[%s645 + $0x458] sm:$0xff]
        %v813 = vld [vmem:[%s645 + $0x460] sm:$0xff]
        %v814 = vld [vmem:[%s645 + $0x468] sm:$0xff]
        %v815 = vld [vmem:[%s645 + $0x470] sm:$0xff]
        %v816 = vld [vmem:[%s645 + $0x478] sm:$0xff]
        %v817 = vld [vmem:[%s645 + $0x480] sm:$0xff]
        %v818 = vld [vmem:[%s645 + $0x488] sm:$0xff]
        %v819 = vld [vmem:[%s645 + $0x490] sm:$0xff]
        %v820 = vld [vmem:[%s645 + $0x498] sm:$0xff]
        %v821 = vld [vmem:[%s645 + $0x4a0] sm:$0xff]
        %v822 = vld [vmem:[%s645 + $0x4a8] sm:$0xff]
        %v823 = vld [vmem:[%s645 + $0x4b0] sm:$0xff]
        %v824 = vld [vmem:[%s645 + $0x4b8] sm:$0xff]
        %v825 = vld [vmem:[%s645 + $0x4c0] sm:$0xff]
        %v826 = vld [vmem:[%s645 + $0x4c8] sm:$0xff]
        %v827 = vld [vmem:[%s645 + $0x4d0] sm:$0xff]
        %v828 = vld [vmem:[%s645 + $0x4d8] sm:$0xff]
        %v829 = vld [vmem:[%s645 + $0x4e0] sm:$0xff]
        %v830 = vld [vmem:[%s645 + $0x4e8] sm:$0xff]
        %v831 = vld [vmem:[%s645 + $0x4f0] sm:$0xff]
        %v832 = vld [vmem:[%s645 + $0x4f8] sm:$0xff]
        %v833 = vld [vmem:[%s645 + $0x500] sm:$0xff]
        %v834 = vld [vmem:[%s645 + $0x508] sm:$0xff]
        %v835 = vld [vmem:[%s645 + $0x510] sm:$0xff]
        %v836 = vld [vmem:[%s645 + $0x518] sm:$0xff]
        %v837 = vld [vmem:[%s645 + $0x520] sm:$0xff]
        %v838 = vld [vmem:[%s645 + $0x528] sm:$0xff]
        %v839 = vld [vmem:[%s645 + $0x530] sm:$0xff]
        %v840 = vld [vmem:[%s645 + $0x538] sm:$0xff]
        %v841 = vld [vmem:[%s645 + $0x540] sm:$0xff]
        %v842 = vld [vmem:[%s645 + $0x548] sm:$0xff]
        %v843 = vld [vmem:[%s645 + $0x550] sm:$0xff]
        %v844 = vld [vmem:[%s645 + $0x558] sm:$0xff]
        %v845 = vld [vmem:[%s645 + $0x560] sm:$0xff]
        %v846 = vld [vmem:[%s645 + $0x568] sm:$0xff]
        %v847 = vld [vmem:[%s645 + $0x570] sm:$0xff]
        %v848 = vld [vmem:[%s645 + $0x578] sm:$0xff]
        %v849 = vld [vmem:[%s645 + $0x580] sm:$0xff]
        %v850 = vld [vmem:[%s645 + $0x588] sm:$0xff]
        %v851 = vld [vmem:[%s645 + $0x590] sm:$0xff]
        %v852 = vld [vmem:[%s645 + $0x598] sm:$0xff]
        %v853 = vld [vmem:[%s645 + $0x5a0] sm:$0xff]
        %v854 = vld [vmem:[%s645 + $0x5a8] sm:$0xff]
        %v855 = vld [vmem:[%s645 + $0x5b0] sm:$0xff]
        %v856 = vld [vmem:[%s645 + $0x5b8] sm:$0xff]
        %v857 = vld [vmem:[%s645 + $0x5c0] sm:$0xff]
        %v858 = vld [vmem:[%s645 + $0x5c8] sm:$0xff]
        %v859 = vld [vmem:[%s645 + $0x5d0] sm:$0xff]
        %v860 = vld [vmem:[%s645 + $0x5d8] sm:$0xff]
        %v861 = vld [vmem:[%s645 + $0x5e0] sm:$0xff]
        %v862 = vld [vmem:[%s645 + $0x5e8] sm:$0xff]
        %v863 = vld [vmem:[%s645 + $0x5f0] sm:$0xff]
        %v864 = vld [vmem:[%s645 + $0x5f8] sm:$0xff]
        %v865 = vld [vmem:[%s645 + $0x600] sm:$0xff]
        %v866 = vld [vmem:[%s645 + $0x608] sm:$0xff]
        %v867 = vld [vmem:[%s645 + $0x610] sm:$0xff]
        %v868 = vld [vmem:[%s645 + $0x618] sm:$0xff]
        %v869 = vld [vmem:[%s645 + $0x620] sm:$0xff]
        %v870 = vld [vmem:[%s645 + $0x628] sm:$0xff]
        %v871 = vld [vmem:[%s645 + $0x630] sm:$0xff]
        %v872 = vld [vmem:[%s645 + $0x638] sm:$0xff]
        %v873 = vld [vmem:[%s645 + $0x640] sm:$0xff]
        %v874 = vld [vmem:[%s645 + $0x648] sm:$0xff]
        %v875 = vld [vmem:[%s645 + $0x650] sm:$0xff]
        %v876 = vld [vmem:[%s645 + $0x658] sm:$0xff]
        %v877 = vld [vmem:[%s645 + $0x660] sm:$0xff]
        %v878 = vld [vmem:[%s645 + $0x668] sm:$0xff]
        %v879 = vld [vmem:[%s645 + $0x670] sm:$0xff]
        %v880 = vld [vmem:[%s645 + $0x678] sm:$0xff]
        %v881 = vld [vmem:[%s645 + $0x680] sm:$0xff]
        %v882 = vld [vmem:[%s645 + $0x688] sm:$0xff]
        %v883 = vld [vmem:[%s645 + $0x690] sm:$0xff]
        %v884 = vld [vmem:[%s645 + $0x698] sm:$0xff]
        %v885 = vld [vmem:[%s645 + $0x6a0] sm:$0xff]
        %v886 = vld [vmem:[%s645 + $0x6a8] sm:$0xff]
        %v887 = vld [vmem:[%s645 + $0x6b0] sm:$0xff]
        %v888 = vld [vmem:[%s645 + $0x6b8] sm:$0xff]
        %v889 = vunpack.c.l.bf16 %v673
        %v890 = vunpack.c.h.bf16 %v673
        %v891 = vunpack.c.l.bf16 %v674
        %v892 = vunpack.c.h.bf16 %v674
        %v893 = vunpack.c.l.bf16 %v675
        %v894 = vunpack.c.h.bf16 %v675
        %v895 = vunpack.c.l.bf16 %v676
        %v896 = vunpack.c.h.bf16 %v676
        %v897 = vunpack.c.l.bf16 %v677
        %v898 = vunpack.c.h.bf16 %v677
        %v899 = vunpack.c.l.bf16 %v678
        %v900 = vunpack.c.h.bf16 %v678
        %v901 = vunpack.c.l.bf16 %v679
        %v902 = vunpack.c.h.bf16 %v679
        %v903 = vunpack.c.l.bf16 %v680
        %v904 = vunpack.c.h.bf16 %v680
        %v905 = vunpack.c.l.bf16 %v681
        %v906 = vunpack.c.h.bf16 %v681
        %v907 = vunpack.c.l.bf16 %v682
        %v908 = vunpack.c.h.bf16 %v682
        %v909 = vunpack.c.l.bf16 %v683
        %v910 = vunpack.c.h.bf16 %v683
        %v911 = vunpack.c.l.bf16 %v684
        %v912 = vunpack.c.h.bf16 %v684
        %v913 = vunpack.c.l.bf16 %v685
        %v914 = vunpack.c.h.bf16 %v685
        %v915 = vunpack.c.l.bf16 %v686
        %v916 = vunpack.c.h.bf16 %v686
        %v917 = vunpack.c.l.bf16 %v687
        %v918 = vunpack.c.h.bf16 %v687
        %v919 = vunpack.c.l.bf16 %v688
        %v920 = vunpack.c.h.bf16 %v688
        %v921 = vunpack.c.l.bf16 %v689
        %v922 = vunpack.c.h.bf16 %v689
        %v923 = vunpack.c.l.bf16 %v690
        %v924 = vunpack.c.h.bf16 %v690
        %v925 = vunpack.c.l.bf16 %v691
        %v926 = vunpack.c.h.bf16 %v691
        %v927 = vunpack.c.l.bf16 %v692
        %v928 = vunpack.c.h.bf16 %v692
        %v929 = vunpack.c.l.bf16 %v693
        %v930 = vunpack.c.h.bf16 %v693
        %v931 = vunpack.c.l.bf16 %v694
        %v932 = vunpack.c.h.bf16 %v694
        %v933 = vunpack.c.l.bf16 %v695
        %v934 = vunpack.c.h.bf16 %v695
        %v935 = vunpack.c.l.bf16 %v696
        %v936 = vunpack.c.h.bf16 %v696
        %v937 = vunpack.c.l.bf16 %v697
        %v938 = vunpack.c.h.bf16 %v697
        %v939 = vunpack.c.l.bf16 %v698
        %v940 = vunpack.c.h.bf16 %v698
        %v941 = vunpack.c.l.bf16 %v699
        %v942 = vunpack.c.h.bf16 %v699
        %v943 = vunpack.c.l.bf16 %v700
        %v944 = vunpack.c.h.bf16 %v700
        %v945 = vunpack.c.l.bf16 %v701
        %v946 = vunpack.c.h.bf16 %v701
        %v947 = vunpack.c.l.bf16 %v702
        %v948 = vunpack.c.h.bf16 %v702
        %v949 = vunpack.c.l.bf16 %v703
        %v950 = vunpack.c.h.bf16 %v703
        %v951 = vunpack.c.l.bf16 %v704
        %v952 = vunpack.c.h.bf16 %v704
        %v953 = vunpack.c.l.bf16 %v705
        %v954 = vunpack.c.h.bf16 %v705
        %v955 = vunpack.c.l.bf16 %v706
        %v956 = vunpack.c.h.bf16 %v706
        %v957 = vunpack.c.l.bf16 %v707
        %v958 = vunpack.c.h.bf16 %v707
        %v959 = vunpack.c.l.bf16 %v708
        %v960 = vunpack.c.h.bf16 %v708
        %v961 = vunpack.c.l.bf16 %v709
        %v962 = vunpack.c.h.bf16 %v709
        %v963 = vunpack.c.l.bf16 %v710
        %v964 = vunpack.c.h.bf16 %v710
        %v965 = vunpack.c.l.bf16 %v711
        %v966 = vunpack.c.h.bf16 %v711
        %v967 = vunpack.c.l.bf16 %v712
        %v968 = vunpack.c.h.bf16 %v712
        %v969 = vunpack.c.l.bf16 %v713
        %v970 = vunpack.c.h.bf16 %v713
        %v971 = vunpack.c.l.bf16 %v714
        %v972 = vunpack.c.h.bf16 %v714
        %v973 = vunpack.c.l.bf16 %v715
        %v974 = vunpack.c.h.bf16 %v715
        %v975 = vunpack.c.l.bf16 %v716
        %v976 = vunpack.c.h.bf16 %v716
        %v977 = vunpack.c.l.bf16 %v717
        %v978 = vunpack.c.h.bf16 %v717
        %v979 = vunpack.c.l.bf16 %v718
        %v980 = vunpack.c.h.bf16 %v718
        %v981 = vunpack.c.l.bf16 %v719
        %v982 = vunpack.c.h.bf16 %v719
        %v983 = vunpack.c.l.bf16 %v720
        %v984 = vunpack.c.h.bf16 %v720
        %v985 = vunpack.c.l.bf16 %v721
        %v986 = vunpack.c.h.bf16 %v721
        %v987 = vunpack.c.l.bf16 %v722
        %v988 = vunpack.c.h.bf16 %v722
        %v989 = vunpack.c.l.bf16 %v723
        %v990 = vunpack.c.h.bf16 %v723
        %v991 = vunpack.c.l.bf16 %v724
        %v992 = vunpack.c.h.bf16 %v724
        %v993 = vunpack.c.l.bf16 %v725
        %v994 = vunpack.c.h.bf16 %v725
        %v995 = vunpack.c.l.bf16 %v726
        %v996 = vunpack.c.h.bf16 %v726
        %v997 = vunpack.c.l.bf16 %v727
        %v998 = vunpack.c.h.bf16 %v727
        %v999 = vunpack.c.l.bf16 %v728
        %v1000 = vunpack.c.h.bf16 %v728
        %v1001 = vunpack.c.l.bf16 %v729
        %v1002 = vunpack.c.h.bf16 %v729
        %v1003 = vunpack.c.l.bf16 %v730
        %v1004 = vunpack.c.h.bf16 %v730
        %v1005 = vunpack.c.l.bf16 %v731
        %v1006 = vunpack.c.h.bf16 %v731
        %v1007 = vunpack.c.l.bf16 %v732
        %v1008 = vunpack.c.h.bf16 %v732
        %v1009 = vunpack.c.l.bf16 %v733
        %v1010 = vunpack.c.h.bf16 %v733
        %v1011 = vunpack.c.l.bf16 %v734
        %v1012 = vunpack.c.h.bf16 %v734
        %v1013 = vunpack.c.l.bf16 %v735
        %v1014 = vunpack.c.h.bf16 %v735
        %v1015 = vunpack.c.l.bf16 %v736
        %v1016 = vunpack.c.h.bf16 %v736
        %v1017 = vunpack.c.l.bf16 %v737
        %v1018 = vunpack.c.h.bf16 %v737
        %v1019 = vunpack.c.l.bf16 %v738
        %v1020 = vunpack.c.h.bf16 %v738
        %v1021 = vunpack.c.l.bf16 %v739
        %v1022 = vunpack.c.h.bf16 %v739
        %v1023 = vunpack.c.l.bf16 %v740
        %v1024 = vunpack.c.h.bf16 %v740
        %v1025 = vunpack.c.l.bf16 %v741
        %v1026 = vunpack.c.h.bf16 %v741
        %v1027 = vunpack.c.l.bf16 %v742
        %v1028 = vunpack.c.h.bf16 %v742
        %v1029 = vunpack.c.l.bf16 %v743
        %v1030 = vunpack.c.h.bf16 %v743
        %v1031 = vunpack.c.l.bf16 %v744
        %v1032 = vunpack.c.h.bf16 %v744
        %v1033 = vunpack.c.l.bf16 %v745
        %v1034 = vunpack.c.h.bf16 %v745
        %v1035 = vunpack.c.l.bf16 %v746
        %v1036 = vunpack.c.h.bf16 %v746
        %v1037 = vunpack.c.l.bf16 %v747
        %v1038 = vunpack.c.h.bf16 %v747
        %v1039 = vunpack.c.l.bf16 %v748
        %v1040 = vunpack.c.h.bf16 %v748
        %v1041 = vunpack.c.l.bf16 %v749
        %v1042 = vunpack.c.h.bf16 %v749
        %v1043 = vunpack.c.l.bf16 %v750
        %v1044 = vunpack.c.h.bf16 %v750
        %v1045 = vunpack.c.l.bf16 %v751
        %v1046 = vunpack.c.h.bf16 %v751
        %v1047 = vunpack.c.l.bf16 %v752
        %v1048 = vunpack.c.h.bf16 %v752
        %v1049 = vunpack.c.l.bf16 %v753
        %v1050 = vunpack.c.h.bf16 %v753
        %v1051 = vunpack.c.l.bf16 %v754
        %v1052 = vunpack.c.h.bf16 %v754
        %v1053 = vunpack.c.l.bf16 %v755
        %v1054 = vunpack.c.h.bf16 %v755
        %v1055 = vunpack.c.l.bf16 %v756
        %v1056 = vunpack.c.h.bf16 %v756
        %v1057 = vunpack.c.l.bf16 %v757
        %v1058 = vunpack.c.h.bf16 %v757
        %v1059 = vunpack.c.l.bf16 %v758
        %v1060 = vunpack.c.h.bf16 %v758
        %v1061 = vunpack.c.l.bf16 %v759
        %v1062 = vunpack.c.h.bf16 %v759
        %v1063 = vunpack.c.l.bf16 %v760
        %v1064 = vunpack.c.h.bf16 %v760
        %v1065 = vunpack.c.l.bf16 %v761
        %v1066 = vunpack.c.h.bf16 %v761
        %v1067 = vunpack.c.l.bf16 %v762
        %v1068 = vunpack.c.h.bf16 %v762
        %v1069 = vunpack.c.l.bf16 %v763
        %v1070 = vunpack.c.h.bf16 %v763
        %v1071 = vunpack.c.l.bf16 %v764
        %v1072 = vunpack.c.h.bf16 %v764
        %v1073 = vunpack.c.l.bf16 %v765
        %v1074 = vunpack.c.h.bf16 %v765
        %v1075 = vunpack.c.l.bf16 %v766
        %v1076 = vunpack.c.h.bf16 %v766
        %v1077 = vunpack.c.l.bf16 %v767
        %v1078 = vunpack.c.h.bf16 %v767
        %v1079 = vunpack.c.l.bf16 %v768
        %v1080 = vunpack.c.h.bf16 %v768
        %v1081 = vunpack.c.l.bf16 %v769
        %v1082 = vunpack.c.h.bf16 %v769
        %v1083 = vunpack.c.l.bf16 %v770
        %v1084 = vunpack.c.h.bf16 %v770
        %v1085 = vunpack.c.l.bf16 %v771
        %v1086 = vunpack.c.h.bf16 %v771
        %v1087 = vunpack.c.l.bf16 %v772
        %v1088 = vunpack.c.h.bf16 %v772
        %v1089 = vunpack.c.l.bf16 %v773
        %v1090 = vunpack.c.h.bf16 %v773
        %v1091 = vunpack.c.l.bf16 %v774
        %v1092 = vunpack.c.h.bf16 %v774
        %v1093 = vunpack.c.l.bf16 %v775
        %v1094 = vunpack.c.h.bf16 %v775
        %v1095 = vunpack.c.l.bf16 %v776
        %v1096 = vunpack.c.h.bf16 %v776
        %v1097 = vunpack.c.l.bf16 %v777
        %v1098 = vunpack.c.h.bf16 %v777
        %v1099 = vunpack.c.l.bf16 %v778
        %v1100 = vunpack.c.h.bf16 %v778
        %v1101 = vunpack.c.l.bf16 %v779
        %v1102 = vunpack.c.h.bf16 %v779
        %v1103 = vunpack.c.l.bf16 %v780
        %v1104 = vunpack.c.h.bf16 %v780
        %v1105 = vunpack.c.l.bf16 %v781
        %v1106 = vunpack.c.h.bf16 %v781
        %v1107 = vunpack.c.l.bf16 %v782
        %v1108 = vunpack.c.h.bf16 %v782
        %v1109 = vunpack.c.l.bf16 %v783
        %v1110 = vunpack.c.h.bf16 %v783
        %v1111 = vunpack.c.l.bf16 %v784
        %v1112 = vunpack.c.h.bf16 %v784
        %v1113 = vunpack.c.l.bf16 %v785
        %v1114 = vunpack.c.h.bf16 %v785
        %v1115 = vunpack.c.l.bf16 %v786
        %v1116 = vunpack.c.h.bf16 %v786
        %v1117 = vunpack.c.l.bf16 %v787
        %v1118 = vunpack.c.h.bf16 %v787
        %v1119 = vunpack.c.l.bf16 %v788
        %v1120 = vunpack.c.h.bf16 %v788
        %v1121 = vunpack.c.l.bf16 %v789
        %v1122 = vunpack.c.h.bf16 %v789
        %v1123 = vunpack.c.l.bf16 %v790
        %v1124 = vunpack.c.h.bf16 %v790
        %v1125 = vunpack.c.l.bf16 %v791
        %v1126 = vunpack.c.h.bf16 %v791
        %v1127 = vunpack.c.l.bf16 %v792
        %v1128 = vunpack.c.h.bf16 %v792
        %v1129 = vunpack.c.l.bf16 %v793
        %v1130 = vunpack.c.h.bf16 %v793
        %v1131 = vunpack.c.l.bf16 %v794
        %v1132 = vunpack.c.h.bf16 %v794
        %v1133 = vunpack.c.l.bf16 %v795
        %v1134 = vunpack.c.h.bf16 %v795
        %v1135 = vunpack.c.l.bf16 %v796
        %v1136 = vunpack.c.h.bf16 %v796
        %v1137 = vunpack.c.l.bf16 %v797
        %v1138 = vunpack.c.h.bf16 %v797
        %v1139 = vunpack.c.l.bf16 %v798
        %v1140 = vunpack.c.h.bf16 %v798
        %v1141 = vunpack.c.l.bf16 %v799
        %v1142 = vunpack.c.h.bf16 %v799
        %v1143 = vunpack.c.l.bf16 %v800
        %v1144 = vunpack.c.h.bf16 %v800
        %v1145 = vunpack.c.l.bf16 %v801
        %v1146 = vunpack.c.h.bf16 %v801
        %v1147 = vunpack.c.l.bf16 %v802
        %v1148 = vunpack.c.h.bf16 %v802
        %v1149 = vunpack.c.l.bf16 %v803
        %v1150 = vunpack.c.h.bf16 %v803
        %v1151 = vunpack.c.l.bf16 %v804
        %v1152 = vunpack.c.h.bf16 %v804
        %v1153 = vunpack.c.l.bf16 %v805
        %v1154 = vunpack.c.h.bf16 %v805
        %v1155 = vunpack.c.l.bf16 %v806
        %v1156 = vunpack.c.h.bf16 %v806
        %v1157 = vunpack.c.l.bf16 %v807
        %v1158 = vunpack.c.h.bf16 %v807
        %v1159 = vunpack.c.l.bf16 %v808
        %v1160 = vunpack.c.h.bf16 %v808
        %v1161 = vunpack.c.l.bf16 %v809
        %v1162 = vunpack.c.h.bf16 %v809
        %v1163 = vunpack.c.l.bf16 %v810
        %v1164 = vunpack.c.h.bf16 %v810
        %v1165 = vunpack.c.l.bf16 %v811
        %v1166 = vunpack.c.h.bf16 %v811
        %v1167 = vunpack.c.l.bf16 %v812
        %v1168 = vunpack.c.h.bf16 %v812
        %v1169 = vunpack.c.l.bf16 %v813
        %v1170 = vunpack.c.h.bf16 %v813
        %v1171 = vunpack.c.l.bf16 %v814
        %v1172 = vunpack.c.h.bf16 %v814
        %v1173 = vunpack.c.l.bf16 %v815
        %v1174 = vunpack.c.h.bf16 %v815
        %v1175 = vunpack.c.l.bf16 %v816
        %v1176 = vunpack.c.h.bf16 %v816
        %v1177 = vunpack.c.l.bf16 %v817
        %v1178 = vunpack.c.h.bf16 %v817
        %v1179 = vunpack.c.l.bf16 %v818
        %v1180 = vunpack.c.h.bf16 %v818
        %v1181 = vunpack.c.l.bf16 %v819
        %v1182 = vunpack.c.h.bf16 %v819
        %v1183 = vunpack.c.l.bf16 %v820
        %v1184 = vunpack.c.h.bf16 %v820
        %v1185 = vunpack.c.l.bf16 %v821
        %v1186 = vunpack.c.h.bf16 %v821
        %v1187 = vunpack.c.l.bf16 %v822
        %v1188 = vunpack.c.h.bf16 %v822
        %v1189 = vunpack.c.l.bf16 %v823
        %v1190 = vunpack.c.h.bf16 %v823
        %v1191 = vunpack.c.l.bf16 %v824
        %v1192 = vunpack.c.h.bf16 %v824
        %v1193 = vunpack.c.l.bf16 %v825
        %v1194 = vunpack.c.h.bf16 %v825
        %v1195 = vunpack.c.l.bf16 %v826
        %v1196 = vunpack.c.h.bf16 %v826
        %v1197 = vunpack.c.l.bf16 %v827
        %v1198 = vunpack.c.h.bf16 %v827
        %v1199 = vunpack.c.l.bf16 %v828
        %v1200 = vunpack.c.h.bf16 %v828
        %v1201 = vunpack.c.l.bf16 %v829
        %v1202 = vunpack.c.h.bf16 %v829
        %v1203 = vunpack.c.l.bf16 %v830
        %v1204 = vunpack.c.h.bf16 %v830
        %v1205 = vunpack.c.l.bf16 %v831
        %v1206 = vunpack.c.h.bf16 %v831
        %v1207 = vunpack.c.l.bf16 %v832
        %v1208 = vunpack.c.h.bf16 %v832
        %v1209 = vunpack.c.l.bf16 %v833
        %v1210 = vunpack.c.h.bf16 %v833
        %v1211 = vunpack.c.l.bf16 %v834
        %v1212 = vunpack.c.h.bf16 %v834
        %v1213 = vunpack.c.l.bf16 %v835
        %v1214 = vunpack.c.h.bf16 %v835
        %v1215 = vunpack.c.l.bf16 %v836
        %v1216 = vunpack.c.h.bf16 %v836
        %v1217 = vunpack.c.l.bf16 %v837
        %v1218 = vunpack.c.h.bf16 %v837
        %v1219 = vunpack.c.l.bf16 %v838
        %v1220 = vunpack.c.h.bf16 %v838
        %v1221 = vunpack.c.l.bf16 %v839
        %v1222 = vunpack.c.h.bf16 %v839
        %v1223 = vunpack.c.l.bf16 %v840
        %v1224 = vunpack.c.h.bf16 %v840
        %v1225 = vunpack.c.l.bf16 %v841
        %v1226 = vunpack.c.h.bf16 %v841
        %v1227 = vunpack.c.l.bf16 %v842
        %v1228 = vunpack.c.h.bf16 %v842
        %v1229 = vunpack.c.l.bf16 %v843
        %v1230 = vunpack.c.h.bf16 %v843
        %v1231 = vunpack.c.l.bf16 %v844
        %v1232 = vunpack.c.h.bf16 %v844
        %v1233 = vunpack.c.l.bf16 %v845
        %v1234 = vunpack.c.h.bf16 %v845
        %v1235 = vunpack.c.l.bf16 %v846
        %v1236 = vunpack.c.h.bf16 %v846
        %v1237 = vunpack.c.l.bf16 %v847
        %v1238 = vunpack.c.h.bf16 %v847
        %v1239 = vunpack.c.l.bf16 %v848
        %v1240 = vunpack.c.h.bf16 %v848
        %v1241 = vunpack.c.l.bf16 %v849
        %v1242 = vunpack.c.h.bf16 %v849
        %v1243 = vunpack.c.l.bf16 %v850
        %v1244 = vunpack.c.h.bf16 %v850
        %v1245 = vunpack.c.l.bf16 %v851
        %v1246 = vunpack.c.h.bf16 %v851
        %v1247 = vunpack.c.l.bf16 %v852
        %v1248 = vunpack.c.h.bf16 %v852
        %v1249 = vunpack.c.l.bf16 %v853
        %v1250 = vunpack.c.h.bf16 %v853
        %v1251 = vunpack.c.l.bf16 %v854
        %v1252 = vunpack.c.h.bf16 %v854
        %v1253 = vunpack.c.l.bf16 %v855
        %v1254 = vunpack.c.h.bf16 %v855
        %v1255 = vunpack.c.l.bf16 %v856
        %v1256 = vunpack.c.h.bf16 %v856
        %v1257 = vunpack.c.l.bf16 %v857
        %v1258 = vunpack.c.h.bf16 %v857
        %v1259 = vunpack.c.l.bf16 %v858
        %v1260 = vunpack.c.h.bf16 %v858
        %v1261 = vunpack.c.l.bf16 %v859
        %v1262 = vunpack.c.h.bf16 %v859
        %v1263 = vunpack.c.l.bf16 %v860
        %v1264 = vunpack.c.h.bf16 %v860
        %v1265 = vunpack.c.l.bf16 %v861
        %v1266 = vunpack.c.h.bf16 %v861
        %v1267 = vunpack.c.l.bf16 %v862
        %v1268 = vunpack.c.h.bf16 %v862
        %v1269 = vunpack.c.l.bf16 %v863
        %v1270 = vunpack.c.h.bf16 %v863
        %v1271 = vunpack.c.l.bf16 %v864
        %v1272 = vunpack.c.h.bf16 %v864
        %v1273 = vunpack.c.l.bf16 %v865
        %v1274 = vunpack.c.h.bf16 %v865
        %v1275 = vunpack.c.l.bf16 %v866
        %v1276 = vunpack.c.h.bf16 %v866
        %v1277 = vunpack.c.l.bf16 %v867
        %v1278 = vunpack.c.h.bf16 %v867
        %v1279 = vunpack.c.l.bf16 %v868
        %v1280 = vunpack.c.h.bf16 %v868
        %v1281 = vunpack.c.l.bf16 %v869
        %v1282 = vunpack.c.h.bf16 %v869
        %v1283 = vunpack.c.l.bf16 %v870
        %v1284 = vunpack.c.h.bf16 %v870
        %v1285 = vunpack.c.l.bf16 %v871
        %v1286 = vunpack.c.h.bf16 %v871
        %v1287 = vunpack.c.l.bf16 %v872
        %v1288 = vunpack.c.h.bf16 %v872
        %v1289 = vunpack.c.l.bf16 %v873
        %v1290 = vunpack.c.h.bf16 %v873
        %v1291 = vunpack.c.l.bf16 %v874
        %v1292 = vunpack.c.h.bf16 %v874
        %v1293 = vunpack.c.l.bf16 %v875
        %v1294 = vunpack.c.h.bf16 %v875
        %v1295 = vunpack.c.l.bf16 %v876
        %v1296 = vunpack.c.h.bf16 %v876
        %v1297 = vunpack.c.l.bf16 %v877
        %v1298 = vunpack.c.h.bf16 %v877
        %v1299 = vunpack.c.l.bf16 %v878
        %v1300 = vunpack.c.h.bf16 %v878
        %v1301 = vunpack.c.l.bf16 %v879
        %v1302 = vunpack.c.h.bf16 %v879
        %v1303 = vunpack.c.l.bf16 %v880
        %v1304 = vunpack.c.h.bf16 %v880
        %v1305 = vunpack.c.l.bf16 %v881
        %v1306 = vunpack.c.h.bf16 %v881
        %v1307 = vunpack.c.l.bf16 %v882
        %v1308 = vunpack.c.h.bf16 %v882
        %v1309 = vunpack.c.l.bf16 %v883
        %v1310 = vunpack.c.h.bf16 %v883
        %v1311 = vunpack.c.l.bf16 %v884
        %v1312 = vunpack.c.h.bf16 %v884
        %v1313 = vunpack.c.l.bf16 %v885
        %v1314 = vunpack.c.h.bf16 %v885
        %v1315 = vunpack.c.l.bf16 %v886
        %v1316 = vunpack.c.h.bf16 %v886
        %v1317 = vunpack.c.l.bf16 %v887
        %v1318 = vunpack.c.h.bf16 %v887
        %v1319 = vunpack.c.l.bf16 %v888
        %v1320 = vunpack.c.h.bf16 %v888
        %v1321 = vld [vmem:[%s2] sm:$0xff]
        %1323 = vset.pattern.permute.xlu0 0
        %1324 = vperm.xlu0 %1323, %v1321
        %v1325 = vpop.permute.xlu0 %1324
        %vm1327 = vcmask 719872
        %v1329 = vsel %vm1327, %v672, 0
        %1331 = vmatpush.msra.mxu0 %v1129
        %1332 = vmatpush.msra.mxu0 %v1113
        %1333 = vmatpush.msra.mxu0 %v1097
        %1334 = vmatpush.msra.mxu0 %v1081
        %1335 = vmatpush.msra.mxu0 %v1065
        %1336 = vmatpush.msra.mxu0 %v1049
        %1337 = vmatpush.msra.mxu0 %v1033
        %1338 = vmatpush.msra.mxu0 %v1017
        %1339 = vmatpush.msra.mxu0 %v1001
        %1340 = vmatpush.msra.mxu0 %v985
        %1341 = vmatpush.msra.mxu0 %v969
        %1342 = vmatpush.msra.mxu0 %v953
        %1343 = vmatpush.msra.mxu0 %v937
        %1344 = vmatpush.msra.mxu0 %v921
        %1345 = vmatpush.msra.mxu0 %v905
        %1346 = vmatpush.msra.mxu0 %v889
        %1347 = vmatmul.f32.gmra.mxu0 %v671
        %v1348 = vpop.f32.mrf.mxu0
        %v1349 = vadd.f32 %v1325, %v1348
        %1350 = vdwg.mxu0
        %1351 = vmatpush.msra.mxu0 0.0
        %1352 = vmatpush.msra.mxu0 0.0
        %1353 = vmatpush.msra.mxu0 0.0
        %1354 = vmatpush.msra.mxu0 0.0
        %1355 = vmatpush.msra.mxu0 0.0
        %1356 = vmatpush.msra.mxu0 %v1305
        %1357 = vmatpush.msra.mxu0 %v1289
        %1358 = vmatpush.msra.mxu0 %v1273
        %1359 = vmatpush.msra.mxu0 %v1257
        %1360 = vmatpush.msra.mxu0 %v1241
        %1361 = vmatpush.msra.mxu0 %v1225
        %1362 = vmatpush.msra.mxu0 %v1209
        %1363 = vmatpush.msra.mxu0 %v1193
        %1364 = vmatpush.msra.mxu0 %v1177
        %1365 = vmatpush.msra.mxu0 %v1161
        %1366 = vmatpush.msra.mxu0 %v1145
        %1367 = vmatmul.f32.gmra.mxu0 %v1329
        %v1368 = vpop.f32.mrf.mxu0
        %v1369 = vadd.f32 %v1349, %v1368
        %1370 = vdwg.mxu0
        %1371 = vmatpush.msra.mxu0 %v1130
        %1372 = vmatpush.msra.mxu0 %v1114
        %1373 = vmatpush.msra.mxu0 %v1098
        %1374 = vmatpush.msra.mxu0 %v1082
        %1375 = vmatpush.msra.mxu0 %v1066
        %1376 = vmatpush.msra.mxu0 %v1050
        %1377 = vmatpush.msra.mxu0 %v1034
        %1378 = vmatpush.msra.mxu0 %v1018
        %1379 = vmatpush.msra.mxu0 %v1002
        %1380 = vmatpush.msra.mxu0 %v986
        %1381 = vmatpush.msra.mxu0 %v970
        %1382 = vmatpush.msra.mxu0 %v954
        %1383 = vmatpush.msra.mxu0 %v938
        %1384 = vmatpush.msra.mxu0 %v922
        %1385 = vmatpush.msra.mxu0 %v906
        %1386 = vmatpush.msra.mxu0 %v890
        %1387 = vmatmul.f32.gmra.mxu0 %v671
        %v1388 = vpop.f32.mrf.mxu0
        %v1389 = vadd.f32 %v1325, %v1388
        %1390 = vdwg.mxu0
        %1391 = vmatpush.msra.mxu0 0.0
        %1392 = vmatpush.msra.mxu0 0.0
        %1393 = vmatpush.msra.mxu0 0.0
        %1394 = vmatpush.msra.mxu0 0.0
        %1395 = vmatpush.msra.mxu0 0.0
        %1396 = vmatpush.msra.mxu0 %v1306
        %1397 = vmatpush.msra.mxu0 %v1290
        %1398 = vmatpush.msra.mxu0 %v1274
        %1399 = vmatpush.msra.mxu0 %v1258
        %1400 = vmatpush.msra.mxu0 %v1242
        %1401 = vmatpush.msra.mxu0 %v1226
        %1402 = vmatpush.msra.mxu0 %v1210
        %1403 = vmatpush.msra.mxu0 %v1194
        %1404 = vmatpush.msra.mxu0 %v1178
        %1405 = vmatpush.msra.mxu0 %v1162
        %1406 = vmatpush.msra.mxu0 %v1146
        %1407 = vmatmul.f32.gmra.mxu0 %v1329
        %v1408 = vpop.f32.mrf.mxu0
        %v1409 = vadd.f32 %v1389, %v1408
        %1410 = vdwg.mxu0
        %1411 = vmatpush.msra.mxu0 %v1131
        %1412 = vmatpush.msra.mxu0 %v1115
        %1413 = vmatpush.msra.mxu0 %v1099
        %1414 = vmatpush.msra.mxu0 %v1083
        %1415 = vmatpush.msra.mxu0 %v1067
        %1416 = vmatpush.msra.mxu0 %v1051
        %1417 = vmatpush.msra.mxu0 %v1035
        %1418 = vmatpush.msra.mxu0 %v1019
        %1419 = vmatpush.msra.mxu0 %v1003
        %1420 = vmatpush.msra.mxu0 %v987
        %1421 = vmatpush.msra.mxu0 %v971
        %1422 = vmatpush.msra.mxu0 %v955
        %1423 = vmatpush.msra.mxu0 %v939
        %1424 = vmatpush.msra.mxu0 %v923
        %1425 = vmatpush.msra.mxu0 %v907
        %1426 = vmatpush.msra.mxu0 %v891
        %1427 = vmatmul.f32.gmra.mxu0 %v671
        %v1428 = vpop.f32.mrf.mxu0
        %v1429 = vadd.f32 %v1325, %v1428
        %1430 = vdwg.mxu0
        %1431 = vmatpush.msra.mxu0 0.0
        %1432 = vmatpush.msra.mxu0 0.0
        %1433 = vmatpush.msra.mxu0 0.0
        %1434 = vmatpush.msra.mxu0 0.0
        %1435 = vmatpush.msra.mxu0 0.0
        %1436 = vmatpush.msra.mxu0 %v1307
        %1437 = vmatpush.msra.mxu0 %v1291
        %1438 = vmatpush.msra.mxu0 %v1275
        %1439 = vmatpush.msra.mxu0 %v1259
        %1440 = vmatpush.msra.mxu0 %v1243
        %1441 = vmatpush.msra.mxu0 %v1227
        %1442 = vmatpush.msra.mxu0 %v1211
        %1443 = vmatpush.msra.mxu0 %v1195
        %1444 = vmatpush.msra.mxu0 %v1179
        %1445 = vmatpush.msra.mxu0 %v1163
        %1446 = vmatpush.msra.mxu0 %v1147
        %1447 = vmatmul.f32.gmra.mxu0 %v1329
        %v1448 = vpop.f32.mrf.mxu0
        %v1449 = vadd.f32 %v1429, %v1448
        %1450 = vdwg.mxu0
        %1451 = vmatpush.msra.mxu0 %v1132
        %1452 = vmatpush.msra.mxu0 %v1116
        %1453 = vmatpush.msra.mxu0 %v1100
        %1454 = vmatpush.msra.mxu0 %v1084
        %1455 = vmatpush.msra.mxu0 %v1068
        %1456 = vmatpush.msra.mxu0 %v1052
        %1457 = vmatpush.msra.mxu0 %v1036
        %1458 = vmatpush.msra.mxu0 %v1020
        %1459 = vmatpush.msra.mxu0 %v1004
        %1460 = vmatpush.msra.mxu0 %v988
        %1461 = vmatpush.msra.mxu0 %v972
        %1462 = vmatpush.msra.mxu0 %v956
        %1463 = vmatpush.msra.mxu0 %v940
        %1464 = vmatpush.msra.mxu0 %v924
        %1465 = vmatpush.msra.mxu0 %v908
        %1466 = vmatpush.msra.mxu0 %v892
        %1467 = vmatmul.f32.gmra.mxu0 %v671
        %v1468 = vpop.f32.mrf.mxu0
        %v1469 = vadd.f32 %v1325, %v1468
        %1470 = vdwg.mxu0
        %1471 = vmatpush.msra.mxu0 0.0
        %1472 = vmatpush.msra.mxu0 0.0
        %1473 = vmatpush.msra.mxu0 0.0
        %1474 = vmatpush.msra.mxu0 0.0
        %1475 = vmatpush.msra.mxu0 0.0
        %1476 = vmatpush.msra.mxu0 %v1308
        %1477 = vmatpush.msra.mxu0 %v1292
        %1478 = vmatpush.msra.mxu0 %v1276
        %1479 = vmatpush.msra.mxu0 %v1260
        %1480 = vmatpush.msra.mxu0 %v1244
        %1481 = vmatpush.msra.mxu0 %v1228
        %1482 = vmatpush.msra.mxu0 %v1212
        %1483 = vmatpush.msra.mxu0 %v1196
        %1484 = vmatpush.msra.mxu0 %v1180
        %1485 = vmatpush.msra.mxu0 %v1164
        %1486 = vmatpush.msra.mxu0 %v1148
        %1487 = vmatmul.f32.gmra.mxu0 %v1329
        %v1488 = vpop.f32.mrf.mxu0
        %v1489 = vadd.f32 %v1469, %v1488
        %1490 = vdwg.mxu0
        %1491 = vmatpush.msra.mxu0 %v1133
        %1492 = vmatpush.msra.mxu0 %v1117
        %1493 = vmatpush.msra.mxu0 %v1101
        %1494 = vmatpush.msra.mxu0 %v1085
        %1495 = vmatpush.msra.mxu0 %v1069
        %1496 = vmatpush.msra.mxu0 %v1053
        %1497 = vmatpush.msra.mxu0 %v1037
        %1498 = vmatpush.msra.mxu0 %v1021
        %1499 = vmatpush.msra.mxu0 %v1005
        %1500 = vmatpush.msra.mxu0 %v989
        %1501 = vmatpush.msra.mxu0 %v973
        %1502 = vmatpush.msra.mxu0 %v957
        %1503 = vmatpush.msra.mxu0 %v941
        %1504 = vmatpush.msra.mxu0 %v925
        %1505 = vmatpush.msra.mxu0 %v909
        %1506 = vmatpush.msra.mxu0 %v893
        %1507 = vmatmul.f32.gmra.mxu0 %v671
        %v1508 = vpop.f32.mrf.mxu0
        %v1509 = vadd.f32 %v1325, %v1508
        %1510 = vdwg.mxu0
        %1511 = vmatpush.msra.mxu0 0.0
        %1512 = vmatpush.msra.mxu0 0.0
        %1513 = vmatpush.msra.mxu0 0.0
        %1514 = vmatpush.msra.mxu0 0.0
        %1515 = vmatpush.msra.mxu0 0.0
        %1516 = vmatpush.msra.mxu0 %v1309
        %1517 = vmatpush.msra.mxu0 %v1293
        %1518 = vmatpush.msra.mxu0 %v1277
        %1519 = vmatpush.msra.mxu0 %v1261
        %1520 = vmatpush.msra.mxu0 %v1245
        %1521 = vmatpush.msra.mxu0 %v1229
        %1522 = vmatpush.msra.mxu0 %v1213
        %1523 = vmatpush.msra.mxu0 %v1197
        %1524 = vmatpush.msra.mxu0 %v1181
        %1525 = vmatpush.msra.mxu0 %v1165
        %1526 = vmatpush.msra.mxu0 %v1149
        %1527 = vmatmul.f32.gmra.mxu0 %v1329
        %v1528 = vpop.f32.mrf.mxu0
        %v1529 = vadd.f32 %v1509, %v1528
        %1530 = vdwg.mxu0
        %1531 = vmatpush.msra.mxu0 %v1134
        %1532 = vmatpush.msra.mxu0 %v1118
        %1533 = vmatpush.msra.mxu0 %v1102
        %1534 = vmatpush.msra.mxu0 %v1086
        %1535 = vmatpush.msra.mxu0 %v1070
        %1536 = vmatpush.msra.mxu0 %v1054
        %1537 = vmatpush.msra.mxu0 %v1038
        %1538 = vmatpush.msra.mxu0 %v1022
        %1539 = vmatpush.msra.mxu0 %v1006
        %1540 = vmatpush.msra.mxu0 %v990
        %1541 = vmatpush.msra.mxu0 %v974
        %1542 = vmatpush.msra.mxu0 %v958
        %1543 = vmatpush.msra.mxu0 %v942
        %1544 = vmatpush.msra.mxu0 %v926
        %1545 = vmatpush.msra.mxu0 %v910
        %1546 = vmatpush.msra.mxu0 %v894
        %1547 = vmatmul.f32.gmra.mxu0 %v671
        %v1548 = vpop.f32.mrf.mxu0
        %v1549 = vadd.f32 %v1325, %v1548
        %1550 = vdwg.mxu0
        %1551 = vmatpush.msra.mxu0 0.0
        %1552 = vmatpush.msra.mxu0 0.0
        %1553 = vmatpush.msra.mxu0 0.0
        %1554 = vmatpush.msra.mxu0 0.0
        %1555 = vmatpush.msra.mxu0 0.0
        %1556 = vmatpush.msra.mxu0 %v1310
        %1557 = vmatpush.msra.mxu0 %v1294
        %1558 = vmatpush.msra.mxu0 %v1278
        %1559 = vmatpush.msra.mxu0 %v1262
        %1560 = vmatpush.msra.mxu0 %v1246
        %1561 = vmatpush.msra.mxu0 %v1230
        %1562 = vmatpush.msra.mxu0 %v1214
        %1563 = vmatpush.msra.mxu0 %v1198
        %1564 = vmatpush.msra.mxu0 %v1182
        %1565 = vmatpush.msra.mxu0 %v1166
        %1566 = vmatpush.msra.mxu0 %v1150
        %1567 = vmatmul.f32.gmra.mxu0 %v1329
        %v1568 = vpop.f32.mrf.mxu0
        %v1569 = vadd.f32 %v1549, %v1568
        %1570 = vdwg.mxu0
        %1571 = vmatpush.msra.mxu0 %v1135
        %1572 = vmatpush.msra.mxu0 %v1119
        %1573 = vmatpush.msra.mxu0 %v1103
        %1574 = vmatpush.msra.mxu0 %v1087
        %1575 = vmatpush.msra.mxu0 %v1071
        %1576 = vmatpush.msra.mxu0 %v1055
        %1577 = vmatpush.msra.mxu0 %v1039
        %1578 = vmatpush.msra.mxu0 %v1023
        %1579 = vmatpush.msra.mxu0 %v1007
        %1580 = vmatpush.msra.mxu0 %v991
        %1581 = vmatpush.msra.mxu0 %v975
        %1582 = vmatpush.msra.mxu0 %v959
        %1583 = vmatpush.msra.mxu0 %v943
        %1584 = vmatpush.msra.mxu0 %v927
        %1585 = vmatpush.msra.mxu0 %v911
        %1586 = vmatpush.msra.mxu0 %v895
        %1587 = vmatmul.f32.gmra.mxu0 %v671
        %v1588 = vpop.f32.mrf.mxu0
        %v1589 = vadd.f32 %v1325, %v1588
        %1590 = vdwg.mxu0
        %1591 = vmatpush.msra.mxu0 0.0
        %1592 = vmatpush.msra.mxu0 0.0
        %1593 = vmatpush.msra.mxu0 0.0
        %1594 = vmatpush.msra.mxu0 0.0
        %1595 = vmatpush.msra.mxu0 0.0
        %1596 = vmatpush.msra.mxu0 %v1311
        %1597 = vmatpush.msra.mxu0 %v1295
        %1598 = vmatpush.msra.mxu0 %v1279
        %1599 = vmatpush.msra.mxu0 %v1263
        %1600 = vmatpush.msra.mxu0 %v1247
        %1601 = vmatpush.msra.mxu0 %v1231
        %1602 = vmatpush.msra.mxu0 %v1215
        %1603 = vmatpush.msra.mxu0 %v1199
        %1604 = vmatpush.msra.mxu0 %v1183
        %1605 = vmatpush.msra.mxu0 %v1167
        %1606 = vmatpush.msra.mxu0 %v1151
        %1607 = vmatmul.f32.gmra.mxu0 %v1329
        %v1608 = vpop.f32.mrf.mxu0
        %v1609 = vadd.f32 %v1589, %v1608
        %1610 = vdwg.mxu0
        %1611 = vmatpush.msra.mxu0 %v1136
        %1612 = vmatpush.msra.mxu0 %v1120
        %1613 = vmatpush.msra.mxu0 %v1104
        %1614 = vmatpush.msra.mxu0 %v1088
        %1615 = vmatpush.msra.mxu0 %v1072
        %1616 = vmatpush.msra.mxu0 %v1056
        %1617 = vmatpush.msra.mxu0 %v1040
        %1618 = vmatpush.msra.mxu0 %v1024
        %1619 = vmatpush.msra.mxu0 %v1008
        %1620 = vmatpush.msra.mxu0 %v992
        %1621 = vmatpush.msra.mxu0 %v976
        %1622 = vmatpush.msra.mxu0 %v960
        %1623 = vmatpush.msra.mxu0 %v944
        %1624 = vmatpush.msra.mxu0 %v928
        %1625 = vmatpush.msra.mxu0 %v912
        %1626 = vmatpush.msra.mxu0 %v896
        %1627 = vmatmul.f32.gmra.mxu0 %v671
        %v1628 = vpop.f32.mrf.mxu0
        %v1629 = vadd.f32 %v1325, %v1628
        %1630 = vdwg.mxu0
        %1631 = vmatpush.msra.mxu0 0.0
        %1632 = vmatpush.msra.mxu0 0.0
        %1633 = vmatpush.msra.mxu0 0.0
        %1634 = vmatpush.msra.mxu0 0.0
        %1635 = vmatpush.msra.mxu0 0.0
        %1636 = vmatpush.msra.mxu0 %v1312
        %1637 = vmatpush.msra.mxu0 %v1296
        %1638 = vmatpush.msra.mxu0 %v1280
        %1639 = vmatpush.msra.mxu0 %v1264
        %1640 = vmatpush.msra.mxu0 %v1248
        %1641 = vmatpush.msra.mxu0 %v1232
        %1642 = vmatpush.msra.mxu0 %v1216
        %1643 = vmatpush.msra.mxu0 %v1200
        %1644 = vmatpush.msra.mxu0 %v1184
        %1645 = vmatpush.msra.mxu0 %v1168
        %1646 = vmatpush.msra.mxu0 %v1152
        %1647 = vmatmul.f32.gmra.mxu0 %v1329
        %v1648 = vpop.f32.mrf.mxu0
        %v1649 = vadd.f32 %v1629, %v1648
        %1650 = vdwg.mxu0
        %1651 = vmatpush.msra.mxu0 %v1137
        %1652 = vmatpush.msra.mxu0 %v1121
        %1653 = vmatpush.msra.mxu0 %v1105
        %1654 = vmatpush.msra.mxu0 %v1089
        %1655 = vmatpush.msra.mxu0 %v1073
        %1656 = vmatpush.msra.mxu0 %v1057
        %1657 = vmatpush.msra.mxu0 %v1041
        %1658 = vmatpush.msra.mxu0 %v1025
        %1659 = vmatpush.msra.mxu0 %v1009
        %1660 = vmatpush.msra.mxu0 %v993
        %1661 = vmatpush.msra.mxu0 %v977
        %1662 = vmatpush.msra.mxu0 %v961
        %1663 = vmatpush.msra.mxu0 %v945
        %1664 = vmatpush.msra.mxu0 %v929
        %1665 = vmatpush.msra.mxu0 %v913
        %1666 = vmatpush.msra.mxu0 %v897
        %1667 = vmatmul.f32.gmra.mxu0 %v671
        %v1668 = vpop.f32.mrf.mxu0
        %v1669 = vadd.f32 %v1325, %v1668
        %1670 = vdwg.mxu0
        %1671 = vmatpush.msra.mxu0 0.0
        %1672 = vmatpush.msra.mxu0 0.0
        %1673 = vmatpush.msra.mxu0 0.0
        %1674 = vmatpush.msra.mxu0 0.0
        %1675 = vmatpush.msra.mxu0 0.0
        %1676 = vmatpush.msra.mxu0 %v1313
        %1677 = vmatpush.msra.mxu0 %v1297
        %1678 = vmatpush.msra.mxu0 %v1281
        %1679 = vmatpush.msra.mxu0 %v1265
        %1680 = vmatpush.msra.mxu0 %v1249
        %1681 = vmatpush.msra.mxu0 %v1233
        %1682 = vmatpush.msra.mxu0 %v1217
        %1683 = vmatpush.msra.mxu0 %v1201
        %1684 = vmatpush.msra.mxu0 %v1185
        %1685 = vmatpush.msra.mxu0 %v1169
        %1686 = vmatpush.msra.mxu0 %v1153
        %1687 = vmatmul.f32.gmra.mxu0 %v1329
        %v1688 = vpop.f32.mrf.mxu0
        %v1689 = vadd.f32 %v1669, %v1688
        %1690 = vdwg.mxu0
        %1691 = vmatpush.msra.mxu0 %v1138
        %1692 = vmatpush.msra.mxu0 %v1122
        %1693 = vmatpush.msra.mxu0 %v1106
        %1694 = vmatpush.msra.mxu0 %v1090
        %1695 = vmatpush.msra.mxu0 %v1074
        %1696 = vmatpush.msra.mxu0 %v1058
        %1697 = vmatpush.msra.mxu0 %v1042
        %1698 = vmatpush.msra.mxu0 %v1026
        %1699 = vmatpush.msra.mxu0 %v1010
        %1700 = vmatpush.msra.mxu0 %v994
        %1701 = vmatpush.msra.mxu0 %v978
        %1702 = vmatpush.msra.mxu0 %v962
        %1703 = vmatpush.msra.mxu0 %v946
        %1704 = vmatpush.msra.mxu0 %v930
        %1705 = vmatpush.msra.mxu0 %v914
        %1706 = vmatpush.msra.mxu0 %v898
        %1707 = vmatmul.f32.gmra.mxu0 %v671
        %v1708 = vpop.f32.mrf.mxu0
        %v1709 = vadd.f32 %v1325, %v1708
        %1710 = vdwg.mxu0
        %1711 = vmatpush.msra.mxu0 0.0
        %1712 = vmatpush.msra.mxu0 0.0
        %1713 = vmatpush.msra.mxu0 0.0
        %1714 = vmatpush.msra.mxu0 0.0
        %1715 = vmatpush.msra.mxu0 0.0
        %1716 = vmatpush.msra.mxu0 %v1314
        %1717 = vmatpush.msra.mxu0 %v1298
        %1718 = vmatpush.msra.mxu0 %v1282
        %1719 = vmatpush.msra.mxu0 %v1266
        %1720 = vmatpush.msra.mxu0 %v1250
        %1721 = vmatpush.msra.mxu0 %v1234
        %1722 = vmatpush.msra.mxu0 %v1218
        %1723 = vmatpush.msra.mxu0 %v1202
        %1724 = vmatpush.msra.mxu0 %v1186
        %1725 = vmatpush.msra.mxu0 %v1170
        %1726 = vmatpush.msra.mxu0 %v1154
        %1727 = vmatmul.f32.gmra.mxu0 %v1329
        %v1728 = vpop.f32.mrf.mxu0
        %v1729 = vadd.f32 %v1709, %v1728
        %1730 = vdwg.mxu0
        %1731 = vmatpush.msra.mxu0 %v1139
        %1732 = vmatpush.msra.mxu0 %v1123
        %1733 = vmatpush.msra.mxu0 %v1107
        %1734 = vmatpush.msra.mxu0 %v1091
        %1735 = vmatpush.msra.mxu0 %v1075
        %1736 = vmatpush.msra.mxu0 %v1059
        %1737 = vmatpush.msra.mxu0 %v1043
        %1738 = vmatpush.msra.mxu0 %v1027
        %1739 = vmatpush.msra.mxu0 %v1011
        %1740 = vmatpush.msra.mxu0 %v995
        %1741 = vmatpush.msra.mxu0 %v979
        %1742 = vmatpush.msra.mxu0 %v963
        %1743 = vmatpush.msra.mxu0 %v947
        %1744 = vmatpush.msra.mxu0 %v931
        %1745 = vmatpush.msra.mxu0 %v915
        %1746 = vmatpush.msra.mxu0 %v899
        %1747 = vmatmul.f32.gmra.mxu0 %v671
        %v1748 = vpop.f32.mrf.mxu0
        %v1749 = vadd.f32 %v1325, %v1748
        %1750 = vdwg.mxu0
        %1751 = vmatpush.msra.mxu0 0.0
        %1752 = vmatpush.msra.mxu0 0.0
        %1753 = vmatpush.msra.mxu0 0.0
        %1754 = vmatpush.msra.mxu0 0.0
        %1755 = vmatpush.msra.mxu0 0.0
        %1756 = vmatpush.msra.mxu0 %v1315
        %1757 = vmatpush.msra.mxu0 %v1299
        %1758 = vmatpush.msra.mxu0 %v1283
        %1759 = vmatpush.msra.mxu0 %v1267
        %1760 = vmatpush.msra.mxu0 %v1251
        %1761 = vmatpush.msra.mxu0 %v1235
        %1762 = vmatpush.msra.mxu0 %v1219
        %1763 = vmatpush.msra.mxu0 %v1203
        %1764 = vmatpush.msra.mxu0 %v1187
        %1765 = vmatpush.msra.mxu0 %v1171
        %1766 = vmatpush.msra.mxu0 %v1155
        %1767 = vmatmul.f32.gmra.mxu0 %v1329
        %v1768 = vpop.f32.mrf.mxu0
        %v1769 = vadd.f32 %v1749, %v1768
        %1770 = vdwg.mxu0
        %1771 = vmatpush.msra.mxu0 %v1140
        %1772 = vmatpush.msra.mxu0 %v1124
        %1773 = vmatpush.msra.mxu0 %v1108
        %1774 = vmatpush.msra.mxu0 %v1092
        %1775 = vmatpush.msra.mxu0 %v1076
        %1776 = vmatpush.msra.mxu0 %v1060
        %1777 = vmatpush.msra.mxu0 %v1044
        %1778 = vmatpush.msra.mxu0 %v1028
        %1779 = vmatpush.msra.mxu0 %v1012
        %1780 = vmatpush.msra.mxu0 %v996
        %1781 = vmatpush.msra.mxu0 %v980
        %1782 = vmatpush.msra.mxu0 %v964
        %1783 = vmatpush.msra.mxu0 %v948
        %1784 = vmatpush.msra.mxu0 %v932
        %1785 = vmatpush.msra.mxu0 %v916
        %1786 = vmatpush.msra.mxu0 %v900
        %1787 = vmatmul.f32.gmra.mxu0 %v671
        %v1788 = vpop.f32.mrf.mxu0
        %v1789 = vadd.f32 %v1325, %v1788
        %1790 = vdwg.mxu0
        %1791 = vmatpush.msra.mxu0 0.0
        %1792 = vmatpush.msra.mxu0 0.0
        %1793 = vmatpush.msra.mxu0 0.0
        %1794 = vmatpush.msra.mxu0 0.0
        %1795 = vmatpush.msra.mxu0 0.0
        %1796 = vmatpush.msra.mxu0 %v1316
        %1797 = vmatpush.msra.mxu0 %v1300
        %1798 = vmatpush.msra.mxu0 %v1284
        %1799 = vmatpush.msra.mxu0 %v1268
        %1800 = vmatpush.msra.mxu0 %v1252
        %1801 = vmatpush.msra.mxu0 %v1236
        %1802 = vmatpush.msra.mxu0 %v1220
        %1803 = vmatpush.msra.mxu0 %v1204
        %1804 = vmatpush.msra.mxu0 %v1188
        %1805 = vmatpush.msra.mxu0 %v1172
        %1806 = vmatpush.msra.mxu0 %v1156
        %1807 = vmatmul.f32.gmra.mxu0 %v1329
        %v1808 = vpop.f32.mrf.mxu0
        %v1809 = vadd.f32 %v1789, %v1808
        %1810 = vdwg.mxu0
        %1811 = vmatpush.msra.mxu0 %v1141
        %1812 = vmatpush.msra.mxu0 %v1125
        %1813 = vmatpush.msra.mxu0 %v1109
        %1814 = vmatpush.msra.mxu0 %v1093
        %1815 = vmatpush.msra.mxu0 %v1077
        %1816 = vmatpush.msra.mxu0 %v1061
        %1817 = vmatpush.msra.mxu0 %v1045
        %1818 = vmatpush.msra.mxu0 %v1029
        %1819 = vmatpush.msra.mxu0 %v1013
        %1820 = vmatpush.msra.mxu0 %v997
        %1821 = vmatpush.msra.mxu0 %v981
        %1822 = vmatpush.msra.mxu0 %v965
        %1823 = vmatpush.msra.mxu0 %v949
        %1824 = vmatpush.msra.mxu0 %v933
        %1825 = vmatpush.msra.mxu0 %v917
        %1826 = vmatpush.msra.mxu0 %v901
        %1827 = vmatmul.f32.gmra.mxu0 %v671
        %v1828 = vpop.f32.mrf.mxu0
        %v1829 = vadd.f32 %v1325, %v1828
        %1830 = vdwg.mxu0
        %1831 = vmatpush.msra.mxu0 0.0
        %1832 = vmatpush.msra.mxu0 0.0
        %1833 = vmatpush.msra.mxu0 0.0
        %1834 = vmatpush.msra.mxu0 0.0
        %1835 = vmatpush.msra.mxu0 0.0
        %1836 = vmatpush.msra.mxu0 %v1317
        %1837 = vmatpush.msra.mxu0 %v1301
        %1838 = vmatpush.msra.mxu0 %v1285
        %1839 = vmatpush.msra.mxu0 %v1269
        %1840 = vmatpush.msra.mxu0 %v1253
        %1841 = vmatpush.msra.mxu0 %v1237
        %1842 = vmatpush.msra.mxu0 %v1221
        %1843 = vmatpush.msra.mxu0 %v1205
        %1844 = vmatpush.msra.mxu0 %v1189
        %1845 = vmatpush.msra.mxu0 %v1173
        %1846 = vmatpush.msra.mxu0 %v1157
        %1847 = vmatmul.f32.gmra.mxu0 %v1329
        %v1848 = vpop.f32.mrf.mxu0
        %v1849 = vadd.f32 %v1829, %v1848
        %1850 = vdwg.mxu0
        %1851 = vmatpush.msra.mxu0 %v1142
        %1852 = vmatpush.msra.mxu0 %v1126
        %1853 = vmatpush.msra.mxu0 %v1110
        %1854 = vmatpush.msra.mxu0 %v1094
        %1855 = vmatpush.msra.mxu0 %v1078
        %1856 = vmatpush.msra.mxu0 %v1062
        %1857 = vmatpush.msra.mxu0 %v1046
        %1858 = vmatpush.msra.mxu0 %v1030
        %1859 = vmatpush.msra.mxu0 %v1014
        %1860 = vmatpush.msra.mxu0 %v998
        %1861 = vmatpush.msra.mxu0 %v982
        %1862 = vmatpush.msra.mxu0 %v966
        %1863 = vmatpush.msra.mxu0 %v950
        %1864 = vmatpush.msra.mxu0 %v934
        %1865 = vmatpush.msra.mxu0 %v918
        %1866 = vmatpush.msra.mxu0 %v902
        %1867 = vmatmul.f32.gmra.mxu0 %v671
        %v1868 = vpop.f32.mrf.mxu0
        %v1869 = vadd.f32 %v1325, %v1868
        %1870 = vdwg.mxu0
        %1871 = vmatpush.msra.mxu0 0.0
        %1872 = vmatpush.msra.mxu0 0.0
        %1873 = vmatpush.msra.mxu0 0.0
        %1874 = vmatpush.msra.mxu0 0.0
        %1875 = vmatpush.msra.mxu0 0.0
        %1876 = vmatpush.msra.mxu0 %v1318
        %1877 = vmatpush.msra.mxu0 %v1302
        %1878 = vmatpush.msra.mxu0 %v1286
        %1879 = vmatpush.msra.mxu0 %v1270
        %1880 = vmatpush.msra.mxu0 %v1254
        %1881 = vmatpush.msra.mxu0 %v1238
        %1882 = vmatpush.msra.mxu0 %v1222
        %1883 = vmatpush.msra.mxu0 %v1206
        %1884 = vmatpush.msra.mxu0 %v1190
        %1885 = vmatpush.msra.mxu0 %v1174
        %1886 = vmatpush.msra.mxu0 %v1158
        %1887 = vmatmul.f32.gmra.mxu0 %v1329
        %v1888 = vpop.f32.mrf.mxu0
        %v1889 = vadd.f32 %v1869, %v1888
        %1890 = vdwg.mxu0
        %1891 = vmatpush.msra.mxu0 %v1143
        %1892 = vmatpush.msra.mxu0 %v1127
        %1893 = vmatpush.msra.mxu0 %v1111
        %1894 = vmatpush.msra.mxu0 %v1095
        %1895 = vmatpush.msra.mxu0 %v1079
        %1896 = vmatpush.msra.mxu0 %v1063
        %1897 = vmatpush.msra.mxu0 %v1047
        %1898 = vmatpush.msra.mxu0 %v1031
        %1899 = vmatpush.msra.mxu0 %v1015
        %1900 = vmatpush.msra.mxu0 %v999
        %1901 = vmatpush.msra.mxu0 %v983
        %1902 = vmatpush.msra.mxu0 %v967
        %1903 = vmatpush.msra.mxu0 %v951
        %1904 = vmatpush.msra.mxu0 %v935
        %1905 = vmatpush.msra.mxu0 %v919
        %1906 = vmatpush.msra.mxu0 %v903
        %1907 = vmatmul.f32.gmra.mxu0 %v671
        %v1908 = vpop.f32.mrf.mxu0
        %v1909 = vadd.f32 %v1325, %v1908
        %1910 = vdwg.mxu0
        %1911 = vmatpush.msra.mxu0 0.0
        %1912 = vmatpush.msra.mxu0 0.0
        %1913 = vmatpush.msra.mxu0 0.0
        %1914 = vmatpush.msra.mxu0 0.0
        %1915 = vmatpush.msra.mxu0 0.0
        %1916 = vmatpush.msra.mxu0 %v1319
        %1917 = vmatpush.msra.mxu0 %v1303
        %1918 = vmatpush.msra.mxu0 %v1287
        %1919 = vmatpush.msra.mxu0 %v1271
        %1920 = vmatpush.msra.mxu0 %v1255
        %1921 = vmatpush.msra.mxu0 %v1239
        %1922 = vmatpush.msra.mxu0 %v1223
        %1923 = vmatpush.msra.mxu0 %v1207
        %1924 = vmatpush.msra.mxu0 %v1191
        %1925 = vmatpush.msra.mxu0 %v1175
        %1926 = vmatpush.msra.mxu0 %v1159
        %1927 = vmatmul.f32.gmra.mxu0 %v1329
        %v1928 = vpop.f32.mrf.mxu0
        %v1929 = vadd.f32 %v1909, %v1928
        %1930 = vdwg.mxu0
        %1931 = vmatpush.msra.mxu0 %v1144
        %1932 = vmatpush.msra.mxu0 %v1128
        %1933 = vmatpush.msra.mxu0 %v1112
        %1934 = vmatpush.msra.mxu0 %v1096
        %1935 = vmatpush.msra.mxu0 %v1080
        %1936 = vmatpush.msra.mxu0 %v1064
        %1937 = vmatpush.msra.mxu0 %v1048
        %1938 = vmatpush.msra.mxu0 %v1032
        %1939 = vmatpush.msra.mxu0 %v1016
        %1940 = vmatpush.msra.mxu0 %v1000
        %1941 = vmatpush.msra.mxu0 %v984
        %1942 = vmatpush.msra.mxu0 %v968
        %1943 = vmatpush.msra.mxu0 %v952
        %1944 = vmatpush.msra.mxu0 %v936
        %1945 = vmatpush.msra.mxu0 %v920
        %1946 = vmatpush.msra.mxu0 %v904
        %1947 = vmatmul.f32.gmra.mxu0 %v671
        %v1948 = vpop.f32.mrf.mxu0
        %v1949 = vadd.f32 %v1325, %v1948
        %1950 = vdwg.mxu0
        %1951 = vmatpush.msra.mxu0 0.0
        %1952 = vmatpush.msra.mxu0 0.0
        %1953 = vmatpush.msra.mxu0 0.0
        %1954 = vmatpush.msra.mxu0 0.0
        %1955 = vmatpush.msra.mxu0 0.0
        %1956 = vmatpush.msra.mxu0 %v1320
        %1957 = vmatpush.msra.mxu0 %v1304
        %1958 = vmatpush.msra.mxu0 %v1288
        %1959 = vmatpush.msra.mxu0 %v1272
        %1960 = vmatpush.msra.mxu0 %v1256
        %1961 = vmatpush.msra.mxu0 %v1240
        %1962 = vmatpush.msra.mxu0 %v1224
        %1963 = vmatpush.msra.mxu0 %v1208
        %1964 = vmatpush.msra.mxu0 %v1192
        %1965 = vmatpush.msra.mxu0 %v1176
        %1966 = vmatpush.msra.mxu0 %v1160
        %1967 = vmatmul.f32.gmra.mxu0 %v1329
        %v1968 = vpop.f32.mrf.mxu0
        %v1969 = vadd.f32 %v1949, %v1968
        %1970 = vdwg.mxu0
        %v1971 = vmax.f32 %v1369, 0.0
        %v1972 = vmax.f32 %v1409, 0.0
        %v1973 = vmax.f32 %v1449, 0.0
        %v1974 = vmax.f32 %v1489, 0.0
        %v1975 = vmax.f32 %v1529, 0.0
        %v1976 = vmax.f32 %v1569, 0.0
        %v1977 = vmax.f32 %v1609, 0.0
        %v1978 = vmax.f32 %v1649, 0.0
        %v1979 = vmax.f32 %v1689, 0.0
        %v1980 = vmax.f32 %v1729, 0.0
        %v1981 = vmax.f32 %v1769, 0.0
        %v1982 = vmax.f32 %v1809, 0.0
        %v1983 = vmax.f32 %v1849, 0.0
        %v1984 = vmax.f32 %v1889, 0.0
        %v1985 = vmax.f32 %v1929, 0.0
        %v1986 = vmax.f32 %v1969, 0.0
        %v1987 = vld [vmem:[%s3] sm:$0xff]
        %v1988 = vld [vmem:[%s3 + $0x8] sm:$0xff]
        %v1989 = vld [vmem:[%s4] sm:$0xff]
        %v1990 = vld [vmem:[%s4 + $0x8] sm:$0xff]
        %1992 = vset.pattern.permute.xlu0 0
        %1993 = vperm.xlu0 %1992, %v1989
        %v1994 = vpop.permute.xlu0 %1993
        %1997 = vset.pattern.permute.xlu0 0
        %1998 = vperm.xlu0 %1997, %v1990
        %v1999 = vpop.permute.xlu0 %1998
        %vm2001 = vcmask 64512
        %v2003 = vsel %vm2001, %v1987, 0
        %v2006 = vsel %vm2001, %v1988, 0
        %2008 = vmatpush.msra.mxu0 0.0
        %2009 = vmatpush.msra.mxu0 0.0
        %2010 = vmatpush.msra.mxu0 0.0
        %2011 = vmatpush.msra.mxu0 0.0
        %2012 = vmatpush.msra.mxu0 0.0
        %2013 = vmatpush.msra.mxu0 0.0
        %2014 = vmatpush.msra.mxu0 0.0
        %2015 = vmatpush.msra.mxu0 0.0
        %2016 = vmatpush.msra.mxu0 0.0
        %2017 = vmatpush.msra.mxu0 0.0
        %2018 = vmatpush.msra.mxu0 0.0
        %2019 = vmatpush.msra.mxu0 0.0
        %2020 = vmatpush.msra.mxu0 0.0
        %2021 = vmatpush.msra.mxu0 0.0
        %2022 = vmatpush.msra.mxu0 0.0
        %2023 = vmatpush.msra.mxu0 %v1971
        %2024 = vmatmul.f32.gmra.mxu0 %v2003
        %v2025 = vpop.f32.mrf.mxu0
        %v2026 = vadd.f32 %v1994, %v2025
        %2027 = vmatmul.f32.gmra.mxu0 %v2006
        %v2028 = vpop.f32.mrf.mxu0
        %v2029 = vadd.f32 %v1999, %v2028
        %2030 = vdwg.mxu0
        %2031 = vmatpush.msra.mxu0 0.0
        %2032 = vmatpush.msra.mxu0 0.0
        %2033 = vmatpush.msra.mxu0 0.0
        %2034 = vmatpush.msra.mxu0 0.0
        %2035 = vmatpush.msra.mxu0 0.0
        %2036 = vmatpush.msra.mxu0 0.0
        %2037 = vmatpush.msra.mxu0 0.0
        %2038 = vmatpush.msra.mxu0 0.0
        %2039 = vmatpush.msra.mxu0 0.0
        %2040 = vmatpush.msra.mxu0 0.0
        %2041 = vmatpush.msra.mxu0 0.0
        %2042 = vmatpush.msra.mxu0 0.0
        %2043 = vmatpush.msra.mxu0 0.0
        %2044 = vmatpush.msra.mxu0 0.0
        %2045 = vmatpush.msra.mxu0 0.0
        %2046 = vmatpush.msra.mxu0 %v1972
        %2047 = vmatmul.f32.gmra.mxu0 %v2003
        %v2048 = vpop.f32.mrf.mxu0
        %v2049 = vadd.f32 %v1994, %v2048
        %2050 = vmatmul.f32.gmra.mxu0 %v2006
        %v2051 = vpop.f32.mrf.mxu0
        %v2052 = vadd.f32 %v1999, %v2051
        %2053 = vdwg.mxu0
        %2054 = vmatpush.msra.mxu0 0.0
        %2055 = vmatpush.msra.mxu0 0.0
        %2056 = vmatpush.msra.mxu0 0.0
        %2057 = vmatpush.msra.mxu0 0.0
        %2058 = vmatpush.msra.mxu0 0.0
        %2059 = vmatpush.msra.mxu0 0.0
        %2060 = vmatpush.msra.mxu0 0.0
        %2061 = vmatpush.msra.mxu0 0.0
        %2062 = vmatpush.msra.mxu0 0.0
        %2063 = vmatpush.msra.mxu0 0.0
        %2064 = vmatpush.msra.mxu0 0.0
        %2065 = vmatpush.msra.mxu0 0.0
        %2066 = vmatpush.msra.mxu0 0.0
        %2067 = vmatpush.msra.mxu0 0.0
        %2068 = vmatpush.msra.mxu0 0.0
        %2069 = vmatpush.msra.mxu0 %v1973
        %2070 = vmatmul.f32.gmra.mxu0 %v2003
        %v2071 = vpop.f32.mrf.mxu0
        %v2072 = vadd.f32 %v1994, %v2071
        %2073 = vmatmul.f32.gmra.mxu0 %v2006
        %v2074 = vpop.f32.mrf.mxu0
        %v2075 = vadd.f32 %v1999, %v2074
        %2076 = vdwg.mxu0
        %2077 = vmatpush.msra.mxu0 0.0
        %2078 = vmatpush.msra.mxu0 0.0
        %2079 = vmatpush.msra.mxu0 0.0
        %2080 = vmatpush.msra.mxu0 0.0
        %2081 = vmatpush.msra.mxu0 0.0
        %2082 = vmatpush.msra.mxu0 0.0
        %2083 = vmatpush.msra.mxu0 0.0
        %2084 = vmatpush.msra.mxu0 0.0
        %2085 = vmatpush.msra.mxu0 0.0
        %2086 = vmatpush.msra.mxu0 0.0
        %2087 = vmatpush.msra.mxu0 0.0
        %2088 = vmatpush.msra.mxu0 0.0
        %2089 = vmatpush.msra.mxu0 0.0
        %2090 = vmatpush.msra.mxu0 0.0
        %2091 = vmatpush.msra.mxu0 0.0
        %2092 = vmatpush.msra.mxu0 %v1974
        %2093 = vmatmul.f32.gmra.mxu0 %v2003
        %v2094 = vpop.f32.mrf.mxu0
        %v2095 = vadd.f32 %v1994, %v2094
        %2096 = vmatmul.f32.gmra.mxu0 %v2006
        %v2097 = vpop.f32.mrf.mxu0
        %v2098 = vadd.f32 %v1999, %v2097
        %2099 = vdwg.mxu0
        %2100 = vmatpush.msra.mxu0 0.0
        %2101 = vmatpush.msra.mxu0 0.0
        %2102 = vmatpush.msra.mxu0 0.0
        %2103 = vmatpush.msra.mxu0 0.0
        %2104 = vmatpush.msra.mxu0 0.0
        %2105 = vmatpush.msra.mxu0 0.0
        %2106 = vmatpush.msra.mxu0 0.0
        %2107 = vmatpush.msra.mxu0 0.0
        %2108 = vmatpush.msra.mxu0 0.0
        %2109 = vmatpush.msra.mxu0 0.0
        %2110 = vmatpush.msra.mxu0 0.0
        %2111 = vmatpush.msra.mxu0 0.0
        %2112 = vmatpush.msra.mxu0 0.0
        %2113 = vmatpush.msra.mxu0 0.0
        %2114 = vmatpush.msra.mxu0 0.0
        %2115 = vmatpush.msra.mxu0 %v1975
        %2116 = vmatmul.f32.gmra.mxu0 %v2003
        %v2117 = vpop.f32.mrf.mxu0
        %v2118 = vadd.f32 %v1994, %v2117
        %2119 = vmatmul.f32.gmra.mxu0 %v2006
        %v2120 = vpop.f32.mrf.mxu0
        %v2121 = vadd.f32 %v1999, %v2120
        %2122 = vdwg.mxu0
        %2123 = vmatpush.msra.mxu0 0.0
        %2124 = vmatpush.msra.mxu0 0.0
        %2125 = vmatpush.msra.mxu0 0.0
        %2126 = vmatpush.msra.mxu0 0.0
        %2127 = vmatpush.msra.mxu0 0.0
        %2128 = vmatpush.msra.mxu0 0.0
        %2129 = vmatpush.msra.mxu0 0.0
        %2130 = vmatpush.msra.mxu0 0.0
        %2131 = vmatpush.msra.mxu0 0.0
        %2132 = vmatpush.msra.mxu0 0.0
        %2133 = vmatpush.msra.mxu0 0.0
        %2134 = vmatpush.msra.mxu0 0.0
        %2135 = vmatpush.msra.mxu0 0.0
        %2136 = vmatpush.msra.mxu0 0.0
        %2137 = vmatpush.msra.mxu0 0.0
        %2138 = vmatpush.msra.mxu0 %v1976
        %2139 = vmatmul.f32.gmra.mxu0 %v2003
        %v2140 = vpop.f32.mrf.mxu0
        %v2141 = vadd.f32 %v1994, %v2140
        %2142 = vmatmul.f32.gmra.mxu0 %v2006
        %v2143 = vpop.f32.mrf.mxu0
        %v2144 = vadd.f32 %v1999, %v2143
        %2145 = vdwg.mxu0
        %2146 = vmatpush.msra.mxu0 0.0
        %2147 = vmatpush.msra.mxu0 0.0
        %2148 = vmatpush.msra.mxu0 0.0
        %2149 = vmatpush.msra.mxu0 0.0
        %2150 = vmatpush.msra.mxu0 0.0
        %2151 = vmatpush.msra.mxu0 0.0
        %2152 = vmatpush.msra.mxu0 0.0
        %2153 = vmatpush.msra.mxu0 0.0
        %2154 = vmatpush.msra.mxu0 0.0
        %2155 = vmatpush.msra.mxu0 0.0
        %2156 = vmatpush.msra.mxu0 0.0
        %2157 = vmatpush.msra.mxu0 0.0
        %2158 = vmatpush.msra.mxu0 0.0
        %2159 = vmatpush.msra.mxu0 0.0
        %2160 = vmatpush.msra.mxu0 0.0
        %2161 = vmatpush.msra.mxu0 %v1977
        %2162 = vmatmul.f32.gmra.mxu0 %v2003
        %v2163 = vpop.f32.mrf.mxu0
        %v2164 = vadd.f32 %v1994, %v2163
        %2165 = vmatmul.f32.gmra.mxu0 %v2006
        %v2166 = vpop.f32.mrf.mxu0
        %v2167 = vadd.f32 %v1999, %v2166
        %2168 = vdwg.mxu0
        %2169 = vmatpush.msra.mxu0 0.0
        %2170 = vmatpush.msra.mxu0 0.0
        %2171 = vmatpush.msra.mxu0 0.0
        %2172 = vmatpush.msra.mxu0 0.0
        %2173 = vmatpush.msra.mxu0 0.0
        %2174 = vmatpush.msra.mxu0 0.0
        %2175 = vmatpush.msra.mxu0 0.0
        %2176 = vmatpush.msra.mxu0 0.0
        %2177 = vmatpush.msra.mxu0 0.0
        %2178 = vmatpush.msra.mxu0 0.0
        %2179 = vmatpush.msra.mxu0 0.0
        %2180 = vmatpush.msra.mxu0 0.0
        %2181 = vmatpush.msra.mxu0 0.0
        %2182 = vmatpush.msra.mxu0 0.0
        %2183 = vmatpush.msra.mxu0 0.0
        %2184 = vmatpush.msra.mxu0 %v1978
        %2185 = vmatmul.f32.gmra.mxu0 %v2003
        %v2186 = vpop.f32.mrf.mxu0
        %v2187 = vadd.f32 %v1994, %v2186
        %2188 = vmatmul.f32.gmra.mxu0 %v2006
        %v2189 = vpop.f32.mrf.mxu0
        %v2190 = vadd.f32 %v1999, %v2189
        %2191 = vdwg.mxu0
        %2192 = vmatpush.msra.mxu0 0.0
        %2193 = vmatpush.msra.mxu0 0.0
        %2194 = vmatpush.msra.mxu0 0.0
        %2195 = vmatpush.msra.mxu0 0.0
        %2196 = vmatpush.msra.mxu0 0.0
        %2197 = vmatpush.msra.mxu0 0.0
        %2198 = vmatpush.msra.mxu0 0.0
        %2199 = vmatpush.msra.mxu0 0.0
        %2200 = vmatpush.msra.mxu0 0.0
        %2201 = vmatpush.msra.mxu0 0.0
        %2202 = vmatpush.msra.mxu0 0.0
        %2203 = vmatpush.msra.mxu0 0.0
        %2204 = vmatpush.msra.mxu0 0.0
        %2205 = vmatpush.msra.mxu0 0.0
        %2206 = vmatpush.msra.mxu0 0.0
        %2207 = vmatpush.msra.mxu0 %v1979
        %2208 = vmatmul.f32.gmra.mxu0 %v2003
        %v2209 = vpop.f32.mrf.mxu0
        %v2210 = vadd.f32 %v1994, %v2209
        %2211 = vmatmul.f32.gmra.mxu0 %v2006
        %v2212 = vpop.f32.mrf.mxu0
        %v2213 = vadd.f32 %v1999, %v2212
        %2214 = vdwg.mxu0
        %2215 = vmatpush.msra.mxu0 0.0
        %2216 = vmatpush.msra.mxu0 0.0
        %2217 = vmatpush.msra.mxu0 0.0
        %2218 = vmatpush.msra.mxu0 0.0
        %2219 = vmatpush.msra.mxu0 0.0
        %2220 = vmatpush.msra.mxu0 0.0
        %2221 = vmatpush.msra.mxu0 0.0
        %2222 = vmatpush.msra.mxu0 0.0
        %2223 = vmatpush.msra.mxu0 0.0
        %2224 = vmatpush.msra.mxu0 0.0
        %2225 = vmatpush.msra.mxu0 0.0
        %2226 = vmatpush.msra.mxu0 0.0
        %2227 = vmatpush.msra.mxu0 0.0
        %2228 = vmatpush.msra.mxu0 0.0
        %2229 = vmatpush.msra.mxu0 0.0
        %2230 = vmatpush.msra.mxu0 %v1980
        %2231 = vmatmul.f32.gmra.mxu0 %v2003
        %v2232 = vpop.f32.mrf.mxu0
        %v2233 = vadd.f32 %v1994, %v2232
        %2234 = vmatmul.f32.gmra.mxu0 %v2006
        %v2235 = vpop.f32.mrf.mxu0
        %v2236 = vadd.f32 %v1999, %v2235
        %2237 = vdwg.mxu0
        %2238 = vmatpush.msra.mxu0 0.0
        %2239 = vmatpush.msra.mxu0 0.0
        %2240 = vmatpush.msra.mxu0 0.0
        %2241 = vmatpush.msra.mxu0 0.0
        %2242 = vmatpush.msra.mxu0 0.0
        %2243 = vmatpush.msra.mxu0 0.0
        %2244 = vmatpush.msra.mxu0 0.0
        %2245 = vmatpush.msra.mxu0 0.0
        %2246 = vmatpush.msra.mxu0 0.0
        %2247 = vmatpush.msra.mxu0 0.0
        %2248 = vmatpush.msra.mxu0 0.0
        %2249 = vmatpush.msra.mxu0 0.0
        %2250 = vmatpush.msra.mxu0 0.0
        %2251 = vmatpush.msra.mxu0 0.0
        %2252 = vmatpush.msra.mxu0 0.0
        %2253 = vmatpush.msra.mxu0 %v1981
        %2254 = vmatmul.f32.gmra.mxu0 %v2003
        %v2255 = vpop.f32.mrf.mxu0
        %v2256 = vadd.f32 %v1994, %v2255
        %2257 = vmatmul.f32.gmra.mxu0 %v2006
        %v2258 = vpop.f32.mrf.mxu0
        %v2259 = vadd.f32 %v1999, %v2258
        %2260 = vdwg.mxu0
        %2261 = vmatpush.msra.mxu0 0.0
        %2262 = vmatpush.msra.mxu0 0.0
        %2263 = vmatpush.msra.mxu0 0.0
        %2264 = vmatpush.msra.mxu0 0.0
        %2265 = vmatpush.msra.mxu0 0.0
        %2266 = vmatpush.msra.mxu0 0.0
        %2267 = vmatpush.msra.mxu0 0.0
        %2268 = vmatpush.msra.mxu0 0.0
        %2269 = vmatpush.msra.mxu0 0.0
        %2270 = vmatpush.msra.mxu0 0.0
        %2271 = vmatpush.msra.mxu0 0.0
        %2272 = vmatpush.msra.mxu0 0.0
        %2273 = vmatpush.msra.mxu0 0.0
        %2274 = vmatpush.msra.mxu0 0.0
        %2275 = vmatpush.msra.mxu0 0.0
        %2276 = vmatpush.msra.mxu0 %v1982
        %2277 = vmatmul.f32.gmra.mxu0 %v2003
        %v2278 = vpop.f32.mrf.mxu0
        %v2279 = vadd.f32 %v1994, %v2278
        %2280 = vmatmul.f32.gmra.mxu0 %v2006
        %v2281 = vpop.f32.mrf.mxu0
        %v2282 = vadd.f32 %v1999, %v2281
        %2283 = vdwg.mxu0
        %2284 = vmatpush.msra.mxu0 0.0
        %2285 = vmatpush.msra.mxu0 0.0
        %2286 = vmatpush.msra.mxu0 0.0
        %2287 = vmatpush.msra.mxu0 0.0
        %2288 = vmatpush.msra.mxu0 0.0
        %2289 = vmatpush.msra.mxu0 0.0
        %2290 = vmatpush.msra.mxu0 0.0
        %2291 = vmatpush.msra.mxu0 0.0
        %2292 = vmatpush.msra.mxu0 0.0
        %2293 = vmatpush.msra.mxu0 0.0
        %2294 = vmatpush.msra.mxu0 0.0
        %2295 = vmatpush.msra.mxu0 0.0
        %2296 = vmatpush.msra.mxu0 0.0
        %2297 = vmatpush.msra.mxu0 0.0
        %2298 = vmatpush.msra.mxu0 0.0
        %2299 = vmatpush.msra.mxu0 %v1983
        %2300 = vmatmul.f32.gmra.mxu0 %v2003
        %v2301 = vpop.f32.mrf.mxu0
        %v2302 = vadd.f32 %v1994, %v2301
        %2303 = vmatmul.f32.gmra.mxu0 %v2006
        %v2304 = vpop.f32.mrf.mxu0
        %v2305 = vadd.f32 %v1999, %v2304
        %2306 = vdwg.mxu0
        %2307 = vmatpush.msra.mxu0 0.0
        %2308 = vmatpush.msra.mxu0 0.0
        %2309 = vmatpush.msra.mxu0 0.0
        %2310 = vmatpush.msra.mxu0 0.0
        %2311 = vmatpush.msra.mxu0 0.0
        %2312 = vmatpush.msra.mxu0 0.0
        %2313 = vmatpush.msra.mxu0 0.0
        %2314 = vmatpush.msra.mxu0 0.0
        %2315 = vmatpush.msra.mxu0 0.0
        %2316 = vmatpush.msra.mxu0 0.0
        %2317 = vmatpush.msra.mxu0 0.0
        %2318 = vmatpush.msra.mxu0 0.0
        %2319 = vmatpush.msra.mxu0 0.0
        %2320 = vmatpush.msra.mxu0 0.0
        %2321 = vmatpush.msra.mxu0 0.0
        %2322 = vmatpush.msra.mxu0 %v1984
        %2323 = vmatmul.f32.gmra.mxu0 %v2003
        %v2324 = vpop.f32.mrf.mxu0
        %v2325 = vadd.f32 %v1994, %v2324
        %2326 = vmatmul.f32.gmra.mxu0 %v2006
        %v2327 = vpop.f32.mrf.mxu0
        %v2328 = vadd.f32 %v1999, %v2327
        %2329 = vdwg.mxu0
        %2330 = vmatpush.msra.mxu0 0.0
        %2331 = vmatpush.msra.mxu0 0.0
        %2332 = vmatpush.msra.mxu0 0.0
        %2333 = vmatpush.msra.mxu0 0.0
        %2334 = vmatpush.msra.mxu0 0.0
        %2335 = vmatpush.msra.mxu0 0.0
        %2336 = vmatpush.msra.mxu0 0.0
        %2337 = vmatpush.msra.mxu0 0.0
        %2338 = vmatpush.msra.mxu0 0.0
        %2339 = vmatpush.msra.mxu0 0.0
        %2340 = vmatpush.msra.mxu0 0.0
        %2341 = vmatpush.msra.mxu0 0.0
        %2342 = vmatpush.msra.mxu0 0.0
        %2343 = vmatpush.msra.mxu0 0.0
        %2344 = vmatpush.msra.mxu0 0.0
        %2345 = vmatpush.msra.mxu0 %v1985
        %2346 = vmatmul.f32.gmra.mxu0 %v2003
        %v2347 = vpop.f32.mrf.mxu0
        %v2348 = vadd.f32 %v1994, %v2347
        %2349 = vmatmul.f32.gmra.mxu0 %v2006
        %v2350 = vpop.f32.mrf.mxu0
        %v2351 = vadd.f32 %v1999, %v2350
        %2352 = vdwg.mxu0
        %2353 = vmatpush.msra.mxu0 0.0
        %2354 = vmatpush.msra.mxu0 0.0
        %2355 = vmatpush.msra.mxu0 0.0
        %2356 = vmatpush.msra.mxu0 0.0
        %2357 = vmatpush.msra.mxu0 0.0
        %2358 = vmatpush.msra.mxu0 0.0
        %2359 = vmatpush.msra.mxu0 0.0
        %2360 = vmatpush.msra.mxu0 0.0
        %2361 = vmatpush.msra.mxu0 0.0
        %2362 = vmatpush.msra.mxu0 0.0
        %2363 = vmatpush.msra.mxu0 0.0
        %2364 = vmatpush.msra.mxu0 0.0
        %2365 = vmatpush.msra.mxu0 0.0
        %2366 = vmatpush.msra.mxu0 0.0
        %2367 = vmatpush.msra.mxu0 0.0
        %2368 = vmatpush.msra.mxu0 %v1986
        %2369 = vmatmul.f32.gmra.mxu0 %v2003
        %v2370 = vpop.f32.mrf.mxu0
        %v2371 = vadd.f32 %v1994, %v2370
        %2372 = vmatmul.f32.gmra.mxu0 %v2006
        %v2373 = vpop.f32.mrf.mxu0
        %v2374 = vadd.f32 %v1999, %v2373
        %2375 = vdwg.mxu0
        %2376 = vst [vmem:[%s668] sm:$0xff] %v2026
        %2377 = vst [vmem:[%s668 + $0x8] sm:$0xff] %v2049
        %2378 = vst [vmem:[%s668 + $0x10] sm:$0xff] %v2072
        %2379 = vst [vmem:[%s668 + $0x18] sm:$0xff] %v2095
        %2380 = vst [vmem:[%s668 + $0x20] sm:$0xff] %v2118
        %2381 = vst [vmem:[%s668 + $0x28] sm:$0xff] %v2141
        %2382 = vst [vmem:[%s668 + $0x30] sm:$0xff] %v2164
        %2383 = vst [vmem:[%s668 + $0x38] sm:$0xff] %v2187
        %2384 = vst [vmem:[%s668 + $0x40] sm:$0xff] %v2210
        %2385 = vst [vmem:[%s668 + $0x48] sm:$0xff] %v2233
        %2386 = vst [vmem:[%s668 + $0x50] sm:$0xff] %v2256
        %2387 = vst [vmem:[%s668 + $0x58] sm:$0xff] %v2279
        %2388 = vst [vmem:[%s668 + $0x60] sm:$0xff] %v2302
        %2389 = vst [vmem:[%s668 + $0x68] sm:$0xff] %v2325
        %2390 = vst [vmem:[%s668 + $0x70] sm:$0xff] %v2348
        %2391 = vst [vmem:[%s668 + $0x78] sm:$0xff] %v2371
        %2392 = vst [vmem:[%s668 + $0x80] sm:$0xff] %v2029
        %2393 = vst [vmem:[%s668 + $0x88] sm:$0xff] %v2052
        %2394 = vst [vmem:[%s668 + $0x90] sm:$0xff] %v2075
        %2395 = vst [vmem:[%s668 + $0x98] sm:$0xff] %v2098
        %2396 = vst [vmem:[%s668 + $0xa0] sm:$0xff] %v2121
        %2397 = vst [vmem:[%s668 + $0xa8] sm:$0xff] %v2144
        %2398 = vst [vmem:[%s668 + $0xb0] sm:$0xff] %v2167
        %2399 = vst [vmem:[%s668 + $0xb8] sm:$0xff] %v2190
        %2400 = vst [vmem:[%s668 + $0xc0] sm:$0xff] %v2213
        %2401 = vst [vmem:[%s668 + $0xc8] sm:$0xff] %v2236
        %2402 = vst [vmem:[%s668 + $0xd0] sm:$0xff] %v2259
        %2403 = vst [vmem:[%s668 + $0xd8] sm:$0xff] %v2282
        %2404 = vst [vmem:[%s668 + $0xe0] sm:$0xff] %v2305
        %2405 = vst [vmem:[%s668 + $0xe8] sm:$0xff] %v2328
        %2406 = vst [vmem:[%s668 + $0xf0] sm:$0xff] %v2351
        %2407 = vst [vmem:[%s668 + $0xf8] sm:$0xff] %v2374
        %s2408 = sand.u32 %s134, 1
        %s2409 = sand.u32 %s134, 1
        %s2410 = smul.addr %s2409, 256
        %s2411 = scalar_lea.vmem [#allocation3], %s2410
        // Predicated region
        $region64: #{forward.13} parent=58 // pred_check
          %p2412 = pneg %p144
        $region65: #{forward.13} parent=58 // pred_check_branch
          %2414 = sbr.rel (%p2412) target = $region67
        $region66: #{forward.13} parent=58 // pred_region
          %s2415 = smul.u32 16, %s16
          %s2416 = smul.addr %s2415, 8
          %s2417 = scalar_lea.vmem %s5, %s2416
          // Predicated region
          $region68: #{forward.13} parent=66 // pred_check
            _
          $region69: #{forward.13} parent=66 // pred_check_branch
            %2419 = sbr.rel (0) target = $region71
          $region70: #{forward.13} parent=66 // pred_region
            // Predicated region
            $region72: #{forward.13} parent=70 // pred_check
              _
            $region73: #{forward.13} parent=70 // pred_check_branch
              %2421 = sbr.rel (0) target = $region75
            $region74: #{forward.13} parent=70 // pred_region
              loop: start=0, step=1, limit=1
              $region76: #{forward.13} parent=74 // loop_pre_header
                _
              $region77: #{forward.13} parent=74 // loop_header
                %s2423 = sphi 0, %s2427
                %p2424 = scmp.ge.s32.totalorder %s2423, 1
                %s2428 = sphi %s2411, %s2411
                %s2429 = sphi %s2417, %s2417
              $region78: #{forward.13} parent=74 // loop_header_branch
                %2426 = sbr.rel (%p2424) target = $region82
              $region79: #{forward.13} parent=74 // loop_body
                %v2430 = vld [vmem:[%s2428] sm:$0xff]
                %2431 = vst [vmem:[%s2429] sm:$0xff] %v2430
                %v2432 = vld [vmem:[%s2428 + $0x8] sm:$0xff]
                %2433 = vst [vmem:[%s2429 + $0x8] sm:$0xff] %v2432
                %v2434 = vld [vmem:[%s2428 + $0x10] sm:$0xff]
                %2435 = vst [vmem:[%s2429 + $0x10] sm:$0xff] %v2434
                %v2436 = vld [vmem:[%s2428 + $0x18] sm:$0xff]
                %2437 = vst [vmem:[%s2429 + $0x18] sm:$0xff] %v2436
                %v2438 = vld [vmem:[%s2428 + $0x20] sm:$0xff]
                %2439 = vst [vmem:[%s2429 + $0x20] sm:$0xff] %v2438
                %v2440 = vld [vmem:[%s2428 + $0x28] sm:$0xff]
                %2441 = vst [vmem:[%s2429 + $0x28] sm:$0xff] %v2440
                %v2442 = vld [vmem:[%s2428 + $0x30] sm:$0xff]
                %2443 = vst [vmem:[%s2429 + $0x30] sm:$0xff] %v2442
                %v2444 = vld [vmem:[%s2428 + $0x38] sm:$0xff]
                %2445 = vst [vmem:[%s2429 + $0x38] sm:$0xff] %v2444
                %v2446 = vld [vmem:[%s2428 + $0x40] sm:$0xff]
                %2447 = vst [vmem:[%s2429 + $0x40] sm:$0xff] %v2446
                %v2448 = vld [vmem:[%s2428 + $0x48] sm:$0xff]
                %2449 = vst [vmem:[%s2429 + $0x48] sm:$0xff] %v2448
                %v2450 = vld [vmem:[%s2428 + $0x50] sm:$0xff]
                %2451 = vst [vmem:[%s2429 + $0x50] sm:$0xff] %v2450
                %v2452 = vld [vmem:[%s2428 + $0x58] sm:$0xff]
                %2453 = vst [vmem:[%s2429 + $0x58] sm:$0xff] %v2452
                %v2454 = vld [vmem:[%s2428 + $0x60] sm:$0xff]
                %2455 = vst [vmem:[%s2429 + $0x60] sm:$0xff] %v2454
                %v2456 = vld [vmem:[%s2428 + $0x68] sm:$0xff]
                %2457 = vst [vmem:[%s2429 + $0x68] sm:$0xff] %v2456
                %v2458 = vld [vmem:[%s2428 + $0x70] sm:$0xff]
                %2459 = vst [vmem:[%s2429 + $0x70] sm:$0xff] %v2458
                %v2460 = vld [vmem:[%s2428 + $0x78] sm:$0xff]
                %2461 = vst [vmem:[%s2429 + $0x78] sm:$0xff] %v2460
                %v2462 = vld [vmem:[%s2428 + $0x80] sm:$0xff]
                %2463 = vst [vmem:[%s2429 + $0x200] sm:$0xff] %v2462
                %v2464 = vld [vmem:[%s2428 + $0x88] sm:$0xff]
                %2465 = vst [vmem:[%s2429 + $0x208] sm:$0xff] %v2464
                %v2466 = vld [vmem:[%s2428 + $0x90] sm:$0xff]
                %2467 = vst [vmem:[%s2429 + $0x210] sm:$0xff] %v2466
                %v2468 = vld [vmem:[%s2428 + $0x98] sm:$0xff]
                %2469 = vst [vmem:[%s2429 + $0x218] sm:$0xff] %v2468
                %v2470 = vld [vmem:[%s2428 + $0xa0] sm:$0xff]
                %2471 = vst [vmem:[%s2429 + $0x220] sm:$0xff] %v2470
                %v2472 = vld [vmem:[%s2428 + $0xa8] sm:$0xff]
                %2473 = vst [vmem:[%s2429 + $0x228] sm:$0xff] %v2472
                %v2474 = vld [vmem:[%s2428 + $0xb0] sm:$0xff]
                %2475 = vst [vmem:[%s2429 + $0x230] sm:$0xff] %v2474
                %v2476 = vld [vmem:[%s2428 + $0xb8] sm:$0xff]
                %2477 = vst [vmem:[%s2429 + $0x238] sm:$0xff] %v2476
                %v2478 = vld [vmem:[%s2428 + $0xc0] sm:$0xff]
                %2479 = vst [vmem:[%s2429 + $0x240] sm:$0xff] %v2478
                %v2480 = vld [vmem:[%s2428 + $0xc8] sm:$0xff]
                %2481 = vst [vmem:[%s2429 + $0x248] sm:$0xff] %v2480
                %v2482 = vld [vmem:[%s2428 + $0xd0] sm:$0xff]
                %2483 = vst [vmem:[%s2429 + $0x250] sm:$0xff] %v2482
                %v2484 = vld [vmem:[%s2428 + $0xd8] sm:$0xff]
                %2485 = vst [vmem:[%s2429 + $0x258] sm:$0xff] %v2484
                %v2486 = vld [vmem:[%s2428 + $0xe0] sm:$0xff]
                %2487 = vst [vmem:[%s2429 + $0x260] sm:$0xff] %v2486
                %v2488 = vld [vmem:[%s2428 + $0xe8] sm:$0xff]
                %2489 = vst [vmem:[%s2429 + $0x268] sm:$0xff] %v2488
                %v2490 = vld [vmem:[%s2428 + $0xf0] sm:$0xff]
                %2491 = vst [vmem:[%s2429 + $0x270] sm:$0xff] %v2490
                %v2492 = vld [vmem:[%s2428 + $0xf8] sm:$0xff]
                %2493 = vst [vmem:[%s2429 + $0x278] sm:$0xff] %v2492
              $region80: #{forward.13} parent=74 // loop_footer
                %s2427 = sadd.s32 1, %s2423
              $region81: #{forward.13} parent=74 // loop_footer_branch
                %2422 = sbr.rel target = $region77
              $region82: #{forward.13} parent=74 // loop_exit
                _
            $region75: #{forward.13} parent=70 // pred_fallthru
              _
            // Predicated region
            $region83: #{forward.13} parent=70 // pred_check
              _
            $region84: #{forward.13} parent=70 // pred_check_branch
              %2495 = sbr.rel target = $region86
            $region85: #{forward.13} parent=70 // pred_region
              _
            $region86: #{forward.13} parent=70 // pred_fallthru
              _
          $region71: #{forward.13} parent=66 // pred_fallthru
            _
          %2496 = vnop
        $region67: #{forward.13} parent=58 // pred_fallthru
          _
      $region59: #{forward.13} parent=5 // pred_fallthru
        _
      %p2497 = scmp.le.s32.totalorder 2, %s11
      // Predicated region
      $region87: #{forward.13} parent=5 // pred_check
        %p2498 = pneg %p2497
      $region88: #{forward.13} parent=5 // pred_check_branch
        %2500 = sbr.rel (%p2498) target = $region90
      $region89: #{forward.13} parent=5 // pred_region
        %s2501 = ssub.s32 %s11, 2
        // Predicated region
        $region91: #{forward.13} parent=89 // pred_check
          %p2502 = pneg %p150
        $region92: #{forward.13} parent=89 // pred_check_branch
          %2504 = sbr.rel (%p2502) target = $region94
        $region93: #{forward.13} parent=89 // pred_region
          %s2505 = sand.u32 %s135, 1
          %s2506 = sand.u32 %s135, 1
          %s2507 = smul.addr %s2506, 256
          %s2508 = scalar_lea.vmem [#allocation3], %s2507
        $region94: #{forward.13} parent=89 // pred_fallthru
          _
      $region90: #{forward.13} parent=5 // pred_fallthru
        _
    $region6: #{forward.13} parent=1 // loop_footer
      %s15 = sadd.s32 1, %s11
    $region7: #{forward.13} parent=1 // loop_footer_branch
      %10 = sbr.rel target = $region3
    $region8: #{forward.13} parent=1 // loop_exit
      _

</llo_original>
